<compile_context>
chip_gen: v5e
topology: v5e:2x2
jax: 0.10.0
libtpu: 0.0.40
codegen_flags: <defaults>
</compile_context>

<pallas_src>
import jax
import jax.numpy as jnp
from jax import lax
from jax.experimental import pallas as pl
from jax.experimental.pallas import tpu as pltpu

EMB = 300     # emb_size
HID = 128     # hid1 == hid2

_VMEM = lambda: pl.BlockSpec(memory_space=pltpu.MemorySpace.VMEM)


# ----------------------------------------------------------------------------
# Fused kernel: biGRU -> Conv1d(k=2)+ReLU -> SelfAttention -> max-pool -> head
#   x_ref   : (T, N, EMB)   embedded src (T = time for GRU, batch for conv/attn)
#   wih_ref : (EMB, 6H)     packed input weights, cols [r_f|z_f|n_f|r_b|z_b|n_b]
#   whh_*   : (H, 3H)       per-direction hidden weights, gate cols [r|z|n]
#   wc_ref  : (2H, 2H)      conv taps packed on output lanes [tap0 | tap1]
#   out_ref : (T, 1)
# ----------------------------------------------------------------------------
def gru_cnn_att_kernel(x_ref, wih_ref, bih_ref,
                       whh_f_ref, whh_b_ref, bhh_f_ref, bhh_b_ref,
                       wc_ref, bc_ref, wp_ref,
                       wl_g_ref, wl_c_ref, wl_gc_ref, bl_ref,
                       wout_ref, bout_ref,
                       out_ref,
                       hf_scr, hb_scr, xp_scr, g_scr):
    T, N, E = x_ref.shape
    H = whh_f_ref.shape[0]
    G = 3 * H
    L = N - 1

    # ---- biGRU: one big packed input-projection matmul for both directions ----
    x2 = x_ref[...].reshape(T * N, E)
    xp_scr[...] = (jnp.dot(x2, wih_ref[...], preferred_element_type=jnp.float32)
                   + bih_ref[...]).reshape(T, N, 2 * G)

    hf_scr[...] = jnp.zeros_like(hf_scr)
    hb_scr[...] = jnp.zeros_like(hb_scr)

    def step(t, carry):
        h_f = hf_scr[...]                                              # (N, H)
        h_b = hb_scr[...]
        gh_f = (jnp.dot(h_f, whh_f_ref[...], preferred_element_type=jnp.float32)
                + bhh_f_ref[...])                                      # (N, 3H)
        gh_b = (jnp.dot(h_b, whh_b_ref[...], preferred_element_type=jnp.float32)
                + bhh_b_ref[...])
        # fwd consumes x[t], bwd consumes x[T-1-t] (in-kernel time reversal);
        # lane slices are 128-aligned.
        gi_f = xp_scr[t, :, 0:G]
        gi_b = xp_scr[T - 1 - t, :, G:2 * G]

        r_f = jax.nn.sigmoid(gi_f[:, 0:H] + gh_f[:, 0:H])
        z_f = jax.nn.sigmoid(gi_f[:, H:2 * H] + gh_f[:, H:2 * H])
        n_f = jnp.tanh(gi_f[:, 2 * H:] + r_f * gh_f[:, 2 * H:])
        h_f_new = (1.0 - z_f) * n_f + z_f * h_f

        r_b = jax.nn.sigmoid(gi_b[:, 0:H] + gh_b[:, 0:H])
        z_b = jax.nn.sigmoid(gi_b[:, H:2 * H] + gh_b[:, H:2 * H])
        n_b = jnp.tanh(gi_b[:, 2 * H:] + r_b * gh_b[:, 2 * H:])
        h_b_new = (1.0 - z_b) * n_b + z_b * h_b

        hf_scr[...] = h_f_new
        hb_scr[...] = h_b_new
        g_scr[t, :, 0:H] = h_f_new                # forward direction at time t
        g_scr[T - 1 - t, :, H:2 * H] = h_b_new    # backward direction at T-1-t
        return carry

    lax.fori_loop(0, T, step, 0, unroll=(T <= 16))

    # ---- Conv1d(2H -> H, k=2) over the N axis as one packed matmul + shift-add ----
    g2 = g_scr[...].reshape(T * N, 2 * H)
    AB = jnp.dot(g2, wc_ref[...], preferred_element_type=jnp.float32).reshape(T, N, 2 * H)
    g = jnp.maximum(AB[:, :L, 0:H] + AB[:, 1:, H:2 * H] + bc_ref[...], 0.0)   # (T, L, H)

    # ---- Self-matching attention (softmax over dim 1, exactly as the reference;
    #      the reference .squeeze() calls are no-ops for T > 1, L > 1) ----
    gf = g.reshape(T * L, H)
    wh = jnp.dot(gf, wp_ref[...], preferred_element_type=jnp.float32).reshape(T, L, H)
    s = jnp.einsum('tlh,tmh->tlm', wh, g, preferred_element_type=jnp.float32)
    p_un = jnp.exp(s - jnp.max(s, axis=1, keepdims=True))
    a = p_un / jnp.sum(p_un, axis=1, keepdims=True)
    c = jnp.einsum('tlm,tmh->tlh', a, g, preferred_element_type=jnp.float32)

    # linear_out([g | c | g*c]) as three split matmuls (no lane concat), + ReLU.
    cf = c.reshape(T * L, H)
    gcf = (g * c).reshape(T * L, H)
    att = jnp.maximum(
        jnp.dot(gf, wl_g_ref[...], preferred_element_type=jnp.float32)
        + jnp.dot(cf, wl_c_ref[...], preferred_element_type=jnp.float32)
        + jnp.dot(gcf, wl_gc_ref[...], preferred_element_type=jnp.float32)
        + bl_ref[...], 0.0)                                                   # (T*L, H)

    # Max over the length axis, then the H->1 head as a lane reduction.
    pooled = jnp.max(att.reshape(T, L, H), axis=1)                            # (T, H)
    out_ref[...] = (jnp.sum(pooled * wout_ref[...], axis=-1, keepdims=True)
                    + bout_ref[...])                                          # (T, 1)


def run_fused(embeds, q):
    T, N, _ = embeds.shape
    H = HID
    # TODO(synk): for large T*N add a grid + pipelined HBM->VMEM DMA so the
    # embeddings / scratches are not fully VMEM-resident (v7x: 64 MiB VMEM).
    return pl.pallas_call(
        gru_cnn_att_kernel,
        out_shape=jax.ShapeDtypeStruct((T, 1), jnp.float32),
        in_specs=[_VMEM()] * 16,
        out_specs=_VMEM(),
        scratch_shapes=[
            pltpu.VMEM((N, H), jnp.float32),           # forward hidden state
            pltpu.VMEM((N, H), jnp.float32),           # backward hidden state
            pltpu.VMEM((T, N, 6 * H), jnp.float32),    # packed input projections
            pltpu.VMEM((T, N, 2 * H), jnp.float32),    # biGRU output (stays in VMEM)
        ],
    )(embeds, q["gru_wih"], q["gru_bih"],
      q["gru_whh_f"], q["gru_whh_b"], q["gru_bhh_f"], q["gru_bhh_b"],
      q["wc"], q["bc"], q["wp"],
      q["wl_g"], q["wl_c"], q["wl_gc"], q["bl"], q["wout"], q["bout"])


# ----------------------------------------------------------------------------
# Full forward pass
# ----------------------------------------------------------------------------
def gru_cnn_att_forward(src, q):
    # Embedding gather (glue, XLA-level); padding_idx row 0 is zero in the table.
    # TODO(synk): for very large vocabularies a manual-DMA gather kernel would
    # avoid materializing the full (T, N, EMB) activation separately.
    embeds = jnp.take(q["emb"], src, axis=0)          # (T, N, EMB)
    # nn.Dropout(p=0.3) is inference-mode identity here.
    return run_fused(embeds, q)                       # (T, 1)


# ----------------------------------------------------------------------------
# Parameters: PyTorch-layout init + one-time kernel-layout packing.
# ----------------------------------------------------------------------------
def init_params(key, n_vocab):
    keys = iter(jax.random.split(key, 24))

    def uni(shape, scale):
        return jax.random.uniform(next(keys), shape, jnp.float32, -scale, scale)

    s_rnn = 1.0 / (HID ** 0.5)
    s_conv = 1.0 / ((2 * HID * 2) ** 0.5)
    s_lin = 1.0 / (HID ** 0.5)
    s_lin3 = 1.0 / ((3 * HID) ** 0.5)

    p = {"emb": uni((n_vocab, EMB), 0.5).at[0].set(0.0)}   # padding_idx=0 row zeroed
    for d in ("f", "b"):
        p[f"w_ih_{d}"] = uni((3 * HID, EMB), s_rnn)
        p[f"w_hh_{d}"] = uni((3 * HID, HID), s_rnn)
        p[f"b_ih_{d}"] = uni((3 * HID,), s_rnn)
        p[f"b_hh_{d}"] = uni((3 * HID,), s_rnn)
    p["conv_w"] = uni((HID, 2 * HID, 2), s_conv)           # (out, in, k)
    p["conv_b"] = uni((HID,), s_conv)
    p["wp_w"] = uni((HID, HID), s_lin)                     # SelfAttention.WP
    p["lin_out_w"] = uni((HID, 3 * HID), s_lin3)           # SelfAttention.linear_out
    p["lin_out_b"] = uni((HID,), s_lin3)
    p["lin_w"] = uni((1, HID), s_lin)                      # final Linear(H, 1)
    p["lin_b"] = uni((1,), s_lin)
    return p


def pack_params(p):
    """One-time repack of PyTorch-layout weights into kernel (in, out) layouts."""
    H = HID
    q = {"emb": p["emb"]}
    # Both directions' input-projection weights packed along output lanes:
    # columns [r_f|z_f|n_f | r_b|z_b|n_b] -> one (EMB, 6H) matmul in-kernel.
    q["gru_wih"] = jnp.concatenate([p["w_ih_f"].T, p["w_ih_b"].T], axis=1)     # (EMB, 6H)
    q["gru_bih"] = jnp.concatenate([p["b_ih_f"], p["b_ih_b"]]).reshape(1, 6 * H)
    for d in ("f", "b"):
        q[f"gru_whh_{d}"] = p[f"w_hh_{d}"].T               # (H, 3H), gate cols r|z|n
        q[f"gru_bhh_{d}"] = p[f"b_hh_{d}"].reshape(1, 3 * H)
    # Conv taps packed along output lanes: [tap0 | tap1] -> one (2H, 2H) matmul.
    q["wc"] = jnp.concatenate([p["conv_w"][:, :, 0].T, p["conv_w"][:, :, 1].T], axis=1)
    q["bc"] = p["conv_b"].reshape(1, 1, H)
    q["wp"] = p["wp_w"].T                                  # (H, H)
    q["wl_g"] = p["lin_out_w"][:, 0:H].T                   # acts on g
    q["wl_c"] = p["lin_out_w"][:, H:2 * H].T               # acts on c
    q["wl_gc"] = p["lin_out_w"][:, 2 * H:].T               # acts on g*c
    q["bl"] = p["lin_out_b"].reshape(1, H)
    q["wout"] = p["lin_w"]                                 # (1, H) row for lane reduce
    q["bout"] = p["lin_b"].reshape(1, 1)
    return q


if __name__ == "__main__":
    key = jax.random.PRNGKey(0)
    k_p, k_src = jax.random.split(key)

    n_vocab = 50
    T, N = 4, 8   # src (4, 8): GRU sees time=4, batch=8; conv/attention run over length 8
    src = jax.random.randint(k_src, (T, N), 0, n_vocab, dtype=jnp.int32)

    params = init_params(k_p, n_vocab)
    packed = pack_params(params)       # one-time weight packing (not re-done per forward)

    out = jax.jit(gru_cnn_att_forward)(src, packed)
    out = jax.block_until_ready(out)
    assert out.shape == (T, 1) and out.dtype == jnp.float32
    print("KERNEL_OK")
</pallas_src>

<mosaic_0001>
module attributes {stable_mosaic.version = 11 : i64} {
  func.func @gru_cnn_att_kernel(%arg0: memref<4x8x300xf32, #tpu.memory_space<vmem>>, %arg1: memref<300x768xf32, #tpu.memory_space<vmem>>, %arg2: memref<1x768xf32, #tpu.memory_space<vmem>>, %arg3: memref<128x384xf32, #tpu.memory_space<vmem>>, %arg4: memref<128x384xf32, #tpu.memory_space<vmem>>, %arg5: memref<1x384xf32, #tpu.memory_space<vmem>>, %arg6: memref<1x384xf32, #tpu.memory_space<vmem>>, %arg7: memref<256x256xf32, #tpu.memory_space<vmem>>, %arg8: memref<1x1x128xf32, #tpu.memory_space<vmem>>, %arg9: memref<128x128xf32, #tpu.memory_space<vmem>>, %arg10: memref<128x128xf32, #tpu.memory_space<vmem>>, %arg11: memref<128x128xf32, #tpu.memory_space<vmem>>, %arg12: memref<128x128xf32, #tpu.memory_space<vmem>>, %arg13: memref<1x128xf32, #tpu.memory_space<vmem>>, %arg14: memref<1x128xf32, #tpu.memory_space<vmem>>, %arg15: memref<1x1xf32, #tpu.memory_space<vmem>>, %arg16: memref<4x1xf32, #tpu.memory_space<vmem>>, %arg17: memref<8x128xf32, #tpu.memory_space<vmem>>, %arg18: memref<8x128xf32, #tpu.memory_space<vmem>>, %arg19: memref<4x8x768xf32, #tpu.memory_space<vmem>>, %arg20: memref<4x8x256xf32, #tpu.memory_space<vmem>>) attributes {dimension_semantics = [], scalar_prefetch = 0 : i64, scratch_operands = 4 : i64, tpu.core_type = #tpu.core_type<tc>} {
    %c0 = arith.constant 0 : index
    %c0_0 = arith.constant 0 : index
    %c0_1 = arith.constant 0 : index
    %0 = vector.load %arg0[%c0, %c0_0, %c0_1] : memref<4x8x300xf32, #tpu.memory_space<vmem>>, vector<4x8x300xf32>
    %1 = vector.shape_cast %0 : vector<4x8x300xf32> to vector<32x300xf32>
    %c0_2 = arith.constant 0 : index
    %c0_3 = arith.constant 0 : index
    %2 = vector.load %arg1[%c0_2, %c0_3] : memref<300x768xf32, #tpu.memory_space<vmem>>, vector<300x768xf32>
    %cst = arith.constant dense<0.000000e+00> : vector<32x768xf32>
    %3 = tpu.matmul %1, %2, %cst {dimension_numbers = #tpu.dot_dimension_numbers<[1], [0], [0], [1], [0, 0, 1, 1], [], []>} : vector<32x300xf32>, vector<300x768xf32>, vector<32x768xf32> -> vector<32x768xf32>
    %c0_4 = arith.constant 0 : index
    %c0_5 = arith.constant 0 : index
    %4 = vector.load %arg2[%c0_4, %c0_5] : memref<1x768xf32, #tpu.memory_space<vmem>>, vector<1x768xf32>
    %5 = vector.broadcast %4 : vector<1x768xf32> to vector<32x768xf32>
    %6 = arith.addf %3, %5 : vector<32x768xf32>
    %7 = vector.shape_cast %6 : vector<32x768xf32> to vector<4x8x768xf32>
    %c0_6 = arith.constant 0 : index
    %c0_7 = arith.constant 0 : index
    %c0_8 = arith.constant 0 : index
    %8 = vector.load %arg19[%c0_6, %c0_7, %c0_8] : memref<4x8x768xf32, #tpu.memory_space<vmem>>, vector<4x8x768xf32>
    tpu.vector_store %arg19[%c0_6, %c0_7, %c0_8], %7 {strides = array<i32>} : memref<4x8x768xf32, #tpu.memory_space<vmem>>, vector<4x8x768xf32>,
    %cst_9 = arith.constant 0.000000e+00 : f32
    %9 = vector.broadcast %cst_9 : f32 to vector<8x128xf32>
    %c0_10 = arith.constant 0 : index
    %c0_11 = arith.constant 0 : index
    %10 = vector.load %arg17[%c0_10, %c0_11] : memref<8x128xf32, #tpu.memory_space<vmem>>, vector<8x128xf32>
    tpu.vector_store %arg17[%c0_10, %c0_11], %9 {strides = array<i32>} : memref<8x128xf32, #tpu.memory_space<vmem>>, vector<8x128xf32>,
    %cst_12 = arith.constant 0.000000e+00 : f32
    %11 = vector.broadcast %cst_12 : f32 to vector<8x128xf32>
    %c0_13 = arith.constant 0 : index
    %c0_14 = arith.constant 0 : index
    %12 = vector.load %arg18[%c0_13, %c0_14] : memref<8x128xf32, #tpu.memory_space<vmem>>, vector<8x128xf32>
    tpu.vector_store %arg18[%c0_13, %c0_14], %11 {strides = array<i32>} : memref<8x128xf32, #tpu.memory_space<vmem>>, vector<8x128xf32>,
    %c0_i32 = arith.constant 0 : i32
    %c0_15 = arith.constant 0 : index
    %c0_16 = arith.constant 0 : index
    %13 = vector.load %arg17[%c0_15, %c0_16] : memref<8x128xf32, #tpu.memory_space<vmem>>, vector<8x128xf32>
    %c0_17 = arith.constant 0 : index
    %c0_18 = arith.constant 0 : index
    %14 = vector.load %arg18[%c0_17, %c0_18] : memref<8x128xf32, #tpu.memory_space<vmem>>, vector<8x128xf32>
    %c0_19 = arith.constant 0 : index
    %c0_20 = arith.constant 0 : index
    %15 = vector.load %arg3[%c0_19, %c0_20] : memref<128x384xf32, #tpu.memory_space<vmem>>, vector<128x384xf32>
    %cst_21 = arith.constant dense<0.000000e+00> : vector<8x384xf32>
    %16 = tpu.matmul %13, %15, %cst_21 {dimension_numbers = #tpu.dot_dimension_numbers<[1], [0], [0], [1], [0, 0, 1, 1], [], []>} : vector<8x128xf32>, vector<128x384xf32>, vector<8x384xf32> -> vector<8x384xf32>
    %c0_22 = arith.constant 0 : index
    %c0_23 = arith.constant 0 : index
    %17 = vector.load %arg5[%c0_22, %c0_23] : memref<1x384xf32, #tpu.memory_space<vmem>>, vector<1x384xf32>
    %18 = vector.broadcast %17 : vector<1x384xf32> to vector<8x384xf32>
    %19 = arith.addf %16, %18 : vector<8x384xf32>
    %c0_24 = arith.constant 0 : index
    %c0_25 = arith.constant 0 : index
    %20 = vector.load %arg4[%c0_24, %c0_25] : memref<128x384xf32, #tpu.memory_space<vmem>>, vector<128x384xf32>
    %cst_26 = arith.constant dense<0.000000e+00> : vector<8x384xf32>
    %21 = tpu.matmul %14, %20, %cst_26 {dimension_numbers = #tpu.dot_dimension_numbers<[1], [0], [0], [1], [0, 0, 1, 1], [], []>} : vector<8x128xf32>, vector<128x384xf32>, vector<8x384xf32> -> vector<8x384xf32>
    %c0_27 = arith.constant 0 : index
    %c0_28 = arith.constant 0 : index
    %22 = vector.load %arg6[%c0_27, %c0_28] : memref<1x384xf32, #tpu.memory_space<vmem>>, vector<1x384xf32>
    %23 = vector.broadcast %22 : vector<1x384xf32> to vector<8x384xf32>
    %24 = arith.addf %21, %23 : vector<8x384xf32>
    %25 = arith.index_cast %c0_i32 : i32 to index
    %c0_29 = arith.constant 0 : index
    %c0_30 = arith.constant 0 : index
    %26 = vector.load %arg19[%25, %c0_29, %c0_30] : memref<4x8x768xf32, #tpu.memory_space<vmem>>, vector<1x8x384xf32>
    %27 = vector.shape_cast %26 : vector<1x8x384xf32> to vector<8x384xf32>
    %c3_i32 = arith.constant 3 : i32
    %28 = arith.subi %c3_i32, %c0_i32 : i32
    %29 = arith.index_cast %28 : i32 to index
    %c0_31 = arith.constant 0 : index
    %c384 = arith.constant 384 : index
    %30 = vector.load %arg19[%29, %c0_31, %c384] : memref<4x8x768xf32, #tpu.memory_space<vmem>>, vector<1x8x384xf32>
    %31 = vector.shape_cast %30 : vector<1x8x384xf32> to vector<8x384xf32>
    %32 = vector.extract_strided_slice %27 {offsets = [0, 0], sizes = [8, 128], strides = [1, 1]} : vector<8x384xf32> to vector<8x128xf32>
    %33 = vector.extract_strided_slice %19 {offsets = [0, 0], sizes = [8, 128], strides = [1, 1]} : vector<8x384xf32> to vector<8x128xf32>
    %34 = arith.addf %32, %33 : vector<8x128xf32>
    %35 = arith.negf %34 : vector<8x128xf32>
    %36 = math.exp %35 : vector<8x128xf32>
    %cst_32 = arith.constant 1.000000e+00 : f32
    %37 = vector.broadcast %cst_32 : f32 to vector<8x128xf32>
    %38 = arith.addf %37, %36 : vector<8x128xf32>
    %39 = arith.divf %37, %38 : vector<8x128xf32>
    %40 = vector.extract_strided_slice %27 {offsets = [0, 128], sizes = [8, 128], strides = [1, 1]} : vector<8x384xf32> to vector<8x128xf32>
    %41 = vector.extract_strided_slice %19 {offsets = [0, 128], sizes = [8, 128], strides = [1, 1]} : vector<8x384xf32> to vector<8x128xf32>
    %42 = arith.addf %40, %41 : vector<8x128xf32>
    %43 = arith.negf %42 : vector<8x128xf32>
    %44 = math.exp %43 : vector<8x128xf32>
    %cst_33 = arith.constant 1.000000e+00 : f32
    %45 = vector.broadcast %cst_33 : f32 to vector<8x128xf32>
    %46 = arith.addf %45, %44 : vector<8x128xf32>
    %47 = arith.divf %45, %46 : vector<8x128xf32>
    %48 = vector.extract_strided_slice %27 {offsets = [0, 256], sizes = [8, 128], strides = [1, 1]} : vector<8x384xf32> to vector<8x128xf32>
    %49 = vector.extract_strided_slice %19 {offsets = [0, 256], sizes = [8, 128], strides = [1, 1]} : vector<8x384xf32> to vector<8x128xf32>
    %50 = arith.mulf %39, %49 : vector<8x128xf32>
    %51 = arith.addf %48, %50 : vector<8x128xf32>
    %52 = math.tanh %51 : vector<8x128xf32>
    %cst_34 = arith.constant 1.000000e+00 : f32
    %53 = vector.broadcast %cst_34 : f32 to vector<8x128xf32>
    %54 = arith.subf %53, %47 : vector<8x128xf32>
    %55 = arith.mulf %54, %52 : vector<8x128xf32>
    %56 = arith.mulf %47, %13 : vector<8x128xf32>
    %57 = arith.addf %55, %56 : vector<8x128xf32>
    %58 = vector.extract_strided_slice %31 {offsets = [0, 0], sizes = [8, 128], strides = [1, 1]} : vector<8x384xf32> to vector<8x128xf32>
    %59 = vector.extract_strided_slice %24 {offsets = [0, 0], sizes = [8, 128], strides = [1, 1]} : vector<8x384xf32> to vector<8x128xf32>
    %60 = arith.addf %58, %59 : vector<8x128xf32>
    %61 = arith.negf %60 : vector<8x128xf32>
    %62 = math.exp %61 : vector<8x128xf32>
    %cst_35 = arith.constant 1.000000e+00 : f32
    %63 = vector.broadcast %cst_35 : f32 to vector<8x128xf32>
    %64 = arith.addf %63, %62 : vector<8x128xf32>
    %65 = arith.divf %63, %64 : vector<8x128xf32>
    %66 = vector.extract_strided_slice %31 {offsets = [0, 128], sizes = [8, 128], strides = [1, 1]} : vector<8x384xf32> to vector<8x128xf32>
    %67 = vector.extract_strided_slice %24 {offsets = [0, 128], sizes = [8, 128], strides = [1, 1]} : vector<8x384xf32> to vector<8x128xf32>
    %68 = arith.addf %66, %67 : vector<8x128xf32>
    %69 = arith.negf %68 : vector<8x128xf32>
    %70 = math.exp %69 : vector<8x128xf32>
    %cst_36 = arith.constant 1.000000e+00 : f32
    %71 = vector.broadcast %cst_36 : f32 to vector<8x128xf32>
    %72 = arith.addf %71, %70 : vector<8x128xf32>
    %73 = arith.divf %71, %72 : vector<8x128xf32>
    %74 = vector.extract_strided_slice %31 {offsets = [0, 256], sizes = [8, 128], strides = [1, 1]} : vector<8x384xf32> to vector<8x128xf32>
    %75 = vector.extract_strided_slice %24 {offsets = [0, 256], sizes = [8, 128], strides = [1, 1]} : vector<8x384xf32> to vector<8x128xf32>
    %76 = arith.mulf %65, %75 : vector<8x128xf32>
    %77 = arith.addf %74, %76 : vector<8x128xf32>
    %78 = math.tanh %77 : vector<8x128xf32>
    %cst_37 = arith.constant 1.000000e+00 : f32
    %79 = vector.broadcast %cst_37 : f32 to vector<8x128xf32>
    %80 = arith.subf %79, %73 : vector<8x128xf32>
    %81 = arith.mulf %80, %78 : vector<8x128xf32>
    %82 = arith.mulf %73, %14 : vector<8x128xf32>
    %83 = arith.addf %81, %82 : vector<8x128xf32>
    %c0_38 = arith.constant 0 : index
    %c0_39 = arith.constant 0 : index
    %84 = vector.load %arg17[%c0_38, %c0_39] : memref<8x128xf32, #tpu.memory_space<vmem>>, vector<8x128xf32>
    tpu.vector_store %arg17[%c0_38, %c0_39], %57 {strides = array<i32>} : memref<8x128xf32, #tpu.memory_space<vmem>>, vector<8x128xf32>,
    %c0_40 = arith.constant 0 : index
    %c0_41 = arith.constant 0 : index
    %85 = vector.load %arg18[%c0_40, %c0_41] : memref<8x128xf32, #tpu.memory_space<vmem>>, vector<8x128xf32>
    tpu.vector_store %arg18[%c0_40, %c0_41], %83 {strides = array<i32>} : memref<8x128xf32, #tpu.memory_space<vmem>>, vector<8x128xf32>,
    %86 = arith.index_cast %c0_i32 : i32 to index
    %c0_42 = arith.constant 0 : index
    %c0_43 = arith.constant 0 : index
    %87 = vector.load %arg20[%86, %c0_42, %c0_43] : memref<4x8x256xf32, #tpu.memory_space<vmem>>, vector<1x8x128xf32>
    %88 = vector.shape_cast %87 : vector<1x8x128xf32> to vector<8x128xf32>
    %89 = vector.shape_cast %57 : vector<8x128xf32> to vector<1x8x128xf32>
    tpu.vector_store %arg20[%86, %c0_42, %c0_43], %89 {strides = array<i32>} : memref<4x8x256xf32, #tpu.memory_space<vmem>>, vector<1x8x128xf32>,
    %c3_i32_44 = arith.constant 3 : i32
    %90 = arith.subi %c3_i32_44, %c0_i32 : i32
    %91 = arith.index_cast %90 : i32 to index
    %c0_45 = arith.constant 0 : index
    %c128 = arith.constant 128 : index
    %92 = vector.load %arg20[%91, %c0_45, %c128] : memref<4x8x256xf32, #tpu.memory_space<vmem>>, vector<1x8x128xf32>
    %93 = vector.shape_cast %92 : vector<1x8x128xf32> to vector<8x128xf32>
    %94 = vector.shape_cast %83 : vector<8x128xf32> to vector<1x8x128xf32>
    tpu.vector_store %arg20[%91, %c0_45, %c128], %94 {strides = array<i32>} : memref<4x8x256xf32, #tpu.memory_space<vmem>>, vector<1x8x128xf32>,
    %c1_i32 = arith.constant 1 : i32
    %c0_46 = arith.constant 0 : index
    %c0_47 = arith.constant 0 : index
    %95 = vector.load %arg17[%c0_46, %c0_47] : memref<8x128xf32, #tpu.memory_space<vmem>>, vector<8x128xf32>
    %c0_48 = arith.constant 0 : index
    %c0_49 = arith.constant 0 : index
    %96 = vector.load %arg18[%c0_48, %c0_49] : memref<8x128xf32, #tpu.memory_space<vmem>>, vector<8x128xf32>
    %c0_50 = arith.constant 0 : index
    %c0_51 = arith.constant 0 : index
    %97 = vector.load %arg3[%c0_50, %c0_51] : memref<128x384xf32, #tpu.memory_space<vmem>>, vector<128x384xf32>
    %cst_52 = arith.constant dense<0.000000e+00> : vector<8x384xf32>
    %98 = tpu.matmul %95, %97, %cst_52 {dimension_numbers = #tpu.dot_dimension_numbers<[1], [0], [0], [1], [0, 0, 1, 1], [], []>} : vector<8x128xf32>, vector<128x384xf32>, vector<8x384xf32> -> vector<8x384xf32>
    %c0_53 = arith.constant 0 : index
    %c0_54 = arith.constant 0 : index
    %99 = vector.load %arg5[%c0_53, %c0_54] : memref<1x384xf32, #tpu.memory_space<vmem>>, vector<1x384xf32>
    %100 = vector.broadcast %99 : vector<1x384xf32> to vector<8x384xf32>
    %101 = arith.addf %98, %100 : vector<8x384xf32>
    %c0_55 = arith.constant 0 : index
    %c0_56 = arith.constant 0 : index
    %102 = vector.load %arg4[%c0_55, %c0_56] : memref<128x384xf32, #tpu.memory_space<vmem>>, vector<128x384xf32>
    %cst_57 = arith.constant dense<0.000000e+00> : vector<8x384xf32>
    %103 = tpu.matmul %96, %102, %cst_57 {dimension_numbers = #tpu.dot_dimension_numbers<[1], [0], [0], [1], [0, 0, 1, 1], [], []>} : vector<8x128xf32>, vector<128x384xf32>, vector<8x384xf32> -> vector<8x384xf32>
    %c0_58 = arith.constant 0 : index
    %c0_59 = arith.constant 0 : index
    %104 = vector.load %arg6[%c0_58, %c0_59] : memref<1x384xf32, #tpu.memory_space<vmem>>, vector<1x384xf32>
    %105 = vector.broadcast %104 : vector<1x384xf32> to vector<8x384xf32>
    %106 = arith.addf %103, %105 : vector<8x384xf32>
    %107 = arith.index_cast %c1_i32 : i32 to index
    %c0_60 = arith.constant 0 : index
    %c0_61 = arith.constant 0 : index
    %108 = vector.load %arg19[%107, %c0_60, %c0_61] : memref<4x8x768xf32, #tpu.memory_space<vmem>>, vector<1x8x384xf32>
    %109 = vector.shape_cast %108 : vector<1x8x384xf32> to vector<8x384xf32>
    %c3_i32_62 = arith.constant 3 : i32
    %110 = arith.subi %c3_i32_62, %c1_i32 : i32
    %111 = arith.index_cast %110 : i32 to index
    %c0_63 = arith.constant 0 : index
    %c384_64 = arith.constant 384 : index
    %112 = vector.load %arg19[%111, %c0_63, %c384_64] : memref<4x8x768xf32, #tpu.memory_space<vmem>>, vector<1x8x384xf32>
    %113 = vector.shape_cast %112 : vector<1x8x384xf32> to vector<8x384xf32>
    %114 = vector.extract_strided_slice %109 {offsets = [0, 0], sizes = [8, 128], strides = [1, 1]} : vector<8x384xf32> to vector<8x128xf32>
    %115 = vector.extract_strided_slice %101 {offsets = [0, 0], sizes = [8, 128], strides = [1, 1]} : vector<8x384xf32> to vector<8x128xf32>
    %116 = arith.addf %114, %115 : vector<8x128xf32>
    %117 = arith.negf %116 : vector<8x128xf32>
    %118 = math.exp %117 : vector<8x128xf32>
    %cst_65 = arith.constant 1.000000e+00 : f32
    %119 = vector.broadcast %cst_65 : f32 to vector<8x128xf32>
    %120 = arith.addf %119, %118 : vector<8x128xf32>
    %121 = arith.divf %119, %120 : vector<8x128xf32>
    %122 = vector.extract_strided_slice %109 {offsets = [0, 128], sizes = [8, 128], strides = [1, 1]} : vector<8x384xf32> to vector<8x128xf32>
    %123 = vector.extract_strided_slice %101 {offsets = [0, 128], sizes = [8, 128], strides = [1, 1]} : vector<8x384xf32> to vector<8x128xf32>
    %124 = arith.addf %122, %123 : vector<8x128xf32>
    %125 = arith.negf %124 : vector<8x128xf32>
    %126 = math.exp %125 : vector<8x128xf32>
    %cst_66 = arith.constant 1.000000e+00 : f32
    %127 = vector.broadcast %cst_66 : f32 to vector<8x128xf32>
    %128 = arith.addf %127, %126 : vector<8x128xf32>
    %129 = arith.divf %127, %128 : vector<8x128xf32>
    %130 = vector.extract_strided_slice %109 {offsets = [0, 256], sizes = [8, 128], strides = [1, 1]} : vector<8x384xf32> to vector<8x128xf32>
    %131 = vector.extract_strided_slice %101 {offsets = [0, 256], sizes = [8, 128], strides = [1, 1]} : vector<8x384xf32> to vector<8x128xf32>
    %132 = arith.mulf %121, %131 : vector<8x128xf32>
    %133 = arith.addf %130, %132 : vector<8x128xf32>
    %134 = math.tanh %133 : vector<8x128xf32>
    %cst_67 = arith.constant 1.000000e+00 : f32
    %135 = vector.broadcast %cst_67 : f32 to vector<8x128xf32>
    %136 = arith.subf %135, %129 : vector<8x128xf32>
    %137 = arith.mulf %136, %134 : vector<8x128xf32>
    %138 = arith.mulf %129, %95 : vector<8x128xf32>
    %139 = arith.addf %137, %138 : vector<8x128xf32>
    %140 = vector.extract_strided_slice %113 {offsets = [0, 0], sizes = [8, 128], strides = [1, 1]} : vector<8x384xf32> to vector<8x128xf32>
    %141 = vector.extract_strided_slice %106 {offsets = [0, 0], sizes = [8, 128], strides = [1, 1]} : vector<8x384xf32> to vector<8x128xf32>
    %142 = arith.addf %140, %141 : vector<8x128xf32>
    %143 = arith.negf %142 : vector<8x128xf32>
    %144 = math.exp %143 : vector<8x128xf32>
    %cst_68 = arith.constant 1.000000e+00 : f32
    %145 = vector.broadcast %cst_68 : f32 to vector<8x128xf32>
    %146 = arith.addf %145, %144 : vector<8x128xf32>
    %147 = arith.divf %145, %146 : vector<8x128xf32>
    %148 = vector.extract_strided_slice %113 {offsets = [0, 128], sizes = [8, 128], strides = [1, 1]} : vector<8x384xf32> to vector<8x128xf32>
    %149 = vector.extract_strided_slice %106 {offsets = [0, 128], sizes = [8, 128], strides = [1, 1]} : vector<8x384xf32> to vector<8x128xf32>
    %150 = arith.addf %148, %149 : vector<8x128xf32>
    %151 = arith.negf %150 : vector<8x128xf32>
    %152 = math.exp %151 : vector<8x128xf32>
    %cst_69 = arith.constant 1.000000e+00 : f32
    %153 = vector.broadcast %cst_69 : f32 to vector<8x128xf32>
    %154 = arith.addf %153, %152 : vector<8x128xf32>
    %155 = arith.divf %153, %154 : vector<8x128xf32>
    %156 = vector.extract_strided_slice %113 {offsets = [0, 256], sizes = [8, 128], strides = [1, 1]} : vector<8x384xf32> to vector<8x128xf32>
    %157 = vector.extract_strided_slice %106 {offsets = [0, 256], sizes = [8, 128], strides = [1, 1]} : vector<8x384xf32> to vector<8x128xf32>
    %158 = arith.mulf %147, %157 : vector<8x128xf32>
    %159 = arith.addf %156, %158 : vector<8x128xf32>
    %160 = math.tanh %159 : vector<8x128xf32>
    %cst_70 = arith.constant 1.000000e+00 : f32
    %161 = vector.broadcast %cst_70 : f32 to vector<8x128xf32>
    %162 = arith.subf %161, %155 : vector<8x128xf32>
    %163 = arith.mulf %162, %160 : vector<8x128xf32>
    %164 = arith.mulf %155, %96 : vector<8x128xf32>
    %165 = arith.addf %163, %164 : vector<8x128xf32>
    %c0_71 = arith.constant 0 : index
    %c0_72 = arith.constant 0 : index
    %166 = vector.load %arg17[%c0_71, %c0_72] : memref<8x128xf32, #tpu.memory_space<vmem>>, vector<8x128xf32>
    tpu.vector_store %arg17[%c0_71, %c0_72], %139 {strides = array<i32>} : memref<8x128xf32, #tpu.memory_space<vmem>>, vector<8x128xf32>,
    %c0_73 = arith.constant 0 : index
    %c0_74 = arith.constant 0 : index
    %167 = vector.load %arg18[%c0_73, %c0_74] : memref<8x128xf32, #tpu.memory_space<vmem>>, vector<8x128xf32>
    tpu.vector_store %arg18[%c0_73, %c0_74], %165 {strides = array<i32>} : memref<8x128xf32, #tpu.memory_space<vmem>>, vector<8x128xf32>,
    %168 = arith.index_cast %c1_i32 : i32 to index
    %c0_75 = arith.constant 0 : index
    %c0_76 = arith.constant 0 : index
    %169 = vector.load %arg20[%168, %c0_75, %c0_76] : memref<4x8x256xf32, #tpu.memory_space<vmem>>, vector<1x8x128xf32>
    %170 = vector.shape_cast %169 : vector<1x8x128xf32> to vector<8x128xf32>
    %171 = vector.shape_cast %139 : vector<8x128xf32> to vector<1x8x128xf32>
    tpu.vector_store %arg20[%168, %c0_75, %c0_76], %171 {strides = array<i32>} : memref<4x8x256xf32, #tpu.memory_space<vmem>>, vector<1x8x128xf32>,
    %c3_i32_77 = arith.constant 3 : i32
    %172 = arith.subi %c3_i32_77, %c1_i32 : i32
    %173 = arith.index_cast %172 : i32 to index
    %c0_78 = arith.constant 0 : index
    %c128_79 = arith.constant 128 : index
    %174 = vector.load %arg20[%173, %c0_78, %c128_79] : memref<4x8x256xf32, #tpu.memory_space<vmem>>, vector<1x8x128xf32>
    %175 = vector.shape_cast %174 : vector<1x8x128xf32> to vector<8x128xf32>
    %176 = vector.shape_cast %165 : vector<8x128xf32> to vector<1x8x128xf32>
    tpu.vector_store %arg20[%173, %c0_78, %c128_79], %176 {strides = array<i32>} : memref<4x8x256xf32, #tpu.memory_space<vmem>>, vector<1x8x128xf32>,
    %c2_i32 = arith.constant 2 : i32
    %c0_80 = arith.constant 0 : index
    %c0_81 = arith.constant 0 : index
    %177 = vector.load %arg17[%c0_80, %c0_81] : memref<8x128xf32, #tpu.memory_space<vmem>>, vector<8x128xf32>
    %c0_82 = arith.constant 0 : index
    %c0_83 = arith.constant 0 : index
    %178 = vector.load %arg18[%c0_82, %c0_83] : memref<8x128xf32, #tpu.memory_space<vmem>>, vector<8x128xf32>
    %c0_84 = arith.constant 0 : index
    %c0_85 = arith.constant 0 : index
    %179 = vector.load %arg3[%c0_84, %c0_85] : memref<128x384xf32, #tpu.memory_space<vmem>>, vector<128x384xf32>
    %cst_86 = arith.constant dense<0.000000e+00> : vector<8x384xf32>
    %180 = tpu.matmul %177, %179, %cst_86 {dimension_numbers = #tpu.dot_dimension_numbers<[1], [0], [0], [1], [0, 0, 1, 1], [], []>} : vector<8x128xf32>, vector<128x384xf32>, vector<8x384xf32> -> vector<8x384xf32>
    %c0_87 = arith.constant 0 : index
    %c0_88 = arith.constant 0 : index
    %181 = vector.load %arg5[%c0_87, %c0_88] : memref<1x384xf32, #tpu.memory_space<vmem>>, vector<1x384xf32>
    %182 = vector.broadcast %181 : vector<1x384xf32> to vector<8x384xf32>
    %183 = arith.addf %180, %182 : vector<8x384xf32>
    %c0_89 = arith.constant 0 : index
    %c0_90 = arith.constant 0 : index
    %184 = vector.load %arg4[%c0_89, %c0_90] : memref<128x384xf32, #tpu.memory_space<vmem>>, vector<128x384xf32>
    %cst_91 = arith.constant dense<0.000000e+00> : vector<8x384xf32>
    %185 = tpu.matmul %178, %184, %cst_91 {dimension_numbers = #tpu.dot_dimension_numbers<[1], [0], [0], [1], [0, 0, 1, 1], [], []>} : vector<8x128xf32>, vector<128x384xf32>, vector<8x384xf32> -> vector<8x384xf32>
    %c0_92 = arith.constant 0 : index
    %c0_93 = arith.constant 0 : index
    %186 = vector.load %arg6[%c0_92, %c0_93] : memref<1x384xf32, #tpu.memory_space<vmem>>, vector<1x384xf32>
    %187 = vector.broadcast %186 : vector<1x384xf32> to vector<8x384xf32>
    %188 = arith.addf %185, %187 : vector<8x384xf32>
    %189 = arith.index_cast %c2_i32 : i32 to index
    %c0_94 = arith.constant 0 : index
    %c0_95 = arith.constant 0 : index
    %190 = vector.load %arg19[%189, %c0_94, %c0_95] : memref<4x8x768xf32, #tpu.memory_space<vmem>>, vector<1x8x384xf32>
    %191 = vector.shape_cast %190 : vector<1x8x384xf32> to vector<8x384xf32>
    %c3_i32_96 = arith.constant 3 : i32
    %192 = arith.subi %c3_i32_96, %c2_i32 : i32
    %193 = arith.index_cast %192 : i32 to index
    %c0_97 = arith.constant 0 : index
    %c384_98 = arith.constant 384 : index
    %194 = vector.load %arg19[%193, %c0_97, %c384_98] : memref<4x8x768xf32, #tpu.memory_space<vmem>>, vector<1x8x384xf32>
    %195 = vector.shape_cast %194 : vector<1x8x384xf32> to vector<8x384xf32>
    %196 = vector.extract_strided_slice %191 {offsets = [0, 0], sizes = [8, 128], strides = [1, 1]} : vector<8x384xf32> to vector<8x128xf32>
    %197 = vector.extract_strided_slice %183 {offsets = [0, 0], sizes = [8, 128], strides = [1, 1]} : vector<8x384xf32> to vector<8x128xf32>
    %198 = arith.addf %196, %197 : vector<8x128xf32>
    %199 = arith.negf %198 : vector<8x128xf32>
    %200 = math.exp %199 : vector<8x128xf32>
    %cst_99 = arith.constant 1.000000e+00 : f32
    %201 = vector.broadcast %cst_99 : f32 to vector<8x128xf32>
    %202 = arith.addf %201, %200 : vector<8x128xf32>
    %203 = arith.divf %201, %202 : vector<8x128xf32>
    %204 = vector.extract_strided_slice %191 {offsets = [0, 128], sizes = [8, 128], strides = [1, 1]} : vector<8x384xf32> to vector<8x128xf32>
    %205 = vector.extract_strided_slice %183 {offsets = [0, 128], sizes = [8, 128], strides = [1, 1]} : vector<8x384xf32> to vector<8x128xf32>
    %206 = arith.addf %204, %205 : vector<8x128xf32>
    %207 = arith.negf %206 : vector<8x128xf32>
    %208 = math.exp %207 : vector<8x128xf32>
    %cst_100 = arith.constant 1.000000e+00 : f32
    %209 = vector.broadcast %cst_100 : f32 to vector<8x128xf32>
    %210 = arith.addf %209, %208 : vector<8x128xf32>
    %211 = arith.divf %209, %210 : vector<8x128xf32>
    %212 = vector.extract_strided_slice %191 {offsets = [0, 256], sizes = [8, 128], strides = [1, 1]} : vector<8x384xf32> to vector<8x128xf32>
    %213 = vector.extract_strided_slice %183 {offsets = [0, 256], sizes = [8, 128], strides = [1, 1]} : vector<8x384xf32> to vector<8x128xf32>
    %214 = arith.mulf %203, %213 : vector<8x128xf32>
    %215 = arith.addf %212, %214 : vector<8x128xf32>
    %216 = math.tanh %215 : vector<8x128xf32>
    %cst_101 = arith.constant 1.000000e+00 : f32
    %217 = vector.broadcast %cst_101 : f32 to vector<8x128xf32>
    %218 = arith.subf %217, %211 : vector<8x128xf32>
    %219 = arith.mulf %218, %216 : vector<8x128xf32>
    %220 = arith.mulf %211, %177 : vector<8x128xf32>
    %221 = arith.addf %219, %220 : vector<8x128xf32>
    %222 = vector.extract_strided_slice %195 {offsets = [0, 0], sizes = [8, 128], strides = [1, 1]} : vector<8x384xf32> to vector<8x128xf32>
    %223 = vector.extract_strided_slice %188 {offsets = [0, 0], sizes = [8, 128], strides = [1, 1]} : vector<8x384xf32> to vector<8x128xf32>
    %224 = arith.addf %222, %223 : vector<8x128xf32>
    %225 = arith.negf %224 : vector<8x128xf32>
    %226 = math.exp %225 : vector<8x128xf32>
    %cst_102 = arith.constant 1.000000e+00 : f32
    %227 = vector.broadcast %cst_102 : f32 to vector<8x128xf32>
    %228 = arith.addf %227, %226 : vector<8x128xf32>
    %229 = arith.divf %227, %228 : vector<8x128xf32>
    %230 = vector.extract_strided_slice %195 {offsets = [0, 128], sizes = [8, 128], strides = [1, 1]} : vector<8x384xf32> to vector<8x128xf32>
    %231 = vector.extract_strided_slice %188 {offsets = [0, 128], sizes = [8, 128], strides = [1, 1]} : vector<8x384xf32> to vector<8x128xf32>
    %232 = arith.addf %230, %231 : vector<8x128xf32>
    %233 = arith.negf %232 : vector<8x128xf32>
    %234 = math.exp %233 : vector<8x128xf32>
    %cst_103 = arith.constant 1.000000e+00 : f32
    %235 = vector.broadcast %cst_103 : f32 to vector<8x128xf32>
    %236 = arith.addf %235, %234 : vector<8x128xf32>
    %237 = arith.divf %235, %236 : vector<8x128xf32>
    %238 = vector.extract_strided_slice %195 {offsets = [0, 256], sizes = [8, 128], strides = [1, 1]} : vector<8x384xf32> to vector<8x128xf32>
    %239 = vector.extract_strided_slice %188 {offsets = [0, 256], sizes = [8, 128], strides = [1, 1]} : vector<8x384xf32> to vector<8x128xf32>
    %240 = arith.mulf %229, %239 : vector<8x128xf32>
    %241 = arith.addf %238, %240 : vector<8x128xf32>
    %242 = math.tanh %241 : vector<8x128xf32>
    %cst_104 = arith.constant 1.000000e+00 : f32
    %243 = vector.broadcast %cst_104 : f32 to vector<8x128xf32>
    %244 = arith.subf %243, %237 : vector<8x128xf32>
    %245 = arith.mulf %244, %242 : vector<8x128xf32>
    %246 = arith.mulf %237, %178 : vector<8x128xf32>
    %247 = arith.addf %245, %246 : vector<8x128xf32>
    %c0_105 = arith.constant 0 : index
    %c0_106 = arith.constant 0 : index
    %248 = vector.load %arg17[%c0_105, %c0_106] : memref<8x128xf32, #tpu.memory_space<vmem>>, vector<8x128xf32>
    tpu.vector_store %arg17[%c0_105, %c0_106], %221 {strides = array<i32>} : memref<8x128xf32, #tpu.memory_space<vmem>>, vector<8x128xf32>,
    %c0_107 = arith.constant 0 : index
    %c0_108 = arith.constant 0 : index
    %249 = vector.load %arg18[%c0_107, %c0_108] : memref<8x128xf32, #tpu.memory_space<vmem>>, vector<8x128xf32>
    tpu.vector_store %arg18[%c0_107, %c0_108], %247 {strides = array<i32>} : memref<8x128xf32, #tpu.memory_space<vmem>>, vector<8x128xf32>,
    %250 = arith.index_cast %c2_i32 : i32 to index
    %c0_109 = arith.constant 0 : index
    %c0_110 = arith.constant 0 : index
    %251 = vector.load %arg20[%250, %c0_109, %c0_110] : memref<4x8x256xf32, #tpu.memory_space<vmem>>, vector<1x8x128xf32>
    %252 = vector.shape_cast %251 : vector<1x8x128xf32> to vector<8x128xf32>
    %253 = vector.shape_cast %221 : vector<8x128xf32> to vector<1x8x128xf32>
    tpu.vector_store %arg20[%250, %c0_109, %c0_110], %253 {strides = array<i32>} : memref<4x8x256xf32, #tpu.memory_space<vmem>>, vector<1x8x128xf32>,
    %c3_i32_111 = arith.constant 3 : i32
    %254 = arith.subi %c3_i32_111, %c2_i32 : i32
    %255 = arith.index_cast %254 : i32 to index
    %c0_112 = arith.constant 0 : index
    %c128_113 = arith.constant 128 : index
    %256 = vector.load %arg20[%255, %c0_112, %c128_113] : memref<4x8x256xf32, #tpu.memory_space<vmem>>, vector<1x8x128xf32>
    %257 = vector.shape_cast %256 : vector<1x8x128xf32> to vector<8x128xf32>
    %258 = vector.shape_cast %247 : vector<8x128xf32> to vector<1x8x128xf32>
    tpu.vector_store %arg20[%255, %c0_112, %c128_113], %258 {strides = array<i32>} : memref<4x8x256xf32, #tpu.memory_space<vmem>>, vector<1x8x128xf32>,
    %c3_i32_114 = arith.constant 3 : i32
    %c0_115 = arith.constant 0 : index
    %c0_116 = arith.constant 0 : index
    %259 = vector.load %arg17[%c0_115, %c0_116] : memref<8x128xf32, #tpu.memory_space<vmem>>, vector<8x128xf32>
    %c0_117 = arith.constant 0 : index
    %c0_118 = arith.constant 0 : index
    %260 = vector.load %arg18[%c0_117, %c0_118] : memref<8x128xf32, #tpu.memory_space<vmem>>, vector<8x128xf32>
    %c0_119 = arith.constant 0 : index
    %c0_120 = arith.constant 0 : index
    %261 = vector.load %arg3[%c0_119, %c0_120] : memref<128x384xf32, #tpu.memory_space<vmem>>, vector<128x384xf32>
    %cst_121 = arith.constant dense<0.000000e+00> : vector<8x384xf32>
    %262 = tpu.matmul %259, %261, %cst_121 {dimension_numbers = #tpu.dot_dimension_numbers<[1], [0], [0], [1], [0, 0, 1, 1], [], []>} : vector<8x128xf32>, vector<128x384xf32>, vector<8x384xf32> -> vector<8x384xf32>
    %c0_122 = arith.constant 0 : index
    %c0_123 = arith.constant 0 : index
    %263 = vector.load %arg5[%c0_122, %c0_123] : memref<1x384xf32, #tpu.memory_space<vmem>>, vector<1x384xf32>
    %264 = vector.broadcast %263 : vector<1x384xf32> to vector<8x384xf32>
    %265 = arith.addf %262, %264 : vector<8x384xf32>
    %c0_124 = arith.constant 0 : index
    %c0_125 = arith.constant 0 : index
    %266 = vector.load %arg4[%c0_124, %c0_125] : memref<128x384xf32, #tpu.memory_space<vmem>>, vector<128x384xf32>
    %cst_126 = arith.constant dense<0.000000e+00> : vector<8x384xf32>
    %267 = tpu.matmul %260, %266, %cst_126 {dimension_numbers = #tpu.dot_dimension_numbers<[1], [0], [0], [1], [0, 0, 1, 1], [], []>} : vector<8x128xf32>, vector<128x384xf32>, vector<8x384xf32> -> vector<8x384xf32>
    %c0_127 = arith.constant 0 : index
    %c0_128 = arith.constant 0 : index
    %268 = vector.load %arg6[%c0_127, %c0_128] : memref<1x384xf32, #tpu.memory_space<vmem>>, vector<1x384xf32>
    %269 = vector.broadcast %268 : vector<1x384xf32> to vector<8x384xf32>
    %270 = arith.addf %267, %269 : vector<8x384xf32>
    %271 = arith.index_cast %c3_i32_114 : i32 to index
    %c0_129 = arith.constant 0 : index
    %c0_130 = arith.constant 0 : index
    %272 = vector.load %arg19[%271, %c0_129, %c0_130] : memref<4x8x768xf32, #tpu.memory_space<vmem>>, vector<1x8x384xf32>
    %273 = vector.shape_cast %272 : vector<1x8x384xf32> to vector<8x384xf32>
    %c3_i32_131 = arith.constant 3 : i32
    %274 = arith.subi %c3_i32_131, %c3_i32_114 : i32
    %275 = arith.index_cast %274 : i32 to index
    %c0_132 = arith.constant 0 : index
    %c384_133 = arith.constant 384 : index
    %276 = vector.load %arg19[%275, %c0_132, %c384_133] : memref<4x8x768xf32, #tpu.memory_space<vmem>>, vector<1x8x384xf32>
    %277 = vector.shape_cast %276 : vector<1x8x384xf32> to vector<8x384xf32>
    %278 = vector.extract_strided_slice %273 {offsets = [0, 0], sizes = [8, 128], strides = [1, 1]} : vector<8x384xf32> to vector<8x128xf32>
    %279 = vector.extract_strided_slice %265 {offsets = [0, 0], sizes = [8, 128], strides = [1, 1]} : vector<8x384xf32> to vector<8x128xf32>
    %280 = arith.addf %278, %279 : vector<8x128xf32>
    %281 = arith.negf %280 : vector<8x128xf32>
    %282 = math.exp %281 : vector<8x128xf32>
    %cst_134 = arith.constant 1.000000e+00 : f32
    %283 = vector.broadcast %cst_134 : f32 to vector<8x128xf32>
    %284 = arith.addf %283, %282 : vector<8x128xf32>
    %285 = arith.divf %283, %284 : vector<8x128xf32>
    %286 = vector.extract_strided_slice %273 {offsets = [0, 128], sizes = [8, 128], strides = [1, 1]} : vector<8x384xf32> to vector<8x128xf32>
    %287 = vector.extract_strided_slice %265 {offsets = [0, 128], sizes = [8, 128], strides = [1, 1]} : vector<8x384xf32> to vector<8x128xf32>
    %288 = arith.addf %286, %287 : vector<8x128xf32>
    %289 = arith.negf %288 : vector<8x128xf32>
    %290 = math.exp %289 : vector<8x128xf32>
    %cst_135 = arith.constant 1.000000e+00 : f32
    %291 = vector.broadcast %cst_135 : f32 to vector<8x128xf32>
    %292 = arith.addf %291, %290 : vector<8x128xf32>
    %293 = arith.divf %291, %292 : vector<8x128xf32>
    %294 = vector.extract_strided_slice %273 {offsets = [0, 256], sizes = [8, 128], strides = [1, 1]} : vector<8x384xf32> to vector<8x128xf32>
    %295 = vector.extract_strided_slice %265 {offsets = [0, 256], sizes = [8, 128], strides = [1, 1]} : vector<8x384xf32> to vector<8x128xf32>
    %296 = arith.mulf %285, %295 : vector<8x128xf32>
    %297 = arith.addf %294, %296 : vector<8x128xf32>
    %298 = math.tanh %297 : vector<8x128xf32>
    %cst_136 = arith.constant 1.000000e+00 : f32
    %299 = vector.broadcast %cst_136 : f32 to vector<8x128xf32>
    %300 = arith.subf %299, %293 : vector<8x128xf32>
    %301 = arith.mulf %300, %298 : vector<8x128xf32>
    %302 = arith.mulf %293, %259 : vector<8x128xf32>
    %303 = arith.addf %301, %302 : vector<8x128xf32>
    %304 = vector.extract_strided_slice %277 {offsets = [0, 0], sizes = [8, 128], strides = [1, 1]} : vector<8x384xf32> to vector<8x128xf32>
    %305 = vector.extract_strided_slice %270 {offsets = [0, 0], sizes = [8, 128], strides = [1, 1]} : vector<8x384xf32> to vector<8x128xf32>
    %306 = arith.addf %304, %305 : vector<8x128xf32>
    %307 = arith.negf %306 : vector<8x128xf32>
    %308 = math.exp %307 : vector<8x128xf32>
    %cst_137 = arith.constant 1.000000e+00 : f32
    %309 = vector.broadcast %cst_137 : f32 to vector<8x128xf32>
    %310 = arith.addf %309, %308 : vector<8x128xf32>
    %311 = arith.divf %309, %310 : vector<8x128xf32>
    %312 = vector.extract_strided_slice %277 {offsets = [0, 128], sizes = [8, 128], strides = [1, 1]} : vector<8x384xf32> to vector<8x128xf32>
    %313 = vector.extract_strided_slice %270 {offsets = [0, 128], sizes = [8, 128], strides = [1, 1]} : vector<8x384xf32> to vector<8x128xf32>
    %314 = arith.addf %312, %313 : vector<8x128xf32>
    %315 = arith.negf %314 : vector<8x128xf32>
    %316 = math.exp %315 : vector<8x128xf32>
    %cst_138 = arith.constant 1.000000e+00 : f32
    %317 = vector.broadcast %cst_138 : f32 to vector<8x128xf32>
    %318 = arith.addf %317, %316 : vector<8x128xf32>
    %319 = arith.divf %317, %318 : vector<8x128xf32>
    %320 = vector.extract_strided_slice %277 {offsets = [0, 256], sizes = [8, 128], strides = [1, 1]} : vector<8x384xf32> to vector<8x128xf32>
    %321 = vector.extract_strided_slice %270 {offsets = [0, 256], sizes = [8, 128], strides = [1, 1]} : vector<8x384xf32> to vector<8x128xf32>
    %322 = arith.mulf %311, %321 : vector<8x128xf32>
    %323 = arith.addf %320, %322 : vector<8x128xf32>
    %324 = math.tanh %323 : vector<8x128xf32>
    %cst_139 = arith.constant 1.000000e+00 : f32
    %325 = vector.broadcast %cst_139 : f32 to vector<8x128xf32>
    %326 = arith.subf %325, %319 : vector<8x128xf32>
    %327 = arith.mulf %326, %324 : vector<8x128xf32>
    %328 = arith.mulf %319, %260 : vector<8x128xf32>
    %329 = arith.addf %327, %328 : vector<8x128xf32>
    %c0_140 = arith.constant 0 : index
    %c0_141 = arith.constant 0 : index
    %330 = vector.load %arg17[%c0_140, %c0_141] : memref<8x128xf32, #tpu.memory_space<vmem>>, vector<8x128xf32>
    tpu.vector_store %arg17[%c0_140, %c0_141], %303 {strides = array<i32>} : memref<8x128xf32, #tpu.memory_space<vmem>>, vector<8x128xf32>,
    %c0_142 = arith.constant 0 : index
    %c0_143 = arith.constant 0 : index
    %331 = vector.load %arg18[%c0_142, %c0_143] : memref<8x128xf32, #tpu.memory_space<vmem>>, vector<8x128xf32>
    tpu.vector_store %arg18[%c0_142, %c0_143], %329 {strides = array<i32>} : memref<8x128xf32, #tpu.memory_space<vmem>>, vector<8x128xf32>,
    %332 = arith.index_cast %c3_i32_114 : i32 to index
    %c0_144 = arith.constant 0 : index
    %c0_145 = arith.constant 0 : index
    %333 = vector.load %arg20[%332, %c0_144, %c0_145] : memref<4x8x256xf32, #tpu.memory_space<vmem>>, vector<1x8x128xf32>
    %334 = vector.shape_cast %333 : vector<1x8x128xf32> to vector<8x128xf32>
    %335 = vector.shape_cast %303 : vector<8x128xf32> to vector<1x8x128xf32>
    tpu.vector_store %arg20[%332, %c0_144, %c0_145], %335 {strides = array<i32>} : memref<4x8x256xf32, #tpu.memory_space<vmem>>, vector<1x8x128xf32>,
    %c3_i32_146 = arith.constant 3 : i32
    %336 = arith.subi %c3_i32_146, %c3_i32_114 : i32
    %337 = arith.index_cast %336 : i32 to index
    %c0_147 = arith.constant 0 : index
    %c128_148 = arith.constant 128 : index
    %338 = vector.load %arg20[%337, %c0_147, %c128_148] : memref<4x8x256xf32, #tpu.memory_space<vmem>>, vector<1x8x128xf32>
    %339 = vector.shape_cast %338 : vector<1x8x128xf32> to vector<8x128xf32>
    %340 = vector.shape_cast %329 : vector<8x128xf32> to vector<1x8x128xf32>
    tpu.vector_store %arg20[%337, %c0_147, %c128_148], %340 {strides = array<i32>} : memref<4x8x256xf32, #tpu.memory_space<vmem>>, vector<1x8x128xf32>,
    %c4_i32 = arith.constant 4 : i32
    %c0_149 = arith.constant 0 : index
    %c0_150 = arith.constant 0 : index
    %c0_151 = arith.constant 0 : index
    %341 = vector.load %arg20[%c0_149, %c0_150, %c0_151] : memref<4x8x256xf32, #tpu.memory_space<vmem>>, vector<4x8x256xf32>
    %342 = vector.shape_cast %341 : vector<4x8x256xf32> to vector<32x256xf32>
    %c0_152 = arith.constant 0 : index
    %c0_153 = arith.constant 0 : index
    %343 = vector.load %arg7[%c0_152, %c0_153] : memref<256x256xf32, #tpu.memory_space<vmem>>, vector<256x256xf32>
    %cst_154 = arith.constant dense<0.000000e+00> : vector<32x256xf32>
    %344 = tpu.matmul %342, %343, %cst_154 {dimension_numbers = #tpu.dot_dimension_numbers<[1], [0], [0], [1], [0, 0, 1, 1], [], []>} : vector<32x256xf32>, vector<256x256xf32>, vector<32x256xf32> -> vector<32x256xf32>
    %345 = vector.shape_cast %344 : vector<32x256xf32> to vector<4x8x256xf32>
    %346 = vector.extract_strided_slice %345 {offsets = [0, 0, 0], sizes = [4, 7, 128], strides = [1, 1, 1]} : vector<4x8x256xf32> to vector<4x7x128xf32>
    %347 = vector.extract_strided_slice %345 {offsets = [0, 1, 128], sizes = [4, 7, 128], strides = [1, 1, 1]} : vector<4x8x256xf32> to vector<4x7x128xf32>
    %348 = arith.addf %346, %347 : vector<4x7x128xf32>
    %c0_155 = arith.constant 0 : index
    %c0_156 = arith.constant 0 : index
    %c0_157 = arith.constant 0 : index
    %349 = vector.load %arg8[%c0_155, %c0_156, %c0_157] : memref<1x1x128xf32, #tpu.memory_space<vmem>>, vector<1x1x128xf32>
    %350 = vector.broadcast %349 : vector<1x1x128xf32> to vector<4x7x128xf32>
    %351 = arith.addf %348, %350 : vector<4x7x128xf32>
    %cst_158 = arith.constant 0.000000e+00 : f32
    %352 = vector.broadcast %cst_158 : f32 to vector<4x7x128xf32>
    %353 = arith.maximumf %351, %352 : vector<4x7x128xf32>
    %354 = vector.shape_cast %353 : vector<4x7x128xf32> to vector<28x128xf32>
    %c0_159 = arith.constant 0 : index
    %c0_160 = arith.constant 0 : index
    %355 = vector.load %arg9[%c0_159, %c0_160] : memref<128x128xf32, #tpu.memory_space<vmem>>, vector<128x128xf32>
    %cst_161 = arith.constant dense<0.000000e+00> : vector<28x128xf32>
    %356 = tpu.matmul %354, %355, %cst_161 {dimension_numbers = #tpu.dot_dimension_numbers<[1], [0], [0], [1], [0, 0, 1, 1], [], []>} : vector<28x128xf32>, vector<128x128xf32>, vector<28x128xf32> -> vector<28x128xf32>
    %357 = vector.shape_cast %356 : vector<28x128xf32> to vector<4x7x128xf32>
    "tpu.trace_start"() <{level = 10 : i32, message = "tlh,tmh->tlm"}> : () -> ()
    %cst_162 = arith.constant dense<0.000000e+00> : vector<4x7x7xf32>
    %358 = tpu.matmul %357, %353, %cst_162 {dimension_numbers = #tpu.dot_dimension_numbers<[2], [2], [1], [1], [0, 0, 0, 1, 1, 1], [0], [0]>} : vector<4x7x128xf32>, vector<4x7x128xf32>, vector<4x7x7xf32> -> vector<4x7x7xf32>
    "tpu.trace_stop"() : () -> ()
    %cst_163 = arith.constant dense<0xFF800000> : vector<4x7xf32>
    %359 = vector.multi_reduction <maximumf>, %358, %cst_163 [1] : vector<4x7x7xf32> to vector<4x7xf32>
    %360 = vector.shape_cast %359 : vector<4x7xf32> to vector<4x1x7xf32>
    %361 = vector.broadcast %360 : vector<4x1x7xf32> to vector<4x7x7xf32>
    %362 = arith.subf %358, %361 : vector<4x7x7xf32>
    %363 = math.exp %362 : vector<4x7x7xf32>
    %cst_164 = arith.constant dense<0.000000e+00> : vector<4x7xf32>
    %364 = vector.multi_reduction <add>, %363, %cst_164 [1] : vector<4x7x7xf32> to vector<4x7xf32>
    %365 = vector.shape_cast %364 : vector<4x7xf32> to vector<4x1x7xf32>
    %366 = vector.broadcast %365 : vector<4x1x7xf32> to vector<4x7x7xf32>
    %367 = arith.divf %363, %366 : vector<4x7x7xf32>
    "tpu.trace_start"() <{level = 10 : i32, message = "tlm,tmh->tlh"}> : () -> ()
    %cst_165 = arith.constant dense<0.000000e+00> : vector<4x7x128xf32>
    %368 = tpu.matmul %367, %353, %cst_165 {dimension_numbers = #tpu.dot_dimension_numbers<[2], [1], [1], [2], [0, 0, 0, 1, 1, 2], [0], [0]>} : vector<4x7x7xf32>, vector<4x7x128xf32>, vector<4x7x128xf32> -> vector<4x7x128xf32>
    "tpu.trace_stop"() : () -> ()
    %369 = vector.shape_cast %368 : vector<4x7x128xf32> to vector<28x128xf32>
    %370 = arith.mulf %353, %368 : vector<4x7x128xf32>
    %371 = vector.shape_cast %370 : vector<4x7x128xf32> to vector<28x128xf32>
    %c0_166 = arith.constant 0 : index
    %c0_167 = arith.constant 0 : index
    %372 = vector.load %arg10[%c0_166, %c0_167] : memref<128x128xf32, #tpu.memory_space<vmem>>, vector<128x128xf32>
    %cst_168 = arith.constant dense<0.000000e+00> : vector<28x128xf32>
    %373 = tpu.matmul %354, %372, %cst_168 {dimension_numbers = #tpu.dot_dimension_numbers<[1], [0], [0], [1], [0, 0, 1, 1], [], []>} : vector<28x128xf32>, vector<128x128xf32>, vector<28x128xf32> -> vector<28x128xf32>
    %c0_169 = arith.constant 0 : index
    %c0_170 = arith.constant 0 : index
    %374 = vector.load %arg11[%c0_169, %c0_170] : memref<128x128xf32, #tpu.memory_space<vmem>>, vector<128x128xf32>
    %cst_171 = arith.constant dense<0.000000e+00> : vector<28x128xf32>
    %375 = tpu.matmul %369, %374, %cst_171 {dimension_numbers = #tpu.dot_dimension_numbers<[1], [0], [0], [1], [0, 0, 1, 1], [], []>} : vector<28x128xf32>, vector<128x128xf32>, vector<28x128xf32> -> vector<28x128xf32>
    %376 = arith.addf %373, %375 : vector<28x128xf32>
    %c0_172 = arith.constant 0 : index
    %c0_173 = arith.constant 0 : index
    %377 = vector.load %arg12[%c0_172, %c0_173] : memref<128x128xf32, #tpu.memory_space<vmem>>, vector<128x128xf32>
    %cst_174 = arith.constant dense<0.000000e+00> : vector<28x128xf32>
    %378 = tpu.matmul %371, %377, %cst_174 {dimension_numbers = #tpu.dot_dimension_numbers<[1], [0], [0], [1], [0, 0, 1, 1], [], []>} : vector<28x128xf32>, vector<128x128xf32>, vector<28x128xf32> -> vector<28x128xf32>
    %379 = arith.addf %376, %378 : vector<28x128xf32>
    %c0_175 = arith.constant 0 : index
    %c0_176 = arith.constant 0 : index
    %380 = vector.load %arg13[%c0_175, %c0_176] : memref<1x128xf32, #tpu.memory_space<vmem>>, vector<1x128xf32>
    %381 = vector.broadcast %380 : vector<1x128xf32> to vector<28x128xf32>
    %382 = arith.addf %379, %381 : vector<28x128xf32>
    %cst_177 = arith.constant 0.000000e+00 : f32
    %383 = vector.broadcast %cst_177 : f32 to vector<28x128xf32>
    %384 = arith.maximumf %382, %383 : vector<28x128xf32>
    %385 = vector.shape_cast %384 : vector<28x128xf32> to vector<4x7x128xf32>
    %cst_178 = arith.constant dense<0xFF800000> : vector<4x128xf32>
    %386 = vector.multi_reduction <maximumf>, %385, %cst_178 [1] : vector<4x7x128xf32> to vector<4x128xf32>
    %c0_179 = arith.constant 0 : index
    %c0_180 = arith.constant 0 : index
    %387 = vector.load %arg14[%c0_179, %c0_180] : memref<1x128xf32, #tpu.memory_space<vmem>>, vector<1x128xf32>
    %388 = vector.broadcast %387 : vector<1x128xf32> to vector<4x128xf32>
    %389 = arith.mulf %386, %388 : vector<4x128xf32>
    %cst_181 = arith.constant dense<0.000000e+00> : vector<4xf32>
    %390 = vector.multi_reduction <add>, %389, %cst_181 [1] : vector<4x128xf32> to vector<4xf32>
    %391 = vector.shape_cast %390 : vector<4xf32> to vector<4x1xf32>
    %c0_182 = arith.constant 0 : index
    %c0_183 = arith.constant 0 : index
    %392 = vector.load %arg15[%c0_182, %c0_183] : memref<1x1xf32, #tpu.memory_space<vmem>>, vector<1x1xf32>
    %393 = vector.broadcast %392 : vector<1x1xf32> to vector<4x1xf32>
    %394 = arith.addf %391, %393 : vector<4x1xf32>
    %c0_184 = arith.constant 0 : index
    %c0_185 = arith.constant 0 : index
    %395 = vector.load %arg16[%c0_184, %c0_185] : memref<4x1xf32, #tpu.memory_space<vmem>>, vector<4x1xf32>
    tpu.vector_store %arg16[%c0_184, %c0_185], %394 {strides = array<i32>} : memref<4x1xf32, #tpu.memory_space<vmem>>, vector<4x1xf32>,
    return
  }
}

</mosaic_0001>

<llo_original>
// kernel: gru_cnn_att_forward.1
$region0: #{gru_cnn_att_forward.1}
  #allocation0 [shape = 'u32[]', space=smem, size = 0x4, offset = 0x4, fixed_abs, tag = 'smem constant byte address 0x4 - core index']
  #allocation1 [shape = 'u32[72,128]{1,0:T(1,128)}', space=vmem, size = 0x9000, scoped, tag = 'internal scratch']
  #allocation2 [shape = 'f32[8,128]{1,0:T(8,128)}', space=vmem, size = 0x1000, scoped, tag = 'scratch operand']
  #allocation3 [shape = 'f32[8,128]{1,0:T(8,128)}', space=vmem, size = 0x1000, scoped, tag = 'scratch operand']
  #allocation4 [shape = 'f32[4,8,768]{2,1,0:T(8,128)}', space=vmem, size = 0x18000, scoped, tag = 'scratch operand']
  #allocation5 [shape = 'f32[4,8,256]{2,1,0:T(8,128)}', space=vmem, size = 0x8000, scoped, tag = 'scratch operand']
  #allocation6 [shape = 'f32[1,1]{1,0:T(1,128)S(1)}', space=vmem, size = 0x200, scoped, tag = 'scoped memory for gru_cnn_att_forward.1']
  %s0 = inlined_call_operand.vmem [shape: f32[4,8,300], index: 0, kind: input, shape index: {}]
  %s1 = inlined_call_operand.hbm [shape: f32[300,768], index: 1, kind: input, shape index: {}]
  %s2 = inlined_call_operand.vmem [shape: f32[1,768], index: 2, kind: input, shape index: {}]
  %s3 = inlined_call_operand.vmem [shape: f32[128,384], index: 3, kind: input, shape index: {}]
  %s4 = inlined_call_operand.hbm [shape: f32[128,384], index: 4, kind: input, shape index: {}]
  %s5 = inlined_call_operand.vmem [shape: f32[1,384], index: 5, kind: input, shape index: {}]
  %s6 = inlined_call_operand.vmem [shape: f32[1,384], index: 6, kind: input, shape index: {}]
  %s7 = inlined_call_operand.vmem [shape: f32[256,256], index: 7, kind: input, shape index: {}]
  %s8 = inlined_call_operand.vmem [shape: f32[1,1,128], index: 8, kind: input, shape index: {}]
  %s9 = inlined_call_operand.vmem [shape: f32[128,128], index: 9, kind: input, shape index: {}]
  %s10 = inlined_call_operand.hbm [shape: f32[128,128], index: 10, kind: input, shape index: {}]
  %s11 = inlined_call_operand.hbm [shape: f32[128,128], index: 11, kind: input, shape index: {}]
  %s12 = inlined_call_operand.hbm [shape: f32[128,128], index: 12, kind: input, shape index: {}]
  %s13 = inlined_call_operand.vmem [shape: f32[1,128], index: 13, kind: input, shape index: {}]
  %s14 = inlined_call_operand.vmem [shape: f32[1,128], index: 14, kind: input, shape index: {}]
  %s15 = inlined_call_operand.<no memory space> [shape: f32[1,1], index: 15, kind: input, shape index: {}]
  %s16 = inlined_call_operand.vmem [shape: f32[4,1], index: 16, kind: output, shape index: {}]
  %s17 = sld [smem:[#allocation0]]
  $region94: #{gru_cnn_att_forward.1} parent=0
    _
  %s19 = ssub.s32 1, %s17
  %s20 = scalar_select 0, %s19, %s17
  %v21 = vstv %s15
  %22 = vst [vmem:[#allocation6] sm:$0x1] %v21
  $region1: #{gru_cnn_att_forward.1} parent=0
    #allocation7 [shape = 'u8[933888]{0}', space=vmem, size = 0xe4000, scoped, tag = 'input window, operand 1, single buffered']
    #allocation8 [shape = 's32[1]{0}', space=sflag, size = 0x4, scoped, tag = 'scoped memory for gru_cnn_att_forward.1']
    #allocation9 [shape = 'u8[196608]{0}', space=vmem, size = 0x30000, scoped, tag = 'input window, operand 4, single buffered']
    #allocation10 [shape = 's32[1]{0}', space=sflag, size = 0x4, scoped, tag = 'scoped memory for gru_cnn_att_forward.1']
    #allocation11 [shape = 'u8[65536]{0}', space=vmem, size = 0x10000, scoped, tag = 'input window, operand 10, single buffered']
    #allocation12 [shape = 'u8[65536]{0}', space=vmem, size = 0x10000, scoped, tag = 'input window, operand 11, single buffered']
    #allocation13 [shape = 's32[1]{0}', space=sflag, size = 0x4, scoped, tag = 'scoped memory for gru_cnn_att_forward.1']
    #allocation14 [shape = 'u8[65536]{0}', space=vmem, size = 0x10000, scoped, tag = 'input window, operand 12, single buffered']
    %23 = vsyncpa [#allocation8], 0
    %24 = vsyncpa [#allocation10], 0
    %25 = vsyncpa [#allocation13], 0
    // Predicated region
    $region2: #{gru_cnn_att_forward.1} parent=1 // pred_check
      _
    $region3: #{gru_cnn_att_forward.1} parent=1 // pred_check_branch
      %27 = sbr.rel (0) target = $region5
    $region4: #{gru_cnn_att_forward.1} parent=1 // pred_region
      _
    $region5: #{gru_cnn_att_forward.1} parent=1 // pred_fallthru
      _
    // Predicated region
    $region6: #{gru_cnn_att_forward.1} parent=1 // pred_check
      _
    $region7: #{gru_cnn_att_forward.1} parent=1 // pred_check_branch
      %29 = sbr.rel (0) target = $region9
    $region8: #{gru_cnn_att_forward.1} parent=1 // pred_region
      %31 = vsyncadd [#allocation8], 0
      %s32 = sshll.u32 %s1, 4
      %s33 = int_to_ptr.hbm [resolvable:$true] %s32
      %s34 = sshll.u32 [#allocation7], 4
      %s35 = int_to_ptr.vmem [resolvable:$true] %s34
      %40 = dma.hbm_to_vmem [thread:$0]  %s33, 29184, %s35, [#allocation8], 768, 768, 48
    $region9: #{gru_cnn_att_forward.1} parent=1 // pred_fallthru
      _
    // Predicated region
    $region10: #{gru_cnn_att_forward.1} parent=1 // pred_check
      _
    $region11: #{gru_cnn_att_forward.1} parent=1 // pred_check_branch
      %42 = sbr.rel (0) target = $region13
    $region12: #{gru_cnn_att_forward.1} parent=1 // pred_region
      _
    $region13: #{gru_cnn_att_forward.1} parent=1 // pred_fallthru
      _
    // Predicated region
    $region14: #{gru_cnn_att_forward.1} parent=1 // pred_check
      _
    $region15: #{gru_cnn_att_forward.1} parent=1 // pred_check_branch
      %44 = sbr.rel (0) target = $region17
    $region16: #{gru_cnn_att_forward.1} parent=1 // pred_region
      _
    $region17: #{gru_cnn_att_forward.1} parent=1 // pred_fallthru
      _
    // Predicated region
    $region18: #{gru_cnn_att_forward.1} parent=1 // pred_check
      _
    $region19: #{gru_cnn_att_forward.1} parent=1 // pred_check_branch
      %46 = sbr.rel (0) target = $region21
    $region20: #{gru_cnn_att_forward.1} parent=1 // pred_region
      %48 = vsyncadd [#allocation10], 0
      %s49 = sshll.u32 %s4, 4
      %s50 = int_to_ptr.hbm [resolvable:$true] %s49
      %s51 = sshll.u32 [#allocation9], 4
      %s52 = int_to_ptr.vmem [resolvable:$true] %s51
      %57 = dma.hbm_to_vmem [thread:$0]  %s50, 6144, %s52, [#allocation10], 384, 384, 24
    $region21: #{gru_cnn_att_forward.1} parent=1 // pred_fallthru
      _
    // Predicated region
    $region22: #{gru_cnn_att_forward.1} parent=1 // pred_check
      _
    $region23: #{gru_cnn_att_forward.1} parent=1 // pred_check_branch
      %59 = sbr.rel (0) target = $region25
    $region24: #{gru_cnn_att_forward.1} parent=1 // pred_region
      _
    $region25: #{gru_cnn_att_forward.1} parent=1 // pred_fallthru
      _
    // Predicated region
    $region26: #{gru_cnn_att_forward.1} parent=1 // pred_check
      _
    $region27: #{gru_cnn_att_forward.1} parent=1 // pred_check_branch
      %61 = sbr.rel (0) target = $region29
    $region28: #{gru_cnn_att_forward.1} parent=1 // pred_region
      _
    $region29: #{gru_cnn_att_forward.1} parent=1 // pred_fallthru
      _
    // Predicated region
    $region30: #{gru_cnn_att_forward.1} parent=1 // pred_check
      _
    $region31: #{gru_cnn_att_forward.1} parent=1 // pred_check_branch
      %63 = sbr.rel (0) target = $region33
    $region32: #{gru_cnn_att_forward.1} parent=1 // pred_region
      _
    $region33: #{gru_cnn_att_forward.1} parent=1 // pred_fallthru
      _
    // Predicated region
    $region34: #{gru_cnn_att_forward.1} parent=1 // pred_check
      _
    $region35: #{gru_cnn_att_forward.1} parent=1 // pred_check_branch
      %65 = sbr.rel (0) target = $region37
    $region36: #{gru_cnn_att_forward.1} parent=1 // pred_region
      _
    $region37: #{gru_cnn_att_forward.1} parent=1 // pred_fallthru
      _
    // Predicated region
    $region38: #{gru_cnn_att_forward.1} parent=1 // pred_check
      _
    $region39: #{gru_cnn_att_forward.1} parent=1 // pred_check_branch
      %67 = sbr.rel (0) target = $region41
    $region40: #{gru_cnn_att_forward.1} parent=1 // pred_region
      _
    $region41: #{gru_cnn_att_forward.1} parent=1 // pred_fallthru
      _
    // Predicated region
    $region42: #{gru_cnn_att_forward.1} parent=1 // pred_check
      _
    $region43: #{gru_cnn_att_forward.1} parent=1 // pred_check_branch
      %69 = sbr.rel (0) target = $region45
    $region44: #{gru_cnn_att_forward.1} parent=1 // pred_region
      %71 = vsyncadd [#allocation10], 0
      %s72 = sshll.u32 %s10, 4
      %s73 = int_to_ptr.hbm [resolvable:$true] %s72
      %s74 = sshll.u32 [#allocation11], 4
      %s75 = int_to_ptr.vmem [resolvable:$true] %s74
      %80 = dma.hbm_to_vmem [thread:$0]  %s73, 2048, %s75, [#allocation10], 128, 128, 8
    $region45: #{gru_cnn_att_forward.1} parent=1 // pred_fallthru
      _
    // Predicated region
    $region46: #{gru_cnn_att_forward.1} parent=1 // pred_check
      _
    $region47: #{gru_cnn_att_forward.1} parent=1 // pred_check_branch
      %82 = sbr.rel (0) target = $region49
    $region48: #{gru_cnn_att_forward.1} parent=1 // pred_region
      %84 = vsyncadd [#allocation13], 0
      %s85 = sshll.u32 %s11, 4
      %s86 = int_to_ptr.hbm [resolvable:$true] %s85
      %s87 = sshll.u32 [#allocation12], 4
      %s88 = int_to_ptr.vmem [resolvable:$true] %s87
      %93 = dma.hbm_to_vmem [thread:$0]  %s86, 2048, %s88, [#allocation13], 128, 128, 8
    $region49: #{gru_cnn_att_forward.1} parent=1 // pred_fallthru
      _
    // Predicated region
    $region50: #{gru_cnn_att_forward.1} parent=1 // pred_check
      _
    $region51: #{gru_cnn_att_forward.1} parent=1 // pred_check_branch
      %95 = sbr.rel (0) target = $region53
    $region52: #{gru_cnn_att_forward.1} parent=1 // pred_region
      %97 = vsyncadd [#allocation13], 0
      %s98 = sshll.u32 %s12, 4
      %s99 = int_to_ptr.hbm [resolvable:$true] %s98
      %s100 = sshll.u32 [#allocation14], 4
      %s101 = int_to_ptr.vmem [resolvable:$true] %s100
      %106 = dma.hbm_to_vmem [thread:$0]  %s99, 2048, %s101, [#allocation13], 128, 128, 8
    $region53: #{gru_cnn_att_forward.1} parent=1 // pred_fallthru
      _
    // Predicated region
    $region54: #{gru_cnn_att_forward.1} parent=1 // pred_check
      _
    $region55: #{gru_cnn_att_forward.1} parent=1 // pred_check_branch
      %108 = sbr.rel (0) target = $region57
    $region56: #{gru_cnn_att_forward.1} parent=1 // pred_region
      _
    $region57: #{gru_cnn_att_forward.1} parent=1 // pred_fallthru
      _
    // Predicated region
    $region58: #{gru_cnn_att_forward.1} parent=1 // pred_check
      _
    $region59: #{gru_cnn_att_forward.1} parent=1 // pred_check_branch
      %110 = sbr.rel (0) target = $region61
    $region60: #{gru_cnn_att_forward.1} parent=1 // pred_region
      _
    $region61: #{gru_cnn_att_forward.1} parent=1 // pred_fallthru
      _
    // Predicated region
    $region62: #{gru_cnn_att_forward.1} parent=1 // pred_check
      _
    $region63: #{gru_cnn_att_forward.1} parent=1 // pred_check_branch
      %112 = sbr.rel (0) target = $region65
    $region64: #{gru_cnn_att_forward.1} parent=1 // pred_region
      _
    $region65: #{gru_cnn_att_forward.1} parent=1 // pred_fallthru
      _
    // Predicated region
    $region66: #{gru_cnn_att_forward.1} parent=1 // pred_check
      _
    $region67: #{gru_cnn_att_forward.1} parent=1 // pred_check_branch
      %114 = sbr.rel (0) target = $region69
    $region68: #{gru_cnn_att_forward.1} parent=1 // pred_region
      %116 = dma.done [#allocation8], 29184
    $region69: #{gru_cnn_att_forward.1} parent=1 // pred_fallthru
      _
    // Predicated region
    $region70: #{gru_cnn_att_forward.1} parent=1 // pred_check
      _
    $region71: #{gru_cnn_att_forward.1} parent=1 // pred_check_branch
      %118 = sbr.rel (0) target = $region73
    $region72: #{gru_cnn_att_forward.1} parent=1 // pred_region
      %120 = dma.done [#allocation10], 6144
    $region73: #{gru_cnn_att_forward.1} parent=1 // pred_fallthru
      _
    // Predicated region
    $region74: #{gru_cnn_att_forward.1} parent=1 // pred_check
      _
    $region75: #{gru_cnn_att_forward.1} parent=1 // pred_check_branch
      %122 = sbr.rel (0) target = $region77
    $region76: #{gru_cnn_att_forward.1} parent=1 // pred_region
      %124 = dma.done [#allocation10], 2048
    $region77: #{gru_cnn_att_forward.1} parent=1 // pred_fallthru
      _
    // Predicated region
    $region78: #{gru_cnn_att_forward.1} parent=1 // pred_check
      _
    $region79: #{gru_cnn_att_forward.1} parent=1 // pred_check_branch
      %126 = sbr.rel (0) target = $region81
    $region80: #{gru_cnn_att_forward.1} parent=1 // pred_region
      %128 = dma.done [#allocation13], 2048
    $region81: #{gru_cnn_att_forward.1} parent=1 // pred_fallthru
      _
    // Predicated region
    $region82: #{gru_cnn_att_forward.1} parent=1 // pred_check
      _
    $region83: #{gru_cnn_att_forward.1} parent=1 // pred_check_branch
      %130 = sbr.rel (0) target = $region85
    $region84: #{gru_cnn_att_forward.1} parent=1 // pred_region
      %132 = dma.done [#allocation13], 2048
    $region85: #{gru_cnn_att_forward.1} parent=1 // pred_fallthru
      _
    %v133 = vld [vmem:[%s0] sm:$0xff]
    %v134 = vld [vmem:[%s0 + $0x8] sm:$0xff]
    %v135 = vld [vmem:[%s0 + $0x10] sm:$0xff]
    %v136 = vld [vmem:[%s0 + $0x18] sm:$0xff]
    %v137 = vld [vmem:[%s0 + $0x20] sm:$0xff]
    %v138 = vld [vmem:[%s0 + $0x28] sm:$0xff]
    %v139 = vld [vmem:[%s0 + $0x30] sm:$0xff]
    %v140 = vld [vmem:[%s0 + $0x38] sm:$0xff]
    %v141 = vld [vmem:[%s0 + $0x40] sm:$0xff]
    %v142 = vld [vmem:[%s0 + $0x48] sm:$0xff]
    %v143 = vld [vmem:[%s0 + $0x50] sm:$0xff]
    %v144 = vld [vmem:[%s0 + $0x58] sm:$0xff]
    %v145 = vld [vmem:[#allocation7] sm:$0xff]
    %v146 = vld [vmem:[#allocation7 + $0x8] sm:$0xff]
    %v147 = vld [vmem:[#allocation7 + $0x10] sm:$0xff]
    %v148 = vld [vmem:[#allocation7 + $0x18] sm:$0xff]
    %v149 = vld [vmem:[#allocation7 + $0x20] sm:$0xff]
    %v150 = vld [vmem:[#allocation7 + $0x28] sm:$0xff]
    %v151 = vld [vmem:[#allocation7 + $0x30] sm:$0xff]
    %v152 = vld [vmem:[#allocation7 + $0x38] sm:$0xff]
    %v153 = vld [vmem:[#allocation7 + $0x40] sm:$0xff]
    %v154 = vld [vmem:[#allocation7 + $0x48] sm:$0xff]
    %v155 = vld [vmem:[#allocation7 + $0x50] sm:$0xff]
    %v156 = vld [vmem:[#allocation7 + $0x58] sm:$0xff]
    %v157 = vld [vmem:[#allocation7 + $0x60] sm:$0xff]
    %v158 = vld [vmem:[#allocation7 + $0x68] sm:$0xff]
    %v159 = vld [vmem:[#allocation7 + $0x70] sm:$0xff]
    %v160 = vld [vmem:[#allocation7 + $0x78] sm:$0xff]
    %v161 = vld [vmem:[#allocation7 + $0x80] sm:$0xff]
    %v162 = vld [vmem:[#allocation7 + $0x88] sm:$0xff]
    %v163 = vld [vmem:[#allocation7 + $0x90] sm:$0xff]
    %v164 = vld [vmem:[#allocation7 + $0x98] sm:$0xff]
    %v165 = vld [vmem:[#allocation7 + $0xa0] sm:$0xff]
    %v166 = vld [vmem:[#allocation7 + $0xa8] sm:$0xff]
    %v167 = vld [vmem:[#allocation7 + $0xb0] sm:$0xff]
    %v168 = vld [vmem:[#allocation7 + $0xb8] sm:$0xff]
    %v169 = vld [vmem:[#allocation7 + $0xc0] sm:$0xff]
    %v170 = vld [vmem:[#allocation7 + $0xc8] sm:$0xff]
    %v171 = vld [vmem:[#allocation7 + $0xd0] sm:$0xff]
    %v172 = vld [vmem:[#allocation7 + $0xd8] sm:$0xff]
    %v173 = vld [vmem:[#allocation7 + $0xe0] sm:$0xff]
    %v174 = vld [vmem:[#allocation7 + $0xe8] sm:$0xff]
    %v175 = vld [vmem:[#allocation7 + $0xf0] sm:$0xff]
    %v176 = vld [vmem:[#allocation7 + $0xf8] sm:$0xff]
    %v177 = vld [vmem:[#allocation7 + $0x100] sm:$0xff]
    %v178 = vld [vmem:[#allocation7 + $0x108] sm:$0xff]
    %v179 = vld [vmem:[#allocation7 + $0x110] sm:$0xff]
    %v180 = vld [vmem:[#allocation7 + $0x118] sm:$0xff]
    %v181 = vld [vmem:[#allocation7 + $0x120] sm:$0xff]
    %v182 = vld [vmem:[#allocation7 + $0x128] sm:$0xff]
    %v183 = vld [vmem:[#allocation7 + $0x130] sm:$0xff]
    %v184 = vld [vmem:[#allocation7 + $0x138] sm:$0xff]
    %v185 = vld [vmem:[#allocation7 + $0x140] sm:$0xff]
    %v186 = vld [vmem:[#allocation7 + $0x148] sm:$0xff]
    %v187 = vld [vmem:[#allocation7 + $0x150] sm:$0xff]
    %v188 = vld [vmem:[#allocation7 + $0x158] sm:$0xff]
    %v189 = vld [vmem:[#allocation7 + $0x160] sm:$0xff]
    %v190 = vld [vmem:[#allocation7 + $0x168] sm:$0xff]
    %v191 = vld [vmem:[#allocation7 + $0x170] sm:$0xff]
    %v192 = vld [vmem:[#allocation7 + $0x178] sm:$0xff]
    %v193 = vld [vmem:[#allocation7 + $0x180] sm:$0xff]
    %v194 = vld [vmem:[#allocation7 + $0x188] sm:$0xff]
    %v195 = vld [vmem:[#allocation7 + $0x190] sm:$0xff]
    %v196 = vld [vmem:[#allocation7 + $0x198] sm:$0xff]
    %v197 = vld [vmem:[#allocation7 + $0x1a0] sm:$0xff]
    %v198 = vld [vmem:[#allocation7 + $0x1a8] sm:$0xff]
    %v199 = vld [vmem:[#allocation7 + $0x1b0] sm:$0xff]
    %v200 = vld [vmem:[#allocation7 + $0x1b8] sm:$0xff]
    %v201 = vld [vmem:[#allocation7 + $0x1c0] sm:$0xff]
    %v202 = vld [vmem:[#allocation7 + $0x1c8] sm:$0xff]
    %v203 = vld [vmem:[#allocation7 + $0x1d0] sm:$0xff]
    %v204 = vld [vmem:[#allocation7 + $0x1d8] sm:$0xff]
    %v205 = vld [vmem:[#allocation7 + $0x1e0] sm:$0xff]
    %v206 = vld [vmem:[#allocation7 + $0x1e8] sm:$0xff]
    %v207 = vld [vmem:[#allocation7 + $0x1f0] sm:$0xff]
    %v208 = vld [vmem:[#allocation7 + $0x1f8] sm:$0xff]
    %v209 = vld [vmem:[#allocation7 + $0x200] sm:$0xff]
    %v210 = vld [vmem:[#allocation7 + $0x208] sm:$0xff]
    %v211 = vld [vmem:[#allocation7 + $0x210] sm:$0xff]
    %v212 = vld [vmem:[#allocation7 + $0x218] sm:$0xff]
    %v213 = vld [vmem:[#allocation7 + $0x220] sm:$0xff]
    %v214 = vld [vmem:[#allocation7 + $0x228] sm:$0xff]
    %v215 = vld [vmem:[#allocation7 + $0x230] sm:$0xff]
    %v216 = vld [vmem:[#allocation7 + $0x238] sm:$0xff]
    %v217 = vld [vmem:[#allocation7 + $0x240] sm:$0xff]
    %v218 = vld [vmem:[#allocation7 + $0x248] sm:$0xff]
    %v219 = vld [vmem:[#allocation7 + $0x250] sm:$0xff]
    %v220 = vld [vmem:[#allocation7 + $0x258] sm:$0xff]
    %v221 = vld [vmem:[#allocation7 + $0x260] sm:$0xff]
    %v222 = vld [vmem:[#allocation7 + $0x268] sm:$0xff]
    %v223 = vld [vmem:[#allocation7 + $0x270] sm:$0xff]
    %v224 = vld [vmem:[#allocation7 + $0x278] sm:$0xff]
    %v225 = vld [vmem:[#allocation7 + $0x280] sm:$0xff]
    %v226 = vld [vmem:[#allocation7 + $0x288] sm:$0xff]
    %v227 = vld [vmem:[#allocation7 + $0x290] sm:$0xff]
    %v228 = vld [vmem:[#allocation7 + $0x298] sm:$0xff]
    %v229 = vld [vmem:[#allocation7 + $0x2a0] sm:$0xff]
    %v230 = vld [vmem:[#allocation7 + $0x2a8] sm:$0xff]
    %v231 = vld [vmem:[#allocation7 + $0x2b0] sm:$0xff]
    %v232 = vld [vmem:[#allocation7 + $0x2b8] sm:$0xff]
    %v233 = vld [vmem:[#allocation7 + $0x2c0] sm:$0xff]
    %v234 = vld [vmem:[#allocation7 + $0x2c8] sm:$0xff]
    %v235 = vld [vmem:[#allocation7 + $0x2d0] sm:$0xff]
    %v236 = vld [vmem:[#allocation7 + $0x2d8] sm:$0xff]
    %v237 = vld [vmem:[#allocation7 + $0x2e0] sm:$0xff]
    %v238 = vld [vmem:[#allocation7 + $0x2e8] sm:$0xff]
    %v239 = vld [vmem:[#allocation7 + $0x2f0] sm:$0xff]
    %v240 = vld [vmem:[#allocation7 + $0x2f8] sm:$0xff]
    %v241 = vld [vmem:[#allocation7 + $0x300] sm:$0xff]
    %v242 = vld [vmem:[#allocation7 + $0x308] sm:$0xff]
    %v243 = vld [vmem:[#allocation7 + $0x310] sm:$0xff]
    %v244 = vld [vmem:[#allocation7 + $0x318] sm:$0xff]
    %v245 = vld [vmem:[#allocation7 + $0x320] sm:$0xff]
    %v246 = vld [vmem:[#allocation7 + $0x328] sm:$0xff]
    %v247 = vld [vmem:[#allocation7 + $0x330] sm:$0xff]
    %v248 = vld [vmem:[#allocation7 + $0x338] sm:$0xff]
    %v249 = vld [vmem:[#allocation7 + $0x340] sm:$0xff]
    %v250 = vld [vmem:[#allocation7 + $0x348] sm:$0xff]
    %v251 = vld [vmem:[#allocation7 + $0x350] sm:$0xff]
    %v252 = vld [vmem:[#allocation7 + $0x358] sm:$0xff]
    %v253 = vld [vmem:[#allocation7 + $0x360] sm:$0xff]
    %v254 = vld [vmem:[#allocation7 + $0x368] sm:$0xff]
    %v255 = vld [vmem:[#allocation7 + $0x370] sm:$0xff]
    %v256 = vld [vmem:[#allocation7 + $0x378] sm:$0xff]
    %v257 = vld [vmem:[#allocation7 + $0x380] sm:$0xff]
    %v258 = vld [vmem:[#allocation7 + $0x388] sm:$0xff]
    %v259 = vld [vmem:[#allocation7 + $0x390] sm:$0xff]
    %v260 = vld [vmem:[#allocation7 + $0x398] sm:$0xff]
    %v261 = vld [vmem:[#allocation7 + $0x3a0] sm:$0xff]
    %v262 = vld [vmem:[#allocation7 + $0x3a8] sm:$0xff]
    %v263 = vld [vmem:[#allocation7 + $0x3b0] sm:$0xff]
    %v264 = vld [vmem:[#allocation7 + $0x3b8] sm:$0xff]
    %v265 = vld [vmem:[#allocation7 + $0x3c0] sm:$0xff]
    %v266 = vld [vmem:[#allocation7 + $0x3c8] sm:$0xff]
    %v267 = vld [vmem:[#allocation7 + $0x3d0] sm:$0xff]
    %v268 = vld [vmem:[#allocation7 + $0x3d8] sm:$0xff]
    %v269 = vld [vmem:[#allocation7 + $0x3e0] sm:$0xff]
    %v270 = vld [vmem:[#allocation7 + $0x3e8] sm:$0xff]
    %v271 = vld [vmem:[#allocation7 + $0x3f0] sm:$0xff]
    %v272 = vld [vmem:[#allocation7 + $0x3f8] sm:$0xff]
    %v273 = vld [vmem:[#allocation7 + $0x400] sm:$0xff]
    %v274 = vld [vmem:[#allocation7 + $0x408] sm:$0xff]
    %v275 = vld [vmem:[#allocation7 + $0x410] sm:$0xff]
    %v276 = vld [vmem:[#allocation7 + $0x418] sm:$0xff]
    %v277 = vld [vmem:[#allocation7 + $0x420] sm:$0xff]
    %v278 = vld [vmem:[#allocation7 + $0x428] sm:$0xff]
    %v279 = vld [vmem:[#allocation7 + $0x430] sm:$0xff]
    %v280 = vld [vmem:[#allocation7 + $0x438] sm:$0xff]
    %v281 = vld [vmem:[#allocation7 + $0x440] sm:$0xff]
    %v282 = vld [vmem:[#allocation7 + $0x448] sm:$0xff]
    %v283 = vld [vmem:[#allocation7 + $0x450] sm:$0xff]
    %v284 = vld [vmem:[#allocation7 + $0x458] sm:$0xff]
    %v285 = vld [vmem:[#allocation7 + $0x460] sm:$0xff]
    %v286 = vld [vmem:[#allocation7 + $0x468] sm:$0xff]
    %v287 = vld [vmem:[#allocation7 + $0x470] sm:$0xff]
    %v288 = vld [vmem:[#allocation7 + $0x478] sm:$0xff]
    %v289 = vld [vmem:[#allocation7 + $0x480] sm:$0xff]
    %v290 = vld [vmem:[#allocation7 + $0x488] sm:$0xff]
    %v291 = vld [vmem:[#allocation7 + $0x490] sm:$0xff]
    %v292 = vld [vmem:[#allocation7 + $0x498] sm:$0xff]
    %v293 = vld [vmem:[#allocation7 + $0x4a0] sm:$0xff]
    %v294 = vld [vmem:[#allocation7 + $0x4a8] sm:$0xff]
    %v295 = vld [vmem:[#allocation7 + $0x4b0] sm:$0xff]
    %v296 = vld [vmem:[#allocation7 + $0x4b8] sm:$0xff]
    %v297 = vld [vmem:[#allocation7 + $0x4c0] sm:$0xff]
    %v298 = vld [vmem:[#allocation7 + $0x4c8] sm:$0xff]
    %v299 = vld [vmem:[#allocation7 + $0x4d0] sm:$0xff]
    %v300 = vld [vmem:[#allocation7 + $0x4d8] sm:$0xff]
    %v301 = vld [vmem:[#allocation7 + $0x4e0] sm:$0xff]
    %v302 = vld [vmem:[#allocation7 + $0x4e8] sm:$0xff]
    %v303 = vld [vmem:[#allocation7 + $0x4f0] sm:$0xff]
    %v304 = vld [vmem:[#allocation7 + $0x4f8] sm:$0xff]
    %v305 = vld [vmem:[#allocation7 + $0x500] sm:$0xff]
    %v306 = vld [vmem:[#allocation7 + $0x508] sm:$0xff]
    %v307 = vld [vmem:[#allocation7 + $0x510] sm:$0xff]
    %v308 = vld [vmem:[#allocation7 + $0x518] sm:$0xff]
    %v309 = vld [vmem:[#allocation7 + $0x520] sm:$0xff]
    %v310 = vld [vmem:[#allocation7 + $0x528] sm:$0xff]
    %v311 = vld [vmem:[#allocation7 + $0x530] sm:$0xff]
    %v312 = vld [vmem:[#allocation7 + $0x538] sm:$0xff]
    %v313 = vld [vmem:[#allocation7 + $0x540] sm:$0xff]
    %v314 = vld [vmem:[#allocation7 + $0x548] sm:$0xff]
    %v315 = vld [vmem:[#allocation7 + $0x550] sm:$0xff]
    %v316 = vld [vmem:[#allocation7 + $0x558] sm:$0xff]
    %v317 = vld [vmem:[#allocation7 + $0x560] sm:$0xff]
    %v318 = vld [vmem:[#allocation7 + $0x568] sm:$0xff]
    %v319 = vld [vmem:[#allocation7 + $0x570] sm:$0xff]
    %v320 = vld [vmem:[#allocation7 + $0x578] sm:$0xff]
    %v321 = vld [vmem:[#allocation7 + $0x580] sm:$0xff]
    %v322 = vld [vmem:[#allocation7 + $0x588] sm:$0xff]
    %v323 = vld [vmem:[#allocation7 + $0x590] sm:$0xff]
    %v324 = vld [vmem:[#allocation7 + $0x598] sm:$0xff]
    %v325 = vld [vmem:[#allocation7 + $0x5a0] sm:$0xff]
    %v326 = vld [vmem:[#allocation7 + $0x5a8] sm:$0xff]
    %v327 = vld [vmem:[#allocation7 + $0x5b0] sm:$0xff]
    %v328 = vld [vmem:[#allocation7 + $0x5b8] sm:$0xff]
    %v329 = vld [vmem:[#allocation7 + $0x5c0] sm:$0xff]
    %v330 = vld [vmem:[#allocation7 + $0x5c8] sm:$0xff]
    %v331 = vld [vmem:[#allocation7 + $0x5d0] sm:$0xff]
    %v332 = vld [vmem:[#allocation7 + $0x5d8] sm:$0xff]
    %v333 = vld [vmem:[#allocation7 + $0x5e0] sm:$0xff]
    %v334 = vld [vmem:[#allocation7 + $0x5e8] sm:$0xff]
    %v335 = vld [vmem:[#allocation7 + $0x5f0] sm:$0xff]
    %v336 = vld [vmem:[#allocation7 + $0x5f8] sm:$0xff]
    %v337 = vld [vmem:[#allocation7 + $0x600] sm:$0xff]
    %v338 = vld [vmem:[#allocation7 + $0x608] sm:$0xff]
    %v339 = vld [vmem:[#allocation7 + $0x610] sm:$0xff]
    %v340 = vld [vmem:[#allocation7 + $0x618] sm:$0xff]
    %v341 = vld [vmem:[#allocation7 + $0x620] sm:$0xff]
    %v342 = vld [vmem:[#allocation7 + $0x628] sm:$0xff]
    %v343 = vld [vmem:[#allocation7 + $0x630] sm:$0xff]
    %v344 = vld [vmem:[#allocation7 + $0x638] sm:$0xff]
    %v345 = vld [vmem:[#allocation7 + $0x640] sm:$0xff]
    %v346 = vld [vmem:[#allocation7 + $0x648] sm:$0xff]
    %v347 = vld [vmem:[#allocation7 + $0x650] sm:$0xff]
    %v348 = vld [vmem:[#allocation7 + $0x658] sm:$0xff]
    %v349 = vld [vmem:[#allocation7 + $0x660] sm:$0xff]
    %v350 = vld [vmem:[#allocation7 + $0x668] sm:$0xff]
    %v351 = vld [vmem:[#allocation7 + $0x670] sm:$0xff]
    %v352 = vld [vmem:[#allocation7 + $0x678] sm:$0xff]
    %v353 = vld [vmem:[#allocation7 + $0x680] sm:$0xff]
    %v354 = vld [vmem:[#allocation7 + $0x688] sm:$0xff]
    %v355 = vld [vmem:[#allocation7 + $0x690] sm:$0xff]
    %v356 = vld [vmem:[#allocation7 + $0x698] sm:$0xff]
    %v357 = vld [vmem:[#allocation7 + $0x6a0] sm:$0xff]
    %v358 = vld [vmem:[#allocation7 + $0x6a8] sm:$0xff]
    %v359 = vld [vmem:[#allocation7 + $0x6b0] sm:$0xff]
    %v360 = vld [vmem:[#allocation7 + $0x6b8] sm:$0xff]
    %v361 = vld [vmem:[#allocation7 + $0x6c0] sm:$0xff]
    %v362 = vld [vmem:[#allocation7 + $0x6c8] sm:$0xff]
    %v363 = vld [vmem:[#allocation7 + $0x6d0] sm:$0xff]
    %v364 = vld [vmem:[#allocation7 + $0x6d8] sm:$0xff]
    %v365 = vld [vmem:[#allocation7 + $0x6e0] sm:$0xff]
    %v366 = vld [vmem:[#allocation7 + $0x6e8] sm:$0xff]
    %v367 = vld [vmem:[#allocation7 + $0x6f0] sm:$0xf]
    %v368 = vld [vmem:[#allocation7 + $0x6f8] sm:$0xf]
    %v369 = vld [vmem:[#allocation7 + $0x700] sm:$0xf]
    %v370 = vld [vmem:[#allocation7 + $0x708] sm:$0xf]
    %v371 = vld [vmem:[#allocation7 + $0x710] sm:$0xf]
    %v372 = vld [vmem:[#allocation7 + $0x718] sm:$0xf]
    %v373 = vld [vmem:[%s2] sm:$0x3f]
    %v375 = vperm.slane %v373, 0
    %v376 = vperm.slane %v373, 1
    %v377 = vperm.slane %v373, 2
    %v378 = vperm.slane %v373, 3
    %v379 = vperm.slane %v373, 4
    %v380 = vperm.slane %v373, 5
    %vm387 = vcmask 359424
    %v389 = vsel %vm387, %v135, 0
    %v392 = vsel %vm387, %v138, 0
    %v395 = vsel %vm387, %v141, 0
    %v398 = vsel %vm387, %v144, 0
    %vm400 = vcmask 1043456
    %v402 = vsel %vm400, %v367, 0
    %v405 = vsel %vm400, %v368, 0
    %v408 = vsel %vm400, %v369, 0
    %v411 = vsel %vm400, %v370, 0
    %v414 = vsel %vm400, %v371, 0
    %v417 = vsel %vm400, %v372, 0
    %419 = vmatpush.msra.mxu0 %v235
    %420 = vmatpush.msra.mxu0 %v229
    %421 = vmatpush.msra.mxu0 %v223
    %422 = vmatpush.msra.mxu0 %v217
    %423 = vmatpush.msra.mxu0 %v211
    %424 = vmatpush.msra.mxu0 %v205
    %425 = vmatpush.msra.mxu0 %v199
    %426 = vmatpush.msra.mxu0 %v193
    %427 = vmatpush.msra.mxu0 %v187
    %428 = vmatpush.msra.mxu0 %v181
    %429 = vmatpush.msra.mxu0 %v175
    %430 = vmatpush.msra.mxu0 %v169
    %431 = vmatpush.msra.mxu0 %v163
    %432 = vmatpush.msra.mxu0 %v157
    %433 = vmatpush.msra.mxu0 %v151
    %434 = vmatpush.msra.mxu0 %v145
    %435 = vmatmul.f32.gmra.mxu0 %v133
    %v436 = vpop.f32.mrf.mxu0
    %v437 = vadd.f32 %v375, %v436
    %438 = vmatmul.f32.gmra.mxu0 %v136
    %v439 = vpop.f32.mrf.mxu0
    %v440 = vadd.f32 %v375, %v439
    %441 = vmatmul.f32.gmra.mxu0 %v139
    %v442 = vpop.f32.mrf.mxu0
    %v443 = vadd.f32 %v375, %v442
    %444 = vmatmul.f32.gmra.mxu0 %v142
    %v445 = vpop.f32.mrf.mxu0
    %v446 = vadd.f32 %v375, %v445
    %447 = vdwg.mxu0
    %448 = vmatpush.msra.mxu0 %v331
    %449 = vmatpush.msra.mxu0 %v325
    %450 = vmatpush.msra.mxu0 %v319
    %451 = vmatpush.msra.mxu0 %v313
    %452 = vmatpush.msra.mxu0 %v307
    %453 = vmatpush.msra.mxu0 %v301
    %454 = vmatpush.msra.mxu0 %v295
    %455 = vmatpush.msra.mxu0 %v289
    %456 = vmatpush.msra.mxu0 %v283
    %457 = vmatpush.msra.mxu0 %v277
    %458 = vmatpush.msra.mxu0 %v271
    %459 = vmatpush.msra.mxu0 %v265
    %460 = vmatpush.msra.mxu0 %v259
    %461 = vmatpush.msra.mxu0 %v253
    %462 = vmatpush.msra.mxu0 %v247
    %463 = vmatpush.msra.mxu0 %v241
    %464 = vmatmul.f32.gmra.mxu0 %v134
    %v465 = vpop.f32.mrf.mxu0
    %v466 = vadd.f32 %v437, %v465
    %467 = vmatmul.f32.gmra.mxu0 %v137
    %v468 = vpop.f32.mrf.mxu0
    %v469 = vadd.f32 %v440, %v468
    %470 = vmatmul.f32.gmra.mxu0 %v140
    %v471 = vpop.f32.mrf.mxu0
    %v472 = vadd.f32 %v443, %v471
    %473 = vmatmul.f32.gmra.mxu0 %v143
    %v474 = vpop.f32.mrf.mxu0
    %v475 = vadd.f32 %v446, %v474
    %476 = vdwg.mxu0
    %477 = vmatpush.msra.mxu0 0.0
    %478 = vmatpush.msra.mxu0 0.0
    %479 = vmatpush.msra.mxu0 0.0
    %480 = vmatpush.msra.mxu0 0.0
    %481 = vmatpush.msra.mxu0 0.0
    %482 = vmatpush.msra.mxu0 0.0
    %483 = vmatpush.msra.mxu0 0.0
    %484 = vmatpush.msra.mxu0 0.0
    %485 = vmatpush.msra.mxu0 0.0
    %486 = vmatpush.msra.mxu0 0.0
    %487 = vmatpush.msra.mxu0 %v402
    %488 = vmatpush.msra.mxu0 %v361
    %489 = vmatpush.msra.mxu0 %v355
    %490 = vmatpush.msra.mxu0 %v349
    %491 = vmatpush.msra.mxu0 %v343
    %492 = vmatpush.msra.mxu0 %v337
    %493 = vmatmul.f32.gmra.mxu0 %v389
    %v494 = vpop.f32.mrf.mxu0
    %v495 = vadd.f32 %v466, %v494
    %496 = vmatmul.f32.gmra.mxu0 %v392
    %v497 = vpop.f32.mrf.mxu0
    %v498 = vadd.f32 %v469, %v497
    %499 = vmatmul.f32.gmra.mxu0 %v395
    %v500 = vpop.f32.mrf.mxu0
    %v501 = vadd.f32 %v472, %v500
    %502 = vmatmul.f32.gmra.mxu0 %v398
    %v503 = vpop.f32.mrf.mxu0
    %v504 = vadd.f32 %v475, %v503
    %505 = vdwg.mxu0
    %506 = vmatpush.msra.mxu0 %v236
    %507 = vmatpush.msra.mxu0 %v230
    %508 = vmatpush.msra.mxu0 %v224
    %509 = vmatpush.msra.mxu0 %v218
    %510 = vmatpush.msra.mxu0 %v212
    %511 = vmatpush.msra.mxu0 %v206
    %512 = vmatpush.msra.mxu0 %v200
    %513 = vmatpush.msra.mxu0 %v194
    %514 = vmatpush.msra.mxu0 %v188
    %515 = vmatpush.msra.mxu0 %v182
    %516 = vmatpush.msra.mxu0 %v176
    %517 = vmatpush.msra.mxu0 %v170
    %518 = vmatpush.msra.mxu0 %v164
    %519 = vmatpush.msra.mxu0 %v158
    %520 = vmatpush.msra.mxu0 %v152
    %521 = vmatpush.msra.mxu0 %v146
    %522 = vmatmul.f32.gmra.mxu0 %v133
    %v523 = vpop.f32.mrf.mxu0
    %v524 = vadd.f32 %v376, %v523
    %525 = vmatmul.f32.gmra.mxu0 %v136
    %v526 = vpop.f32.mrf.mxu0
    %v527 = vadd.f32 %v376, %v526
    %528 = vmatmul.f32.gmra.mxu0 %v139
    %v529 = vpop.f32.mrf.mxu0
    %v530 = vadd.f32 %v376, %v529
    %531 = vmatmul.f32.gmra.mxu0 %v142
    %v532 = vpop.f32.mrf.mxu0
    %v533 = vadd.f32 %v376, %v532
    %534 = vdwg.mxu0
    %535 = vmatpush.msra.mxu0 %v332
    %536 = vmatpush.msra.mxu0 %v326
    %537 = vmatpush.msra.mxu0 %v320
    %538 = vmatpush.msra.mxu0 %v314
    %539 = vmatpush.msra.mxu0 %v308
    %540 = vmatpush.msra.mxu0 %v302
    %541 = vmatpush.msra.mxu0 %v296
    %542 = vmatpush.msra.mxu0 %v290
    %543 = vmatpush.msra.mxu0 %v284
    %544 = vmatpush.msra.mxu0 %v278
    %545 = vmatpush.msra.mxu0 %v272
    %546 = vmatpush.msra.mxu0 %v266
    %547 = vmatpush.msra.mxu0 %v260
    %548 = vmatpush.msra.mxu0 %v254
    %549 = vmatpush.msra.mxu0 %v248
    %550 = vmatpush.msra.mxu0 %v242
    %551 = vmatmul.f32.gmra.mxu0 %v134
    %v552 = vpop.f32.mrf.mxu0
    %v553 = vadd.f32 %v524, %v552
    %554 = vmatmul.f32.gmra.mxu0 %v137
    %v555 = vpop.f32.mrf.mxu0
    %v556 = vadd.f32 %v527, %v555
    %557 = vmatmul.f32.gmra.mxu0 %v140
    %v558 = vpop.f32.mrf.mxu0
    %v559 = vadd.f32 %v530, %v558
    %560 = vmatmul.f32.gmra.mxu0 %v143
    %v561 = vpop.f32.mrf.mxu0
    %v562 = vadd.f32 %v533, %v561
    %563 = vdwg.mxu0
    %564 = vmatpush.msra.mxu0 0.0
    %565 = vmatpush.msra.mxu0 0.0
    %566 = vmatpush.msra.mxu0 0.0
    %567 = vmatpush.msra.mxu0 0.0
    %568 = vmatpush.msra.mxu0 0.0
    %569 = vmatpush.msra.mxu0 0.0
    %570 = vmatpush.msra.mxu0 0.0
    %571 = vmatpush.msra.mxu0 0.0
    %572 = vmatpush.msra.mxu0 0.0
    %573 = vmatpush.msra.mxu0 0.0
    %574 = vmatpush.msra.mxu0 %v405
    %575 = vmatpush.msra.mxu0 %v362
    %576 = vmatpush.msra.mxu0 %v356
    %577 = vmatpush.msra.mxu0 %v350
    %578 = vmatpush.msra.mxu0 %v344
    %579 = vmatpush.msra.mxu0 %v338
    %580 = vmatmul.f32.gmra.mxu0 %v389
    %v581 = vpop.f32.mrf.mxu0
    %v582 = vadd.f32 %v553, %v581
    %583 = vmatmul.f32.gmra.mxu0 %v392
    %v584 = vpop.f32.mrf.mxu0
    %v585 = vadd.f32 %v556, %v584
    %586 = vmatmul.f32.gmra.mxu0 %v395
    %v587 = vpop.f32.mrf.mxu0
    %v588 = vadd.f32 %v559, %v587
    %589 = vmatmul.f32.gmra.mxu0 %v398
    %v590 = vpop.f32.mrf.mxu0
    %v591 = vadd.f32 %v562, %v590
    %592 = vdwg.mxu0
    %593 = vmatpush.msra.mxu0 %v237
    %594 = vmatpush.msra.mxu0 %v231
    %595 = vmatpush.msra.mxu0 %v225
    %596 = vmatpush.msra.mxu0 %v219
    %597 = vmatpush.msra.mxu0 %v213
    %598 = vmatpush.msra.mxu0 %v207
    %599 = vmatpush.msra.mxu0 %v201
    %600 = vmatpush.msra.mxu0 %v195
    %601 = vmatpush.msra.mxu0 %v189
    %602 = vmatpush.msra.mxu0 %v183
    %603 = vmatpush.msra.mxu0 %v177
    %604 = vmatpush.msra.mxu0 %v171
    %605 = vmatpush.msra.mxu0 %v165
    %606 = vmatpush.msra.mxu0 %v159
    %607 = vmatpush.msra.mxu0 %v153
    %608 = vmatpush.msra.mxu0 %v147
    %609 = vmatmul.f32.gmra.mxu0 %v133
    %v610 = vpop.f32.mrf.mxu0
    %v611 = vadd.f32 %v377, %v610
    %612 = vmatmul.f32.gmra.mxu0 %v136
    %v613 = vpop.f32.mrf.mxu0
    %v614 = vadd.f32 %v377, %v613
    %615 = vmatmul.f32.gmra.mxu0 %v139
    %v616 = vpop.f32.mrf.mxu0
    %v617 = vadd.f32 %v377, %v616
    %618 = vmatmul.f32.gmra.mxu0 %v142
    %v619 = vpop.f32.mrf.mxu0
    %v620 = vadd.f32 %v377, %v619
    %621 = vdwg.mxu0
    %622 = vmatpush.msra.mxu0 %v333
    %623 = vmatpush.msra.mxu0 %v327
    %624 = vmatpush.msra.mxu0 %v321
    %625 = vmatpush.msra.mxu0 %v315
    %626 = vmatpush.msra.mxu0 %v309
    %627 = vmatpush.msra.mxu0 %v303
    %628 = vmatpush.msra.mxu0 %v297
    %629 = vmatpush.msra.mxu0 %v291
    %630 = vmatpush.msra.mxu0 %v285
    %631 = vmatpush.msra.mxu0 %v279
    %632 = vmatpush.msra.mxu0 %v273
    %633 = vmatpush.msra.mxu0 %v267
    %634 = vmatpush.msra.mxu0 %v261
    %635 = vmatpush.msra.mxu0 %v255
    %636 = vmatpush.msra.mxu0 %v249
    %637 = vmatpush.msra.mxu0 %v243
    %638 = vmatmul.f32.gmra.mxu0 %v134
    %v639 = vpop.f32.mrf.mxu0
    %v640 = vadd.f32 %v611, %v639
    %641 = vmatmul.f32.gmra.mxu0 %v137
    %v642 = vpop.f32.mrf.mxu0
    %v643 = vadd.f32 %v614, %v642
    %644 = vmatmul.f32.gmra.mxu0 %v140
    %v645 = vpop.f32.mrf.mxu0
    %v646 = vadd.f32 %v617, %v645
    %647 = vmatmul.f32.gmra.mxu0 %v143
    %v648 = vpop.f32.mrf.mxu0
    %v649 = vadd.f32 %v620, %v648
    %650 = vdwg.mxu0
    %651 = vmatpush.msra.mxu0 0.0
    %652 = vmatpush.msra.mxu0 0.0
    %653 = vmatpush.msra.mxu0 0.0
    %654 = vmatpush.msra.mxu0 0.0
    %655 = vmatpush.msra.mxu0 0.0
    %656 = vmatpush.msra.mxu0 0.0
    %657 = vmatpush.msra.mxu0 0.0
    %658 = vmatpush.msra.mxu0 0.0
    %659 = vmatpush.msra.mxu0 0.0
    %660 = vmatpush.msra.mxu0 0.0
    %661 = vmatpush.msra.mxu0 %v408
    %662 = vmatpush.msra.mxu0 %v363
    %663 = vmatpush.msra.mxu0 %v357
    %664 = vmatpush.msra.mxu0 %v351
    %665 = vmatpush.msra.mxu0 %v345
    %666 = vmatpush.msra.mxu0 %v339
    %667 = vmatmul.f32.gmra.mxu0 %v389
    %v668 = vpop.f32.mrf.mxu0
    %v669 = vadd.f32 %v640, %v668
    %670 = vmatmul.f32.gmra.mxu0 %v392
    %v671 = vpop.f32.mrf.mxu0
    %v672 = vadd.f32 %v643, %v671
    %673 = vmatmul.f32.gmra.mxu0 %v395
    %v674 = vpop.f32.mrf.mxu0
    %v675 = vadd.f32 %v646, %v674
    %676 = vmatmul.f32.gmra.mxu0 %v398
    %v677 = vpop.f32.mrf.mxu0
    %v678 = vadd.f32 %v649, %v677
    %679 = vdwg.mxu0
    %680 = vmatpush.msra.mxu0 %v238
    %681 = vmatpush.msra.mxu0 %v232
    %682 = vmatpush.msra.mxu0 %v226
    %683 = vmatpush.msra.mxu0 %v220
    %684 = vmatpush.msra.mxu0 %v214
    %685 = vmatpush.msra.mxu0 %v208
    %686 = vmatpush.msra.mxu0 %v202
    %687 = vmatpush.msra.mxu0 %v196
    %688 = vmatpush.msra.mxu0 %v190
    %689 = vmatpush.msra.mxu0 %v184
    %690 = vmatpush.msra.mxu0 %v178
    %691 = vmatpush.msra.mxu0 %v172
    %692 = vmatpush.msra.mxu0 %v166
    %693 = vmatpush.msra.mxu0 %v160
    %694 = vmatpush.msra.mxu0 %v154
    %695 = vmatpush.msra.mxu0 %v148
    %696 = vmatmul.f32.gmra.mxu0 %v133
    %v697 = vpop.f32.mrf.mxu0
    %v698 = vadd.f32 %v378, %v697
    %699 = vmatmul.f32.gmra.mxu0 %v136
    %v700 = vpop.f32.mrf.mxu0
    %v701 = vadd.f32 %v378, %v700
    %702 = vmatmul.f32.gmra.mxu0 %v139
    %v703 = vpop.f32.mrf.mxu0
    %v704 = vadd.f32 %v378, %v703
    %705 = vmatmul.f32.gmra.mxu0 %v142
    %v706 = vpop.f32.mrf.mxu0
    %v707 = vadd.f32 %v378, %v706
    %708 = vdwg.mxu0
    %709 = vmatpush.msra.mxu0 %v334
    %710 = vmatpush.msra.mxu0 %v328
    %711 = vmatpush.msra.mxu0 %v322
    %712 = vmatpush.msra.mxu0 %v316
    %713 = vmatpush.msra.mxu0 %v310
    %714 = vmatpush.msra.mxu0 %v304
    %715 = vmatpush.msra.mxu0 %v298
    %716 = vmatpush.msra.mxu0 %v292
    %717 = vmatpush.msra.mxu0 %v286
    %718 = vmatpush.msra.mxu0 %v280
    %719 = vmatpush.msra.mxu0 %v274
    %720 = vmatpush.msra.mxu0 %v268
    %721 = vmatpush.msra.mxu0 %v262
    %722 = vmatpush.msra.mxu0 %v256
    %723 = vmatpush.msra.mxu0 %v250
    %724 = vmatpush.msra.mxu0 %v244
    %725 = vmatmul.f32.gmra.mxu0 %v134
    %v726 = vpop.f32.mrf.mxu0
    %v727 = vadd.f32 %v698, %v726
    %728 = vmatmul.f32.gmra.mxu0 %v137
    %v729 = vpop.f32.mrf.mxu0
    %v730 = vadd.f32 %v701, %v729
    %731 = vmatmul.f32.gmra.mxu0 %v140
    %v732 = vpop.f32.mrf.mxu0
    %v733 = vadd.f32 %v704, %v732
    %734 = vmatmul.f32.gmra.mxu0 %v143
    %v735 = vpop.f32.mrf.mxu0
    %v736 = vadd.f32 %v707, %v735
    %737 = vdwg.mxu0
    %738 = vmatpush.msra.mxu0 0.0
    %739 = vmatpush.msra.mxu0 0.0
    %740 = vmatpush.msra.mxu0 0.0
    %741 = vmatpush.msra.mxu0 0.0
    %742 = vmatpush.msra.mxu0 0.0
    %743 = vmatpush.msra.mxu0 0.0
    %744 = vmatpush.msra.mxu0 0.0
    %745 = vmatpush.msra.mxu0 0.0
    %746 = vmatpush.msra.mxu0 0.0
    %747 = vmatpush.msra.mxu0 0.0
    %748 = vmatpush.msra.mxu0 %v411
    %749 = vmatpush.msra.mxu0 %v364
    %750 = vmatpush.msra.mxu0 %v358
    %751 = vmatpush.msra.mxu0 %v352
    %752 = vmatpush.msra.mxu0 %v346
    %753 = vmatpush.msra.mxu0 %v340
    %754 = vmatmul.f32.gmra.mxu0 %v389
    %v755 = vpop.f32.mrf.mxu0
    %v756 = vadd.f32 %v727, %v755
    %757 = vmatmul.f32.gmra.mxu0 %v392
    %v758 = vpop.f32.mrf.mxu0
    %v759 = vadd.f32 %v730, %v758
    %760 = vmatmul.f32.gmra.mxu0 %v395
    %v761 = vpop.f32.mrf.mxu0
    %v762 = vadd.f32 %v733, %v761
    %763 = vmatmul.f32.gmra.mxu0 %v398
    %v764 = vpop.f32.mrf.mxu0
    %v765 = vadd.f32 %v736, %v764
    %766 = vdwg.mxu0
    %767 = vmatpush.msra.mxu0 %v239
    %768 = vmatpush.msra.mxu0 %v233
    %769 = vmatpush.msra.mxu0 %v227
    %770 = vmatpush.msra.mxu0 %v221
    %771 = vmatpush.msra.mxu0 %v215
    %772 = vmatpush.msra.mxu0 %v209
    %773 = vmatpush.msra.mxu0 %v203
    %774 = vmatpush.msra.mxu0 %v197
    %775 = vmatpush.msra.mxu0 %v191
    %776 = vmatpush.msra.mxu0 %v185
    %777 = vmatpush.msra.mxu0 %v179
    %778 = vmatpush.msra.mxu0 %v173
    %779 = vmatpush.msra.mxu0 %v167
    %780 = vmatpush.msra.mxu0 %v161
    %781 = vmatpush.msra.mxu0 %v155
    %782 = vmatpush.msra.mxu0 %v149
    %783 = vmatmul.f32.gmra.mxu0 %v133
    %v784 = vpop.f32.mrf.mxu0
    %v785 = vadd.f32 %v379, %v784
    %786 = vmatmul.f32.gmra.mxu0 %v136
    %v787 = vpop.f32.mrf.mxu0
    %v788 = vadd.f32 %v379, %v787
    %789 = vmatmul.f32.gmra.mxu0 %v139
    %v790 = vpop.f32.mrf.mxu0
    %v791 = vadd.f32 %v379, %v790
    %792 = vmatmul.f32.gmra.mxu0 %v142
    %v793 = vpop.f32.mrf.mxu0
    %v794 = vadd.f32 %v379, %v793
    %795 = vdwg.mxu0
    %796 = vmatpush.msra.mxu0 %v335
    %797 = vmatpush.msra.mxu0 %v329
    %798 = vmatpush.msra.mxu0 %v323
    %799 = vmatpush.msra.mxu0 %v317
    %800 = vmatpush.msra.mxu0 %v311
    %801 = vmatpush.msra.mxu0 %v305
    %802 = vmatpush.msra.mxu0 %v299
    %803 = vmatpush.msra.mxu0 %v293
    %804 = vmatpush.msra.mxu0 %v287
    %805 = vmatpush.msra.mxu0 %v281
    %806 = vmatpush.msra.mxu0 %v275
    %807 = vmatpush.msra.mxu0 %v269
    %808 = vmatpush.msra.mxu0 %v263
    %809 = vmatpush.msra.mxu0 %v257
    %810 = vmatpush.msra.mxu0 %v251
    %811 = vmatpush.msra.mxu0 %v245
    %812 = vmatmul.f32.gmra.mxu0 %v134
    %v813 = vpop.f32.mrf.mxu0
    %v814 = vadd.f32 %v785, %v813
    %815 = vmatmul.f32.gmra.mxu0 %v137
    %v816 = vpop.f32.mrf.mxu0
    %v817 = vadd.f32 %v788, %v816
    %818 = vmatmul.f32.gmra.mxu0 %v140
    %v819 = vpop.f32.mrf.mxu0
    %v820 = vadd.f32 %v791, %v819
    %821 = vmatmul.f32.gmra.mxu0 %v143
    %v822 = vpop.f32.mrf.mxu0
    %v823 = vadd.f32 %v794, %v822
    %824 = vdwg.mxu0
    %825 = vmatpush.msra.mxu0 0.0
    %826 = vmatpush.msra.mxu0 0.0
    %827 = vmatpush.msra.mxu0 0.0
    %828 = vmatpush.msra.mxu0 0.0
    %829 = vmatpush.msra.mxu0 0.0
    %830 = vmatpush.msra.mxu0 0.0
    %831 = vmatpush.msra.mxu0 0.0
    %832 = vmatpush.msra.mxu0 0.0
    %833 = vmatpush.msra.mxu0 0.0
    %834 = vmatpush.msra.mxu0 0.0
    %835 = vmatpush.msra.mxu0 %v414
    %836 = vmatpush.msra.mxu0 %v365
    %837 = vmatpush.msra.mxu0 %v359
    %838 = vmatpush.msra.mxu0 %v353
    %839 = vmatpush.msra.mxu0 %v347
    %840 = vmatpush.msra.mxu0 %v341
    %841 = vmatmul.f32.gmra.mxu0 %v389
    %v842 = vpop.f32.mrf.mxu0
    %v843 = vadd.f32 %v814, %v842
    %844 = vmatmul.f32.gmra.mxu0 %v392
    %v845 = vpop.f32.mrf.mxu0
    %v846 = vadd.f32 %v817, %v845
    %847 = vmatmul.f32.gmra.mxu0 %v395
    %v848 = vpop.f32.mrf.mxu0
    %v849 = vadd.f32 %v820, %v848
    %850 = vmatmul.f32.gmra.mxu0 %v398
    %v851 = vpop.f32.mrf.mxu0
    %v852 = vadd.f32 %v823, %v851
    %853 = vdwg.mxu0
    %854 = vmatpush.msra.mxu0 %v240
    %855 = vmatpush.msra.mxu0 %v234
    %856 = vmatpush.msra.mxu0 %v228
    %857 = vmatpush.msra.mxu0 %v222
    %858 = vmatpush.msra.mxu0 %v216
    %859 = vmatpush.msra.mxu0 %v210
    %860 = vmatpush.msra.mxu0 %v204
    %861 = vmatpush.msra.mxu0 %v198
    %862 = vmatpush.msra.mxu0 %v192
    %863 = vmatpush.msra.mxu0 %v186
    %864 = vmatpush.msra.mxu0 %v180
    %865 = vmatpush.msra.mxu0 %v174
    %866 = vmatpush.msra.mxu0 %v168
    %867 = vmatpush.msra.mxu0 %v162
    %868 = vmatpush.msra.mxu0 %v156
    %869 = vmatpush.msra.mxu0 %v150
    %870 = vmatmul.f32.gmra.mxu0 %v133
    %v871 = vpop.f32.mrf.mxu0
    %v872 = vadd.f32 %v380, %v871
    %873 = vmatmul.f32.gmra.mxu0 %v136
    %v874 = vpop.f32.mrf.mxu0
    %v875 = vadd.f32 %v380, %v874
    %876 = vmatmul.f32.gmra.mxu0 %v139
    %v877 = vpop.f32.mrf.mxu0
    %v878 = vadd.f32 %v380, %v877
    %879 = vmatmul.f32.gmra.mxu0 %v142
    %v880 = vpop.f32.mrf.mxu0
    %v881 = vadd.f32 %v380, %v880
    %882 = vdwg.mxu0
    %883 = vmatpush.msra.mxu0 %v336
    %884 = vmatpush.msra.mxu0 %v330
    %885 = vmatpush.msra.mxu0 %v324
    %886 = vmatpush.msra.mxu0 %v318
    %887 = vmatpush.msra.mxu0 %v312
    %888 = vmatpush.msra.mxu0 %v306
    %889 = vmatpush.msra.mxu0 %v300
    %890 = vmatpush.msra.mxu0 %v294
    %891 = vmatpush.msra.mxu0 %v288
    %892 = vmatpush.msra.mxu0 %v282
    %893 = vmatpush.msra.mxu0 %v276
    %894 = vmatpush.msra.mxu0 %v270
    %895 = vmatpush.msra.mxu0 %v264
    %896 = vmatpush.msra.mxu0 %v258
    %897 = vmatpush.msra.mxu0 %v252
    %898 = vmatpush.msra.mxu0 %v246
    %899 = vmatmul.f32.gmra.mxu0 %v134
    %v900 = vpop.f32.mrf.mxu0
    %v901 = vadd.f32 %v872, %v900
    %902 = vmatmul.f32.gmra.mxu0 %v137
    %v903 = vpop.f32.mrf.mxu0
    %v904 = vadd.f32 %v875, %v903
    %905 = vmatmul.f32.gmra.mxu0 %v140
    %v906 = vpop.f32.mrf.mxu0
    %v907 = vadd.f32 %v878, %v906
    %908 = vmatmul.f32.gmra.mxu0 %v143
    %v909 = vpop.f32.mrf.mxu0
    %v910 = vadd.f32 %v881, %v909
    %911 = vdwg.mxu0
    %912 = vmatpush.msra.mxu0 0.0
    %913 = vmatpush.msra.mxu0 0.0
    %914 = vmatpush.msra.mxu0 0.0
    %915 = vmatpush.msra.mxu0 0.0
    %916 = vmatpush.msra.mxu0 0.0
    %917 = vmatpush.msra.mxu0 0.0
    %918 = vmatpush.msra.mxu0 0.0
    %919 = vmatpush.msra.mxu0 0.0
    %920 = vmatpush.msra.mxu0 0.0
    %921 = vmatpush.msra.mxu0 0.0
    %922 = vmatpush.msra.mxu0 %v417
    %923 = vmatpush.msra.mxu0 %v366
    %924 = vmatpush.msra.mxu0 %v360
    %925 = vmatpush.msra.mxu0 %v354
    %926 = vmatpush.msra.mxu0 %v348
    %927 = vmatpush.msra.mxu0 %v342
    %928 = vmatmul.f32.gmra.mxu0 %v389
    %v929 = vpop.f32.mrf.mxu0
    %v930 = vadd.f32 %v901, %v929
    %931 = vmatmul.f32.gmra.mxu0 %v392
    %v932 = vpop.f32.mrf.mxu0
    %v933 = vadd.f32 %v904, %v932
    %934 = vmatmul.f32.gmra.mxu0 %v395
    %v935 = vpop.f32.mrf.mxu0
    %v936 = vadd.f32 %v907, %v935
    %937 = vmatmul.f32.gmra.mxu0 %v398
    %v938 = vpop.f32.mrf.mxu0
    %v939 = vadd.f32 %v910, %v938
    %940 = vdwg.mxu0
    %941 = vst [vmem:[#allocation4] sm:$0xff] %v495
    %942 = vst [vmem:[#allocation4 + $0x8] sm:$0xff] %v582
    %943 = vst [vmem:[#allocation4 + $0x10] sm:$0xff] %v669
    %944 = vst [vmem:[#allocation4 + $0x18] sm:$0xff] %v756
    %945 = vst [vmem:[#allocation4 + $0x20] sm:$0xff] %v843
    %946 = vst [vmem:[#allocation4 + $0x28] sm:$0xff] %v930
    %947 = vst [vmem:[#allocation4 + $0x30] sm:$0xff] %v498
    %948 = vst [vmem:[#allocation4 + $0x38] sm:$0xff] %v585
    %949 = vst [vmem:[#allocation4 + $0x40] sm:$0xff] %v672
    %950 = vst [vmem:[#allocation4 + $0x48] sm:$0xff] %v759
    %951 = vst [vmem:[#allocation4 + $0x50] sm:$0xff] %v846
    %952 = vst [vmem:[#allocation4 + $0x58] sm:$0xff] %v933
    %953 = vst [vmem:[#allocation4 + $0x60] sm:$0xff] %v501
    %954 = vst [vmem:[#allocation4 + $0x68] sm:$0xff] %v588
    %955 = vst [vmem:[#allocation4 + $0x70] sm:$0xff] %v675
    %956 = vst [vmem:[#allocation4 + $0x78] sm:$0xff] %v762
    %957 = vst [vmem:[#allocation4 + $0x80] sm:$0xff] %v849
    %958 = vst [vmem:[#allocation4 + $0x88] sm:$0xff] %v936
    %959 = vst [vmem:[#allocation4 + $0x90] sm:$0xff] %v504
    %960 = vst [vmem:[#allocation4 + $0x98] sm:$0xff] %v591
    %961 = vst [vmem:[#allocation4 + $0xa0] sm:$0xff] %v678
    %962 = vst [vmem:[#allocation4 + $0xa8] sm:$0xff] %v765
    %963 = vst [vmem:[#allocation4 + $0xb0] sm:$0xff] %v852
    %964 = vst [vmem:[#allocation4 + $0xb8] sm:$0xff] %v939
    %965 = vst [vmem:[#allocation2] sm:$0xff] 0.0
    %966 = vst [vmem:[#allocation3] sm:$0xff] 0.0
    %v967 = vld [vmem:[#allocation2] sm:$0xff]
    %v968 = vld [vmem:[#allocation3] sm:$0xff]
    %v969 = vld [vmem:[%s3] sm:$0xff]
    %v970 = vld [vmem:[%s3 + $0x8] sm:$0xff]
    %v971 = vld [vmem:[%s3 + $0x10] sm:$0xff]
    %v972 = vld [vmem:[%s3 + $0x18] sm:$0xff]
    %v973 = vld [vmem:[%s3 + $0x20] sm:$0xff]
    %v974 = vld [vmem:[%s3 + $0x28] sm:$0xff]
    %v975 = vld [vmem:[%s3 + $0x30] sm:$0xff]
    %v976 = vld [vmem:[%s3 + $0x38] sm:$0xff]
    %v977 = vld [vmem:[%s3 + $0x40] sm:$0xff]
    %v978 = vld [vmem:[%s3 + $0x48] sm:$0xff]
    %v979 = vld [vmem:[%s3 + $0x50] sm:$0xff]
    %v980 = vld [vmem:[%s3 + $0x58] sm:$0xff]
    %v981 = vld [vmem:[%s3 + $0x60] sm:$0xff]
    %v982 = vld [vmem:[%s3 + $0x68] sm:$0xff]
    %v983 = vld [vmem:[%s3 + $0x70] sm:$0xff]
    %v984 = vld [vmem:[%s3 + $0x78] sm:$0xff]
    %v985 = vld [vmem:[%s3 + $0x80] sm:$0xff]
    %v986 = vld [vmem:[%s3 + $0x88] sm:$0xff]
    %v987 = vld [vmem:[%s3 + $0x90] sm:$0xff]
    %v988 = vld [vmem:[%s3 + $0x98] sm:$0xff]
    %v989 = vld [vmem:[%s3 + $0xa0] sm:$0xff]
    %v990 = vld [vmem:[%s3 + $0xa8] sm:$0xff]
    %v991 = vld [vmem:[%s3 + $0xb0] sm:$0xff]
    %v992 = vld [vmem:[%s3 + $0xb8] sm:$0xff]
    %v993 = vld [vmem:[%s3 + $0xc0] sm:$0xff]
    %v994 = vld [vmem:[%s3 + $0xc8] sm:$0xff]
    %v995 = vld [vmem:[%s3 + $0xd0] sm:$0xff]
    %v996 = vld [vmem:[%s3 + $0xd8] sm:$0xff]
    %v997 = vld [vmem:[%s3 + $0xe0] sm:$0xff]
    %v998 = vld [vmem:[%s3 + $0xe8] sm:$0xff]
    %v999 = vld [vmem:[%s3 + $0xf0] sm:$0xff]
    %v1000 = vld [vmem:[%s3 + $0xf8] sm:$0xff]
    %v1001 = vld [vmem:[%s3 + $0x100] sm:$0xff]
    %v1002 = vld [vmem:[%s3 + $0x108] sm:$0xff]
    %v1003 = vld [vmem:[%s3 + $0x110] sm:$0xff]
    %v1004 = vld [vmem:[%s3 + $0x118] sm:$0xff]
    %v1005 = vld [vmem:[%s3 + $0x120] sm:$0xff]
    %v1006 = vld [vmem:[%s3 + $0x128] sm:$0xff]
    %v1007 = vld [vmem:[%s3 + $0x130] sm:$0xff]
    %v1008 = vld [vmem:[%s3 + $0x138] sm:$0xff]
    %v1009 = vld [vmem:[%s3 + $0x140] sm:$0xff]
    %v1010 = vld [vmem:[%s3 + $0x148] sm:$0xff]
    %v1011 = vld [vmem:[%s3 + $0x150] sm:$0xff]
    %v1012 = vld [vmem:[%s3 + $0x158] sm:$0xff]
    %v1013 = vld [vmem:[%s3 + $0x160] sm:$0xff]
    %v1014 = vld [vmem:[%s3 + $0x168] sm:$0xff]
    %v1015 = vld [vmem:[%s3 + $0x170] sm:$0xff]
    %v1016 = vld [vmem:[%s3 + $0x178] sm:$0xff]
    %v1017 = vld [vmem:[%s5] sm:$0x7]
    %v1019 = vperm.slane %v1017, 0
    %v1020 = vperm.slane %v1017, 1
    %v1021 = vperm.slane %v1017, 2
    %1025 = vmatpush.msra.mxu0 %v1014
    %1026 = vmatpush.msra.mxu0 %v1011
    %1027 = vmatpush.msra.mxu0 %v1008
    %1028 = vmatpush.msra.mxu0 %v1005
    %1029 = vmatpush.msra.mxu0 %v1002
    %1030 = vmatpush.msra.mxu0 %v999
    %1031 = vmatpush.msra.mxu0 %v996
    %1032 = vmatpush.msra.mxu0 %v993
    %1033 = vmatpush.msra.mxu0 %v990
    %1034 = vmatpush.msra.mxu0 %v987
    %1035 = vmatpush.msra.mxu0 %v984
    %1036 = vmatpush.msra.mxu0 %v981
    %1037 = vmatpush.msra.mxu0 %v978
    %1038 = vmatpush.msra.mxu0 %v975
    %1039 = vmatpush.msra.mxu0 %v972
    %1040 = vmatpush.msra.mxu0 %v969
    %1041 = vmatmul.f32.gmra.mxu0 %v967
    %v1042 = vpop.f32.mrf.mxu0
    %v1043 = vadd.f32 %v1019, %v1042
    %1044 = vdwg.mxu0
    %1045 = vmatpush.msra.mxu0 %v1015
    %1046 = vmatpush.msra.mxu0 %v1012
    %1047 = vmatpush.msra.mxu0 %v1009
    %1048 = vmatpush.msra.mxu0 %v1006
    %1049 = vmatpush.msra.mxu0 %v1003
    %1050 = vmatpush.msra.mxu0 %v1000
    %1051 = vmatpush.msra.mxu0 %v997
    %1052 = vmatpush.msra.mxu0 %v994
    %1053 = vmatpush.msra.mxu0 %v991
    %1054 = vmatpush.msra.mxu0 %v988
    %1055 = vmatpush.msra.mxu0 %v985
    %1056 = vmatpush.msra.mxu0 %v982
    %1057 = vmatpush.msra.mxu0 %v979
    %1058 = vmatpush.msra.mxu0 %v976
    %1059 = vmatpush.msra.mxu0 %v973
    %1060 = vmatpush.msra.mxu0 %v970
    %1061 = vmatmul.f32.gmra.mxu0 %v967
    %v1062 = vpop.f32.mrf.mxu0
    %v1063 = vadd.f32 %v1020, %v1062
    %1064 = vdwg.mxu0
    %1065 = vmatpush.msra.mxu0 %v1016
    %1066 = vmatpush.msra.mxu0 %v1013
    %1067 = vmatpush.msra.mxu0 %v1010
    %1068 = vmatpush.msra.mxu0 %v1007
    %1069 = vmatpush.msra.mxu0 %v1004
    %1070 = vmatpush.msra.mxu0 %v1001
    %1071 = vmatpush.msra.mxu0 %v998
    %1072 = vmatpush.msra.mxu0 %v995
    %1073 = vmatpush.msra.mxu0 %v992
    %1074 = vmatpush.msra.mxu0 %v989
    %1075 = vmatpush.msra.mxu0 %v986
    %1076 = vmatpush.msra.mxu0 %v983
    %1077 = vmatpush.msra.mxu0 %v980
    %1078 = vmatpush.msra.mxu0 %v977
    %1079 = vmatpush.msra.mxu0 %v974
    %1080 = vmatpush.msra.mxu0 %v971
    %1081 = vmatmul.f32.gmra.mxu0 %v967
    %v1082 = vpop.f32.mrf.mxu0
    %v1083 = vadd.f32 %v1021, %v1082
    %1084 = vdwg.mxu0
    %v1085 = vld [vmem:[#allocation9] sm:$0xff]
    %v1086 = vld [vmem:[#allocation9 + $0x8] sm:$0xff]
    %v1087 = vld [vmem:[#allocation9 + $0x10] sm:$0xff]
    %v1088 = vld [vmem:[#allocation9 + $0x18] sm:$0xff]
    %v1089 = vld [vmem:[#allocation9 + $0x20] sm:$0xff]
    %v1090 = vld [vmem:[#allocation9 + $0x28] sm:$0xff]
    %v1091 = vld [vmem:[#allocation9 + $0x30] sm:$0xff]
    %v1092 = vld [vmem:[#allocation9 + $0x38] sm:$0xff]
    %v1093 = vld [vmem:[#allocation9 + $0x40] sm:$0xff]
    %v1094 = vld [vmem:[#allocation9 + $0x48] sm:$0xff]
    %v1095 = vld [vmem:[#allocation9 + $0x50] sm:$0xff]
    %v1096 = vld [vmem:[#allocation9 + $0x58] sm:$0xff]
    %v1097 = vld [vmem:[#allocation9 + $0x60] sm:$0xff]
    %v1098 = vld [vmem:[#allocation9 + $0x68] sm:$0xff]
    %v1099 = vld [vmem:[#allocation9 + $0x70] sm:$0xff]
    %v1100 = vld [vmem:[#allocation9 + $0x78] sm:$0xff]
    %v1101 = vld [vmem:[#allocation9 + $0x80] sm:$0xff]
    %v1102 = vld [vmem:[#allocation9 + $0x88] sm:$0xff]
    %v1103 = vld [vmem:[#allocation9 + $0x90] sm:$0xff]
    %v1104 = vld [vmem:[#allocation9 + $0x98] sm:$0xff]
    %v1105 = vld [vmem:[#allocation9 + $0xa0] sm:$0xff]
    %v1106 = vld [vmem:[#allocation9 + $0xa8] sm:$0xff]
    %v1107 = vld [vmem:[#allocation9 + $0xb0] sm:$0xff]
    %v1108 = vld [vmem:[#allocation9 + $0xb8] sm:$0xff]
    %v1109 = vld [vmem:[#allocation9 + $0xc0] sm:$0xff]
    %v1110 = vld [vmem:[#allocation9 + $0xc8] sm:$0xff]
    %v1111 = vld [vmem:[#allocation9 + $0xd0] sm:$0xff]
    %v1112 = vld [vmem:[#allocation9 + $0xd8] sm:$0xff]
    %v1113 = vld [vmem:[#allocation9 + $0xe0] sm:$0xff]
    %v1114 = vld [vmem:[#allocation9 + $0xe8] sm:$0xff]
    %v1115 = vld [vmem:[#allocation9 + $0xf0] sm:$0xff]
    %v1116 = vld [vmem:[#allocation9 + $0xf8] sm:$0xff]
    %v1117 = vld [vmem:[#allocation9 + $0x100] sm:$0xff]
    %v1118 = vld [vmem:[#allocation9 + $0x108] sm:$0xff]
    %v1119 = vld [vmem:[#allocation9 + $0x110] sm:$0xff]
    %v1120 = vld [vmem:[#allocation9 + $0x118] sm:$0xff]
    %v1121 = vld [vmem:[#allocation9 + $0x120] sm:$0xff]
    %v1122 = vld [vmem:[#allocation9 + $0x128] sm:$0xff]
    %v1123 = vld [vmem:[#allocation9 + $0x130] sm:$0xff]
    %v1124 = vld [vmem:[#allocation9 + $0x138] sm:$0xff]
    %v1125 = vld [vmem:[#allocation9 + $0x140] sm:$0xff]
    %v1126 = vld [vmem:[#allocation9 + $0x148] sm:$0xff]
    %v1127 = vld [vmem:[#allocation9 + $0x150] sm:$0xff]
    %v1128 = vld [vmem:[#allocation9 + $0x158] sm:$0xff]
    %v1129 = vld [vmem:[#allocation9 + $0x160] sm:$0xff]
    %v1130 = vld [vmem:[#allocation9 + $0x168] sm:$0xff]
    %v1131 = vld [vmem:[#allocation9 + $0x170] sm:$0xff]
    %v1132 = vld [vmem:[#allocation9 + $0x178] sm:$0xff]
    %v1133 = vld [vmem:[%s6] sm:$0x7]
    %v1135 = vperm.slane %v1133, 0
    %v1136 = vperm.slane %v1133, 1
    %v1137 = vperm.slane %v1133, 2
    %1141 = vmatpush.msra.mxu0 %v1130
    %1142 = vmatpush.msra.mxu0 %v1127
    %1143 = vmatpush.msra.mxu0 %v1124
    %1144 = vmatpush.msra.mxu0 %v1121
    %1145 = vmatpush.msra.mxu0 %v1118
    %1146 = vmatpush.msra.mxu0 %v1115
    %1147 = vmatpush.msra.mxu0 %v1112
    %1148 = vmatpush.msra.mxu0 %v1109
    %1149 = vmatpush.msra.mxu0 %v1106
    %1150 = vmatpush.msra.mxu0 %v1103
    %1151 = vmatpush.msra.mxu0 %v1100
    %1152 = vmatpush.msra.mxu0 %v1097
    %1153 = vmatpush.msra.mxu0 %v1094
    %1154 = vmatpush.msra.mxu0 %v1091
    %1155 = vmatpush.msra.mxu0 %v1088
    %1156 = vmatpush.msra.mxu0 %v1085
    %1157 = vmatmul.f32.gmra.mxu0 %v968
    %v1158 = vpop.f32.mrf.mxu0
    %v1159 = vadd.f32 %v1135, %v1158
    %1160 = vdwg.mxu0
    %1161 = vmatpush.msra.mxu0 %v1131
    %1162 = vmatpush.msra.mxu0 %v1128
    %1163 = vmatpush.msra.mxu0 %v1125
    %1164 = vmatpush.msra.mxu0 %v1122
    %1165 = vmatpush.msra.mxu0 %v1119
    %1166 = vmatpush.msra.mxu0 %v1116
    %1167 = vmatpush.msra.mxu0 %v1113
    %1168 = vmatpush.msra.mxu0 %v1110
    %1169 = vmatpush.msra.mxu0 %v1107
    %1170 = vmatpush.msra.mxu0 %v1104
    %1171 = vmatpush.msra.mxu0 %v1101
    %1172 = vmatpush.msra.mxu0 %v1098
    %1173 = vmatpush.msra.mxu0 %v1095
    %1174 = vmatpush.msra.mxu0 %v1092
    %1175 = vmatpush.msra.mxu0 %v1089
    %1176 = vmatpush.msra.mxu0 %v1086
    %1177 = vmatmul.f32.gmra.mxu0 %v968
    %v1178 = vpop.f32.mrf.mxu0
    %v1179 = vadd.f32 %v1136, %v1178
    %1180 = vdwg.mxu0
    %1181 = vmatpush.msra.mxu0 %v1132
    %1182 = vmatpush.msra.mxu0 %v1129
    %1183 = vmatpush.msra.mxu0 %v1126
    %1184 = vmatpush.msra.mxu0 %v1123
    %1185 = vmatpush.msra.mxu0 %v1120
    %1186 = vmatpush.msra.mxu0 %v1117
    %1187 = vmatpush.msra.mxu0 %v1114
    %1188 = vmatpush.msra.mxu0 %v1111
    %1189 = vmatpush.msra.mxu0 %v1108
    %1190 = vmatpush.msra.mxu0 %v1105
    %1191 = vmatpush.msra.mxu0 %v1102
    %1192 = vmatpush.msra.mxu0 %v1099
    %1193 = vmatpush.msra.mxu0 %v1096
    %1194 = vmatpush.msra.mxu0 %v1093
    %1195 = vmatpush.msra.mxu0 %v1090
    %1196 = vmatpush.msra.mxu0 %v1087
    %1197 = vmatmul.f32.gmra.mxu0 %v968
    %v1198 = vpop.f32.mrf.mxu0
    %v1199 = vadd.f32 %v1137, %v1198
    %1200 = vdwg.mxu0
    %v1201 = vld [vmem:[#allocation4] sm:$0xff]
    %v1202 = vld [vmem:[#allocation4 + $0x8] sm:$0xff]
    %v1203 = vld [vmem:[#allocation4 + $0x10] sm:$0xff]
    %s1204 = scalar_lea.vmem [#allocation4], 144
    %v1205 = vld [vmem:[%s1204 + $0x18] sm:$0xff]
    %v1206 = vld [vmem:[%s1204 + $0x20] sm:$0xff]
    %v1207 = vld [vmem:[%s1204 + $0x28] sm:$0xff]
    %v1208 = vadd.f32 %v1201, %v1043
    %v1209 = vxor.u32 %v1208, 2147483648
    %v1210 = vmul.f32 %v1209, 1.442695
    %v1211 = vpow.pop %v1210
    %v1212 = vadd.f32 %v1211, 1.0
    %v1213 = vrcp.pop %v1212
    %v1214 = vmul.f32 %v1212, %v1213
    %v1215 = vsub.f32 1.0, %v1214
    %v1216 = vmul.f32 %v1213, %v1215
    %v1217 = vadd.f32 %v1213, %v1216
    %vm1218 = vweird.f32 %v1212
    %vm1219 = vweird.f32 %v1213
    %vm1220 = vmor %vm1218, %vm1219
    %v1221 = vsel %vm1220, %v1213, %v1217
    %v1222 = vand.u32 2147483647, %v1212
    %vm1223 = vcmp.eq.f32.partialorder %v1222, 8.507059e+37
    %v1224 = vand.u32 %v1212, 2147483648
    %v1225 = vor.u32 1.1754944e-38, %v1224
    %v1226 = vsel %vm1223, %v1225, %v1221
    %v1227 = vmul.f32 1.0, %v1226
    %v1228 = vadd.f32 %v1202, %v1063
    %v1229 = vxor.u32 %v1228, 2147483648
    %v1230 = vmul.f32 %v1229, 1.442695
    %v1231 = vpow.pop %v1230
    %v1232 = vadd.f32 %v1231, 1.0
    %v1233 = vrcp.pop %v1232
    %v1234 = vmul.f32 %v1232, %v1233
    %v1235 = vsub.f32 1.0, %v1234
    %v1236 = vmul.f32 %v1233, %v1235
    %v1237 = vadd.f32 %v1233, %v1236
    %vm1238 = vweird.f32 %v1232
    %vm1239 = vweird.f32 %v1233
    %vm1240 = vmor %vm1238, %vm1239
    %v1241 = vsel %vm1240, %v1233, %v1237
    %v1242 = vand.u32 2147483647, %v1232
    %vm1243 = vcmp.eq.f32.partialorder %v1242, 8.507059e+37
    %v1244 = vand.u32 %v1232, 2147483648
    %v1245 = vor.u32 1.1754944e-38, %v1244
    %v1246 = vsel %vm1243, %v1245, %v1241
    %v1247 = vmul.f32 1.0, %v1246
    %v1248 = vmul.f32 %v1227, %v1083
    %v1249 = vadd.f32 %v1203, %v1248
    %v1250 = vtanh.pop %v1249
    %v1251 = vsub.f32 1.0, %v1247
    %v1252 = vmul.f32 %v1251, %v1250
    %v1253 = vmul.f32 %v1247, %v967
    %v1254 = vadd.f32 %v1252, %v1253
    %v1255 = vadd.f32 %v1205, %v1159
    %v1256 = vxor.u32 %v1255, 2147483648
    %v1257 = vmul.f32 %v1256, 1.442695
    %v1258 = vpow.pop %v1257
    %v1259 = vadd.f32 %v1258, 1.0
    %v1260 = vrcp.pop %v1259
    %v1261 = vmul.f32 %v1259, %v1260
    %v1262 = vsub.f32 1.0, %v1261
    %v1263 = vmul.f32 %v1260, %v1262
    %v1264 = vadd.f32 %v1260, %v1263
    %vm1265 = vweird.f32 %v1259
    %vm1266 = vweird.f32 %v1260
    %vm1267 = vmor %vm1265, %vm1266
    %v1268 = vsel %vm1267, %v1260, %v1264
    %v1269 = vand.u32 2147483647, %v1259
    %vm1270 = vcmp.eq.f32.partialorder %v1269, 8.507059e+37
    %v1271 = vand.u32 %v1259, 2147483648
    %v1272 = vor.u32 1.1754944e-38, %v1271
    %v1273 = vsel %vm1270, %v1272, %v1268
    %v1274 = vmul.f32 1.0, %v1273
    %v1275 = vadd.f32 %v1206, %v1179
    %v1276 = vxor.u32 %v1275, 2147483648
    %v1277 = vmul.f32 %v1276, 1.442695
    %v1278 = vpow.pop %v1277
    %v1279 = vadd.f32 %v1278, 1.0
    %v1280 = vrcp.pop %v1279
    %v1281 = vmul.f32 %v1279, %v1280
    %v1282 = vsub.f32 1.0, %v1281
    %v1283 = vmul.f32 %v1280, %v1282
    %v1284 = vadd.f32 %v1280, %v1283
    %vm1285 = vweird.f32 %v1279
    %vm1286 = vweird.f32 %v1280
    %vm1287 = vmor %vm1285, %vm1286
    %v1288 = vsel %vm1287, %v1280, %v1284
    %v1289 = vand.u32 2147483647, %v1279
    %vm1290 = vcmp.eq.f32.partialorder %v1289, 8.507059e+37
    %v1291 = vand.u32 %v1279, 2147483648
    %v1292 = vor.u32 1.1754944e-38, %v1291
    %v1293 = vsel %vm1290, %v1292, %v1288
    %v1294 = vmul.f32 1.0, %v1293
    %v1295 = vmul.f32 %v1274, %v1199
    %v1296 = vadd.f32 %v1207, %v1295
    %v1297 = vtanh.pop %v1296
    %v1298 = vsub.f32 1.0, %v1294
    %v1299 = vmul.f32 %v1298, %v1297
    %v1300 = vmul.f32 %v1294, %v968
    %v1301 = vadd.f32 %v1299, %v1300
    %1302 = vst [vmem:[#allocation2] sm:$0xff] %v1254
    %1303 = vst [vmem:[#allocation3] sm:$0xff] %v1301
    %1304 = vst [vmem:[#allocation5] sm:$0xff] %v1254
    %s1305 = scalar_lea.vmem [#allocation5], 48
    %1306 = vst [vmem:[%s1305 + $0x8] sm:$0xff] %v1301
    %v1307 = vld [vmem:[#allocation2] sm:$0xff]
    %v1308 = vld [vmem:[#allocation3] sm:$0xff]
    %v1309 = vld [vmem:[%s3] sm:$0xff]
    %v1310 = vld [vmem:[%s3 + $0x8] sm:$0xff]
    %v1311 = vld [vmem:[%s3 + $0x10] sm:$0xff]
    %v1312 = vld [vmem:[%s3 + $0x18] sm:$0xff]
    %v1313 = vld [vmem:[%s3 + $0x20] sm:$0xff]
    %v1314 = vld [vmem:[%s3 + $0x28] sm:$0xff]
    %v1315 = vld [vmem:[%s3 + $0x30] sm:$0xff]
    %v1316 = vld [vmem:[%s3 + $0x38] sm:$0xff]
    %v1317 = vld [vmem:[%s3 + $0x40] sm:$0xff]
    %v1318 = vld [vmem:[%s3 + $0x48] sm:$0xff]
    %v1319 = vld [vmem:[%s3 + $0x50] sm:$0xff]
    %v1320 = vld [vmem:[%s3 + $0x58] sm:$0xff]
    %v1321 = vld [vmem:[%s3 + $0x60] sm:$0xff]
    %v1322 = vld [vmem:[%s3 + $0x68] sm:$0xff]
    %v1323 = vld [vmem:[%s3 + $0x70] sm:$0xff]
    %v1324 = vld [vmem:[%s3 + $0x78] sm:$0xff]
    %v1325 = vld [vmem:[%s3 + $0x80] sm:$0xff]
    %v1326 = vld [vmem:[%s3 + $0x88] sm:$0xff]
    %v1327 = vld [vmem:[%s3 + $0x90] sm:$0xff]
    %v1328 = vld [vmem:[%s3 + $0x98] sm:$0xff]
    %v1329 = vld [vmem:[%s3 + $0xa0] sm:$0xff]
    %v1330 = vld [vmem:[%s3 + $0xa8] sm:$0xff]
    %v1331 = vld [vmem:[%s3 + $0xb0] sm:$0xff]
    %v1332 = vld [vmem:[%s3 + $0xb8] sm:$0xff]
    %v1333 = vld [vmem:[%s3 + $0xc0] sm:$0xff]
    %v1334 = vld [vmem:[%s3 + $0xc8] sm:$0xff]
    %v1335 = vld [vmem:[%s3 + $0xd0] sm:$0xff]
    %v1336 = vld [vmem:[%s3 + $0xd8] sm:$0xff]
    %v1337 = vld [vmem:[%s3 + $0xe0] sm:$0xff]
    %v1338 = vld [vmem:[%s3 + $0xe8] sm:$0xff]
    %v1339 = vld [vmem:[%s3 + $0xf0] sm:$0xff]
    %v1340 = vld [vmem:[%s3 + $0xf8] sm:$0xff]
    %v1341 = vld [vmem:[%s3 + $0x100] sm:$0xff]
    %v1342 = vld [vmem:[%s3 + $0x108] sm:$0xff]
    %v1343 = vld [vmem:[%s3 + $0x110] sm:$0xff]
    %v1344 = vld [vmem:[%s3 + $0x118] sm:$0xff]
    %v1345 = vld [vmem:[%s3 + $0x120] sm:$0xff]
    %v1346 = vld [vmem:[%s3 + $0x128] sm:$0xff]
    %v1347 = vld [vmem:[%s3 + $0x130] sm:$0xff]
    %v1348 = vld [vmem:[%s3 + $0x138] sm:$0xff]
    %v1349 = vld [vmem:[%s3 + $0x140] sm:$0xff]
    %v1350 = vld [vmem:[%s3 + $0x148] sm:$0xff]
    %v1351 = vld [vmem:[%s3 + $0x150] sm:$0xff]
    %v1352 = vld [vmem:[%s3 + $0x158] sm:$0xff]
    %v1353 = vld [vmem:[%s3 + $0x160] sm:$0xff]
    %v1354 = vld [vmem:[%s3 + $0x168] sm:$0xff]
    %v1355 = vld [vmem:[%s3 + $0x170] sm:$0xff]
    %v1356 = vld [vmem:[%s3 + $0x178] sm:$0xff]
    %v1357 = vld [vmem:[%s5] sm:$0x7]
    %v1359 = vperm.slane %v1357, 0
    %v1360 = vperm.slane %v1357, 1
    %v1361 = vperm.slane %v1357, 2
    %1365 = vmatpush.msra.mxu0 %v1354
    %1366 = vmatpush.msra.mxu0 %v1351
    %1367 = vmatpush.msra.mxu0 %v1348
    %1368 = vmatpush.msra.mxu0 %v1345
    %1369 = vmatpush.msra.mxu0 %v1342
    %1370 = vmatpush.msra.mxu0 %v1339
    %1371 = vmatpush.msra.mxu0 %v1336
    %1372 = vmatpush.msra.mxu0 %v1333
    %1373 = vmatpush.msra.mxu0 %v1330
    %1374 = vmatpush.msra.mxu0 %v1327
    %1375 = vmatpush.msra.mxu0 %v1324
    %1376 = vmatpush.msra.mxu0 %v1321
    %1377 = vmatpush.msra.mxu0 %v1318
    %1378 = vmatpush.msra.mxu0 %v1315
    %1379 = vmatpush.msra.mxu0 %v1312
    %1380 = vmatpush.msra.mxu0 %v1309
    %1381 = vmatmul.f32.gmra.mxu0 %v1307
    %v1382 = vpop.f32.mrf.mxu0
    %v1383 = vadd.f32 %v1359, %v1382
    %1384 = vdwg.mxu0
    %1385 = vmatpush.msra.mxu0 %v1355
    %1386 = vmatpush.msra.mxu0 %v1352
    %1387 = vmatpush.msra.mxu0 %v1349
    %1388 = vmatpush.msra.mxu0 %v1346
    %1389 = vmatpush.msra.mxu0 %v1343
    %1390 = vmatpush.msra.mxu0 %v1340
    %1391 = vmatpush.msra.mxu0 %v1337
    %1392 = vmatpush.msra.mxu0 %v1334
    %1393 = vmatpush.msra.mxu0 %v1331
    %1394 = vmatpush.msra.mxu0 %v1328
    %1395 = vmatpush.msra.mxu0 %v1325
    %1396 = vmatpush.msra.mxu0 %v1322
    %1397 = vmatpush.msra.mxu0 %v1319
    %1398 = vmatpush.msra.mxu0 %v1316
    %1399 = vmatpush.msra.mxu0 %v1313
    %1400 = vmatpush.msra.mxu0 %v1310
    %1401 = vmatmul.f32.gmra.mxu0 %v1307
    %v1402 = vpop.f32.mrf.mxu0
    %v1403 = vadd.f32 %v1360, %v1402
    %1404 = vdwg.mxu0
    %1405 = vmatpush.msra.mxu0 %v1356
    %1406 = vmatpush.msra.mxu0 %v1353
    %1407 = vmatpush.msra.mxu0 %v1350
    %1408 = vmatpush.msra.mxu0 %v1347
    %1409 = vmatpush.msra.mxu0 %v1344
    %1410 = vmatpush.msra.mxu0 %v1341
    %1411 = vmatpush.msra.mxu0 %v1338
    %1412 = vmatpush.msra.mxu0 %v1335
    %1413 = vmatpush.msra.mxu0 %v1332
    %1414 = vmatpush.msra.mxu0 %v1329
    %1415 = vmatpush.msra.mxu0 %v1326
    %1416 = vmatpush.msra.mxu0 %v1323
    %1417 = vmatpush.msra.mxu0 %v1320
    %1418 = vmatpush.msra.mxu0 %v1317
    %1419 = vmatpush.msra.mxu0 %v1314
    %1420 = vmatpush.msra.mxu0 %v1311
    %1421 = vmatmul.f32.gmra.mxu0 %v1307
    %v1422 = vpop.f32.mrf.mxu0
    %v1423 = vadd.f32 %v1361, %v1422
    %1424 = vdwg.mxu0
    %v1425 = vld [vmem:[#allocation9] sm:$0xff]
    %v1426 = vld [vmem:[#allocation9 + $0x8] sm:$0xff]
    %v1427 = vld [vmem:[#allocation9 + $0x10] sm:$0xff]
    %v1428 = vld [vmem:[#allocation9 + $0x18] sm:$0xff]
    %v1429 = vld [vmem:[#allocation9 + $0x20] sm:$0xff]
    %v1430 = vld [vmem:[#allocation9 + $0x28] sm:$0xff]
    %v1431 = vld [vmem:[#allocation9 + $0x30] sm:$0xff]
    %v1432 = vld [vmem:[#allocation9 + $0x38] sm:$0xff]
    %v1433 = vld [vmem:[#allocation9 + $0x40] sm:$0xff]
    %v1434 = vld [vmem:[#allocation9 + $0x48] sm:$0xff]
    %v1435 = vld [vmem:[#allocation9 + $0x50] sm:$0xff]
    %v1436 = vld [vmem:[#allocation9 + $0x58] sm:$0xff]
    %v1437 = vld [vmem:[#allocation9 + $0x60] sm:$0xff]
    %v1438 = vld [vmem:[#allocation9 + $0x68] sm:$0xff]
    %v1439 = vld [vmem:[#allocation9 + $0x70] sm:$0xff]
    %v1440 = vld [vmem:[#allocation9 + $0x78] sm:$0xff]
    %v1441 = vld [vmem:[#allocation9 + $0x80] sm:$0xff]
    %v1442 = vld [vmem:[#allocation9 + $0x88] sm:$0xff]
    %v1443 = vld [vmem:[#allocation9 + $0x90] sm:$0xff]
    %v1444 = vld [vmem:[#allocation9 + $0x98] sm:$0xff]
    %v1445 = vld [vmem:[#allocation9 + $0xa0] sm:$0xff]
    %v1446 = vld [vmem:[#allocation9 + $0xa8] sm:$0xff]
    %v1447 = vld [vmem:[#allocation9 + $0xb0] sm:$0xff]
    %v1448 = vld [vmem:[#allocation9 + $0xb8] sm:$0xff]
    %v1449 = vld [vmem:[#allocation9 + $0xc0] sm:$0xff]
    %v1450 = vld [vmem:[#allocation9 + $0xc8] sm:$0xff]
    %v1451 = vld [vmem:[#allocation9 + $0xd0] sm:$0xff]
    %v1452 = vld [vmem:[#allocation9 + $0xd8] sm:$0xff]
    %v1453 = vld [vmem:[#allocation9 + $0xe0] sm:$0xff]
    %v1454 = vld [vmem:[#allocation9 + $0xe8] sm:$0xff]
    %v1455 = vld [vmem:[#allocation9 + $0xf0] sm:$0xff]
    %v1456 = vld [vmem:[#allocation9 + $0xf8] sm:$0xff]
    %v1457 = vld [vmem:[#allocation9 + $0x100] sm:$0xff]
    %v1458 = vld [vmem:[#allocation9 + $0x108] sm:$0xff]
    %v1459 = vld [vmem:[#allocation9 + $0x110] sm:$0xff]
    %v1460 = vld [vmem:[#allocation9 + $0x118] sm:$0xff]
    %v1461 = vld [vmem:[#allocation9 + $0x120] sm:$0xff]
    %v1462 = vld [vmem:[#allocation9 + $0x128] sm:$0xff]
    %v1463 = vld [vmem:[#allocation9 + $0x130] sm:$0xff]
    %v1464 = vld [vmem:[#allocation9 + $0x138] sm:$0xff]
    %v1465 = vld [vmem:[#allocation9 + $0x140] sm:$0xff]
    %v1466 = vld [vmem:[#allocation9 + $0x148] sm:$0xff]
    %v1467 = vld [vmem:[#allocation9 + $0x150] sm:$0xff]
    %v1468 = vld [vmem:[#allocation9 + $0x158] sm:$0xff]
    %v1469 = vld [vmem:[#allocation9 + $0x160] sm:$0xff]
    %v1470 = vld [vmem:[#allocation9 + $0x168] sm:$0xff]
    %v1471 = vld [vmem:[#allocation9 + $0x170] sm:$0xff]
    %v1472 = vld [vmem:[#allocation9 + $0x178] sm:$0xff]
    %v1473 = vld [vmem:[%s6] sm:$0x7]
    %v1475 = vperm.slane %v1473, 0
    %v1476 = vperm.slane %v1473, 1
    %v1477 = vperm.slane %v1473, 2
    %1481 = vmatpush.msra.mxu0 %v1470
    %1482 = vmatpush.msra.mxu0 %v1467
    %1483 = vmatpush.msra.mxu0 %v1464
    %1484 = vmatpush.msra.mxu0 %v1461
    %1485 = vmatpush.msra.mxu0 %v1458
    %1486 = vmatpush.msra.mxu0 %v1455
    %1487 = vmatpush.msra.mxu0 %v1452
    %1488 = vmatpush.msra.mxu0 %v1449
    %1489 = vmatpush.msra.mxu0 %v1446
    %1490 = vmatpush.msra.mxu0 %v1443
    %1491 = vmatpush.msra.mxu0 %v1440
    %1492 = vmatpush.msra.mxu0 %v1437
    %1493 = vmatpush.msra.mxu0 %v1434
    %1494 = vmatpush.msra.mxu0 %v1431
    %1495 = vmatpush.msra.mxu0 %v1428
    %1496 = vmatpush.msra.mxu0 %v1425
    %1497 = vmatmul.f32.gmra.mxu0 %v1308
    %v1498 = vpop.f32.mrf.mxu0
    %v1499 = vadd.f32 %v1475, %v1498
    %1500 = vdwg.mxu0
    %1501 = vmatpush.msra.mxu0 %v1471
    %1502 = vmatpush.msra.mxu0 %v1468
    %1503 = vmatpush.msra.mxu0 %v1465
    %1504 = vmatpush.msra.mxu0 %v1462
    %1505 = vmatpush.msra.mxu0 %v1459
    %1506 = vmatpush.msra.mxu0 %v1456
    %1507 = vmatpush.msra.mxu0 %v1453
    %1508 = vmatpush.msra.mxu0 %v1450
    %1509 = vmatpush.msra.mxu0 %v1447
    %1510 = vmatpush.msra.mxu0 %v1444
    %1511 = vmatpush.msra.mxu0 %v1441
    %1512 = vmatpush.msra.mxu0 %v1438
    %1513 = vmatpush.msra.mxu0 %v1435
    %1514 = vmatpush.msra.mxu0 %v1432
    %1515 = vmatpush.msra.mxu0 %v1429
    %1516 = vmatpush.msra.mxu0 %v1426
    %1517 = vmatmul.f32.gmra.mxu0 %v1308
    %v1518 = vpop.f32.mrf.mxu0
    %v1519 = vadd.f32 %v1476, %v1518
    %1520 = vdwg.mxu0
    %1521 = vmatpush.msra.mxu0 %v1472
    %1522 = vmatpush.msra.mxu0 %v1469
    %1523 = vmatpush.msra.mxu0 %v1466
    %1524 = vmatpush.msra.mxu0 %v1463
    %1525 = vmatpush.msra.mxu0 %v1460
    %1526 = vmatpush.msra.mxu0 %v1457
    %1527 = vmatpush.msra.mxu0 %v1454
    %1528 = vmatpush.msra.mxu0 %v1451
    %1529 = vmatpush.msra.mxu0 %v1448
    %1530 = vmatpush.msra.mxu0 %v1445
    %1531 = vmatpush.msra.mxu0 %v1442
    %1532 = vmatpush.msra.mxu0 %v1439
    %1533 = vmatpush.msra.mxu0 %v1436
    %1534 = vmatpush.msra.mxu0 %v1433
    %1535 = vmatpush.msra.mxu0 %v1430
    %1536 = vmatpush.msra.mxu0 %v1427
    %1537 = vmatmul.f32.gmra.mxu0 %v1308
    %v1538 = vpop.f32.mrf.mxu0
    %v1539 = vadd.f32 %v1477, %v1538
    %1540 = vdwg.mxu0
    %s1541 = scalar_lea.vmem [#allocation4], 48
    %v1542 = vld [vmem:[%s1541] sm:$0xff]
    %v1543 = vld [vmem:[%s1541 + $0x8] sm:$0xff]
    %v1544 = vld [vmem:[%s1541 + $0x10] sm:$0xff]
    %s1545 = scalar_lea.vmem [#allocation4], 96
    %v1546 = vld [vmem:[%s1545 + $0x18] sm:$0xff]
    %v1547 = vld [vmem:[%s1545 + $0x20] sm:$0xff]
    %v1548 = vld [vmem:[%s1545 + $0x28] sm:$0xff]
    %v1549 = vadd.f32 %v1542, %v1383
    %v1550 = vxor.u32 %v1549, 2147483648
    %v1551 = vmul.f32 %v1550, 1.442695
    %v1552 = vpow.pop %v1551
    %v1553 = vadd.f32 %v1552, 1.0
    %v1554 = vrcp.pop %v1553
    %v1555 = vmul.f32 %v1553, %v1554
    %v1556 = vsub.f32 1.0, %v1555
    %v1557 = vmul.f32 %v1554, %v1556
    %v1558 = vadd.f32 %v1554, %v1557
    %vm1559 = vweird.f32 %v1553
    %vm1560 = vweird.f32 %v1554
    %vm1561 = vmor %vm1559, %vm1560
    %v1562 = vsel %vm1561, %v1554, %v1558
    %v1563 = vand.u32 2147483647, %v1553
    %vm1564 = vcmp.eq.f32.partialorder %v1563, 8.507059e+37
    %v1565 = vand.u32 %v1553, 2147483648
    %v1566 = vor.u32 1.1754944e-38, %v1565
    %v1567 = vsel %vm1564, %v1566, %v1562
    %v1568 = vmul.f32 1.0, %v1567
    %v1569 = vadd.f32 %v1543, %v1403
    %v1570 = vxor.u32 %v1569, 2147483648
    %v1571 = vmul.f32 %v1570, 1.442695
    %v1572 = vpow.pop %v1571
    %v1573 = vadd.f32 %v1572, 1.0
    %v1574 = vrcp.pop %v1573
    %v1575 = vmul.f32 %v1573, %v1574
    %v1576 = vsub.f32 1.0, %v1575
    %v1577 = vmul.f32 %v1574, %v1576
    %v1578 = vadd.f32 %v1574, %v1577
    %vm1579 = vweird.f32 %v1573
    %vm1580 = vweird.f32 %v1574
    %vm1581 = vmor %vm1579, %vm1580
    %v1582 = vsel %vm1581, %v1574, %v1578
    %v1583 = vand.u32 2147483647, %v1573
    %vm1584 = vcmp.eq.f32.partialorder %v1583, 8.507059e+37
    %v1585 = vand.u32 %v1573, 2147483648
    %v1586 = vor.u32 1.1754944e-38, %v1585
    %v1587 = vsel %vm1584, %v1586, %v1582
    %v1588 = vmul.f32 1.0, %v1587
    %v1589 = vmul.f32 %v1568, %v1423
    %v1590 = vadd.f32 %v1544, %v1589
    %v1591 = vtanh.pop %v1590
    %v1592 = vsub.f32 1.0, %v1588
    %v1593 = vmul.f32 %v1592, %v1591
    %v1594 = vmul.f32 %v1588, %v1307
    %v1595 = vadd.f32 %v1593, %v1594
    %v1596 = vadd.f32 %v1546, %v1499
    %v1597 = vxor.u32 %v1596, 2147483648
    %v1598 = vmul.f32 %v1597, 1.442695
    %v1599 = vpow.pop %v1598
    %v1600 = vadd.f32 %v1599, 1.0
    %v1601 = vrcp.pop %v1600
    %v1602 = vmul.f32 %v1600, %v1601
    %v1603 = vsub.f32 1.0, %v1602
    %v1604 = vmul.f32 %v1601, %v1603
    %v1605 = vadd.f32 %v1601, %v1604
    %vm1606 = vweird.f32 %v1600
    %vm1607 = vweird.f32 %v1601
    %vm1608 = vmor %vm1606, %vm1607
    %v1609 = vsel %vm1608, %v1601, %v1605
    %v1610 = vand.u32 2147483647, %v1600
    %vm1611 = vcmp.eq.f32.partialorder %v1610, 8.507059e+37
    %v1612 = vand.u32 %v1600, 2147483648
    %v1613 = vor.u32 1.1754944e-38, %v1612
    %v1614 = vsel %vm1611, %v1613, %v1609
    %v1615 = vmul.f32 1.0, %v1614
    %v1616 = vadd.f32 %v1547, %v1519
    %v1617 = vxor.u32 %v1616, 2147483648
    %v1618 = vmul.f32 %v1617, 1.442695
    %v1619 = vpow.pop %v1618
    %v1620 = vadd.f32 %v1619, 1.0
    %v1621 = vrcp.pop %v1620
    %v1622 = vmul.f32 %v1620, %v1621
    %v1623 = vsub.f32 1.0, %v1622
    %v1624 = vmul.f32 %v1621, %v1623
    %v1625 = vadd.f32 %v1621, %v1624
    %vm1626 = vweird.f32 %v1620
    %vm1627 = vweird.f32 %v1621
    %vm1628 = vmor %vm1626, %vm1627
    %v1629 = vsel %vm1628, %v1621, %v1625
    %v1630 = vand.u32 2147483647, %v1620
    %vm1631 = vcmp.eq.f32.partialorder %v1630, 8.507059e+37
    %v1632 = vand.u32 %v1620, 2147483648
    %v1633 = vor.u32 1.1754944e-38, %v1632
    %v1634 = vsel %vm1631, %v1633, %v1629
    %v1635 = vmul.f32 1.0, %v1634
    %v1636 = vmul.f32 %v1615, %v1539
    %v1637 = vadd.f32 %v1548, %v1636
    %v1638 = vtanh.pop %v1637
    %v1639 = vsub.f32 1.0, %v1635
    %v1640 = vmul.f32 %v1639, %v1638
    %v1641 = vmul.f32 %v1635, %v1308
    %v1642 = vadd.f32 %v1640, %v1641
    %1643 = vst [vmem:[#allocation2] sm:$0xff] %v1595
    %1644 = vst [vmem:[#allocation3] sm:$0xff] %v1642
    %s1645 = scalar_lea.vmem [#allocation5], 16
    %1646 = vst [vmem:[%s1645] sm:$0xff] %v1595
    %s1647 = scalar_lea.vmem [#allocation5], 32
    %1648 = vst [vmem:[%s1647 + $0x8] sm:$0xff] %v1642
    %v1649 = vld [vmem:[#allocation2] sm:$0xff]
    %v1650 = vld [vmem:[#allocation3] sm:$0xff]
    %v1651 = vld [vmem:[%s3] sm:$0xff]
    %v1652 = vld [vmem:[%s3 + $0x8] sm:$0xff]
    %v1653 = vld [vmem:[%s3 + $0x10] sm:$0xff]
    %v1654 = vld [vmem:[%s3 + $0x18] sm:$0xff]
    %v1655 = vld [vmem:[%s3 + $0x20] sm:$0xff]
    %v1656 = vld [vmem:[%s3 + $0x28] sm:$0xff]
    %v1657 = vld [vmem:[%s3 + $0x30] sm:$0xff]
    %v1658 = vld [vmem:[%s3 + $0x38] sm:$0xff]
    %v1659 = vld [vmem:[%s3 + $0x40] sm:$0xff]
    %v1660 = vld [vmem:[%s3 + $0x48] sm:$0xff]
    %v1661 = vld [vmem:[%s3 + $0x50] sm:$0xff]
    %v1662 = vld [vmem:[%s3 + $0x58] sm:$0xff]
    %v1663 = vld [vmem:[%s3 + $0x60] sm:$0xff]
    %v1664 = vld [vmem:[%s3 + $0x68] sm:$0xff]
    %v1665 = vld [vmem:[%s3 + $0x70] sm:$0xff]
    %v1666 = vld [vmem:[%s3 + $0x78] sm:$0xff]
    %v1667 = vld [vmem:[%s3 + $0x80] sm:$0xff]
    %v1668 = vld [vmem:[%s3 + $0x88] sm:$0xff]
    %v1669 = vld [vmem:[%s3 + $0x90] sm:$0xff]
    %v1670 = vld [vmem:[%s3 + $0x98] sm:$0xff]
    %v1671 = vld [vmem:[%s3 + $0xa0] sm:$0xff]
    %v1672 = vld [vmem:[%s3 + $0xa8] sm:$0xff]
    %v1673 = vld [vmem:[%s3 + $0xb0] sm:$0xff]
    %v1674 = vld [vmem:[%s3 + $0xb8] sm:$0xff]
    %v1675 = vld [vmem:[%s3 + $0xc0] sm:$0xff]
    %v1676 = vld [vmem:[%s3 + $0xc8] sm:$0xff]
    %v1677 = vld [vmem:[%s3 + $0xd0] sm:$0xff]
    %v1678 = vld [vmem:[%s3 + $0xd8] sm:$0xff]
    %v1679 = vld [vmem:[%s3 + $0xe0] sm:$0xff]
    %v1680 = vld [vmem:[%s3 + $0xe8] sm:$0xff]
    %v1681 = vld [vmem:[%s3 + $0xf0] sm:$0xff]
    %v1682 = vld [vmem:[%s3 + $0xf8] sm:$0xff]
    %v1683 = vld [vmem:[%s3 + $0x100] sm:$0xff]
    %v1684 = vld [vmem:[%s3 + $0x108] sm:$0xff]
    %v1685 = vld [vmem:[%s3 + $0x110] sm:$0xff]
    %v1686 = vld [vmem:[%s3 + $0x118] sm:$0xff]
    %v1687 = vld [vmem:[%s3 + $0x120] sm:$0xff]
    %v1688 = vld [vmem:[%s3 + $0x128] sm:$0xff]
    %v1689 = vld [vmem:[%s3 + $0x130] sm:$0xff]
    %v1690 = vld [vmem:[%s3 + $0x138] sm:$0xff]
    %v1691 = vld [vmem:[%s3 + $0x140] sm:$0xff]
    %v1692 = vld [vmem:[%s3 + $0x148] sm:$0xff]
    %v1693 = vld [vmem:[%s3 + $0x150] sm:$0xff]
    %v1694 = vld [vmem:[%s3 + $0x158] sm:$0xff]
    %v1695 = vld [vmem:[%s3 + $0x160] sm:$0xff]
    %v1696 = vld [vmem:[%s3 + $0x168] sm:$0xff]
    %v1697 = vld [vmem:[%s3 + $0x170] sm:$0xff]
    %v1698 = vld [vmem:[%s3 + $0x178] sm:$0xff]
    %v1699 = vld [vmem:[%s5] sm:$0x7]
    %v1701 = vperm.slane %v1699, 0
    %v1702 = vperm.slane %v1699, 1
    %v1703 = vperm.slane %v1699, 2
    %1707 = vmatpush.msra.mxu0 %v1696
    %1708 = vmatpush.msra.mxu0 %v1693
    %1709 = vmatpush.msra.mxu0 %v1690
    %1710 = vmatpush.msra.mxu0 %v1687
    %1711 = vmatpush.msra.mxu0 %v1684
    %1712 = vmatpush.msra.mxu0 %v1681
    %1713 = vmatpush.msra.mxu0 %v1678
    %1714 = vmatpush.msra.mxu0 %v1675
    %1715 = vmatpush.msra.mxu0 %v1672
    %1716 = vmatpush.msra.mxu0 %v1669
    %1717 = vmatpush.msra.mxu0 %v1666
    %1718 = vmatpush.msra.mxu0 %v1663
    %1719 = vmatpush.msra.mxu0 %v1660
    %1720 = vmatpush.msra.mxu0 %v1657
    %1721 = vmatpush.msra.mxu0 %v1654
    %1722 = vmatpush.msra.mxu0 %v1651
    %1723 = vmatmul.f32.gmra.mxu0 %v1649
    %v1724 = vpop.f32.mrf.mxu0
    %v1725 = vadd.f32 %v1701, %v1724
    %1726 = vdwg.mxu0
    %1727 = vmatpush.msra.mxu0 %v1697
    %1728 = vmatpush.msra.mxu0 %v1694
    %1729 = vmatpush.msra.mxu0 %v1691
    %1730 = vmatpush.msra.mxu0 %v1688
    %1731 = vmatpush.msra.mxu0 %v1685
    %1732 = vmatpush.msra.mxu0 %v1682
    %1733 = vmatpush.msra.mxu0 %v1679
    %1734 = vmatpush.msra.mxu0 %v1676
    %1735 = vmatpush.msra.mxu0 %v1673
    %1736 = vmatpush.msra.mxu0 %v1670
    %1737 = vmatpush.msra.mxu0 %v1667
    %1738 = vmatpush.msra.mxu0 %v1664
    %1739 = vmatpush.msra.mxu0 %v1661
    %1740 = vmatpush.msra.mxu0 %v1658
    %1741 = vmatpush.msra.mxu0 %v1655
    %1742 = vmatpush.msra.mxu0 %v1652
    %1743 = vmatmul.f32.gmra.mxu0 %v1649
    %v1744 = vpop.f32.mrf.mxu0
    %v1745 = vadd.f32 %v1702, %v1744
    %1746 = vdwg.mxu0
    %1747 = vmatpush.msra.mxu0 %v1698
    %1748 = vmatpush.msra.mxu0 %v1695
    %1749 = vmatpush.msra.mxu0 %v1692
    %1750 = vmatpush.msra.mxu0 %v1689
    %1751 = vmatpush.msra.mxu0 %v1686
    %1752 = vmatpush.msra.mxu0 %v1683
    %1753 = vmatpush.msra.mxu0 %v1680
    %1754 = vmatpush.msra.mxu0 %v1677
    %1755 = vmatpush.msra.mxu0 %v1674
    %1756 = vmatpush.msra.mxu0 %v1671
    %1757 = vmatpush.msra.mxu0 %v1668
    %1758 = vmatpush.msra.mxu0 %v1665
    %1759 = vmatpush.msra.mxu0 %v1662
    %1760 = vmatpush.msra.mxu0 %v1659
    %1761 = vmatpush.msra.mxu0 %v1656
    %1762 = vmatpush.msra.mxu0 %v1653
    %1763 = vmatmul.f32.gmra.mxu0 %v1649
    %v1764 = vpop.f32.mrf.mxu0
    %v1765 = vadd.f32 %v1703, %v1764
    %1766 = vdwg.mxu0
    %v1767 = vld [vmem:[#allocation9] sm:$0xff]
    %v1768 = vld [vmem:[#allocation9 + $0x8] sm:$0xff]
    %v1769 = vld [vmem:[#allocation9 + $0x10] sm:$0xff]
    %v1770 = vld [vmem:[#allocation9 + $0x18] sm:$0xff]
    %v1771 = vld [vmem:[#allocation9 + $0x20] sm:$0xff]
    %v1772 = vld [vmem:[#allocation9 + $0x28] sm:$0xff]
    %v1773 = vld [vmem:[#allocation9 + $0x30] sm:$0xff]
    %v1774 = vld [vmem:[#allocation9 + $0x38] sm:$0xff]
    %v1775 = vld [vmem:[#allocation9 + $0x40] sm:$0xff]
    %v1776 = vld [vmem:[#allocation9 + $0x48] sm:$0xff]
    %v1777 = vld [vmem:[#allocation9 + $0x50] sm:$0xff]
    %v1778 = vld [vmem:[#allocation9 + $0x58] sm:$0xff]
    %v1779 = vld [vmem:[#allocation9 + $0x60] sm:$0xff]
    %v1780 = vld [vmem:[#allocation9 + $0x68] sm:$0xff]
    %v1781 = vld [vmem:[#allocation9 + $0x70] sm:$0xff]
    %v1782 = vld [vmem:[#allocation9 + $0x78] sm:$0xff]
    %v1783 = vld [vmem:[#allocation9 + $0x80] sm:$0xff]
    %v1784 = vld [vmem:[#allocation9 + $0x88] sm:$0xff]
    %v1785 = vld [vmem:[#allocation9 + $0x90] sm:$0xff]
    %v1786 = vld [vmem:[#allocation9 + $0x98] sm:$0xff]
    %v1787 = vld [vmem:[#allocation9 + $0xa0] sm:$0xff]
    %v1788 = vld [vmem:[#allocation9 + $0xa8] sm:$0xff]
    %v1789 = vld [vmem:[#allocation9 + $0xb0] sm:$0xff]
    %v1790 = vld [vmem:[#allocation9 + $0xb8] sm:$0xff]
    %v1791 = vld [vmem:[#allocation9 + $0xc0] sm:$0xff]
    %v1792 = vld [vmem:[#allocation9 + $0xc8] sm:$0xff]
    %v1793 = vld [vmem:[#allocation9 + $0xd0] sm:$0xff]
    %v1794 = vld [vmem:[#allocation9 + $0xd8] sm:$0xff]
    %v1795 = vld [vmem:[#allocation9 + $0xe0] sm:$0xff]
    %v1796 = vld [vmem:[#allocation9 + $0xe8] sm:$0xff]
    %v1797 = vld [vmem:[#allocation9 + $0xf0] sm:$0xff]
    %v1798 = vld [vmem:[#allocation9 + $0xf8] sm:$0xff]
    %v1799 = vld [vmem:[#allocation9 + $0x100] sm:$0xff]
    %v1800 = vld [vmem:[#allocation9 + $0x108] sm:$0xff]
    %v1801 = vld [vmem:[#allocation9 + $0x110] sm:$0xff]
    %v1802 = vld [vmem:[#allocation9 + $0x118] sm:$0xff]
    %v1803 = vld [vmem:[#allocation9 + $0x120] sm:$0xff]
    %v1804 = vld [vmem:[#allocation9 + $0x128] sm:$0xff]
    %v1805 = vld [vmem:[#allocation9 + $0x130] sm:$0xff]
    %v1806 = vld [vmem:[#allocation9 + $0x138] sm:$0xff]
    %v1807 = vld [vmem:[#allocation9 + $0x140] sm:$0xff]
    %v1808 = vld [vmem:[#allocation9 + $0x148] sm:$0xff]
    %v1809 = vld [vmem:[#allocation9 + $0x150] sm:$0xff]
    %v1810 = vld [vmem:[#allocation9 + $0x158] sm:$0xff]
    %v1811 = vld [vmem:[#allocation9 + $0x160] sm:$0xff]
    %v1812 = vld [vmem:[#allocation9 + $0x168] sm:$0xff]
    %v1813 = vld [vmem:[#allocation9 + $0x170] sm:$0xff]
    %v1814 = vld [vmem:[#allocation9 + $0x178] sm:$0xff]
    %v1815 = vld [vmem:[%s6] sm:$0x7]
    %v1817 = vperm.slane %v1815, 0
    %v1818 = vperm.slane %v1815, 1
    %v1819 = vperm.slane %v1815, 2
    %1823 = vmatpush.msra.mxu0 %v1812
    %1824 = vmatpush.msra.mxu0 %v1809
    %1825 = vmatpush.msra.mxu0 %v1806
    %1826 = vmatpush.msra.mxu0 %v1803
    %1827 = vmatpush.msra.mxu0 %v1800
    %1828 = vmatpush.msra.mxu0 %v1797
    %1829 = vmatpush.msra.mxu0 %v1794
    %1830 = vmatpush.msra.mxu0 %v1791
    %1831 = vmatpush.msra.mxu0 %v1788
    %1832 = vmatpush.msra.mxu0 %v1785
    %1833 = vmatpush.msra.mxu0 %v1782
    %1834 = vmatpush.msra.mxu0 %v1779
    %1835 = vmatpush.msra.mxu0 %v1776
    %1836 = vmatpush.msra.mxu0 %v1773
    %1837 = vmatpush.msra.mxu0 %v1770
    %1838 = vmatpush.msra.mxu0 %v1767
    %1839 = vmatmul.f32.gmra.mxu0 %v1650
    %v1840 = vpop.f32.mrf.mxu0
    %v1841 = vadd.f32 %v1817, %v1840
    %1842 = vdwg.mxu0
    %1843 = vmatpush.msra.mxu0 %v1813
    %1844 = vmatpush.msra.mxu0 %v1810
    %1845 = vmatpush.msra.mxu0 %v1807
    %1846 = vmatpush.msra.mxu0 %v1804
    %1847 = vmatpush.msra.mxu0 %v1801
    %1848 = vmatpush.msra.mxu0 %v1798
    %1849 = vmatpush.msra.mxu0 %v1795
    %1850 = vmatpush.msra.mxu0 %v1792
    %1851 = vmatpush.msra.mxu0 %v1789
    %1852 = vmatpush.msra.mxu0 %v1786
    %1853 = vmatpush.msra.mxu0 %v1783
    %1854 = vmatpush.msra.mxu0 %v1780
    %1855 = vmatpush.msra.mxu0 %v1777
    %1856 = vmatpush.msra.mxu0 %v1774
    %1857 = vmatpush.msra.mxu0 %v1771
    %1858 = vmatpush.msra.mxu0 %v1768
    %1859 = vmatmul.f32.gmra.mxu0 %v1650
    %v1860 = vpop.f32.mrf.mxu0
    %v1861 = vadd.f32 %v1818, %v1860
    %1862 = vdwg.mxu0
    %1863 = vmatpush.msra.mxu0 %v1814
    %1864 = vmatpush.msra.mxu0 %v1811
    %1865 = vmatpush.msra.mxu0 %v1808
    %1866 = vmatpush.msra.mxu0 %v1805
    %1867 = vmatpush.msra.mxu0 %v1802
    %1868 = vmatpush.msra.mxu0 %v1799
    %1869 = vmatpush.msra.mxu0 %v1796
    %1870 = vmatpush.msra.mxu0 %v1793
    %1871 = vmatpush.msra.mxu0 %v1790
    %1872 = vmatpush.msra.mxu0 %v1787
    %1873 = vmatpush.msra.mxu0 %v1784
    %1874 = vmatpush.msra.mxu0 %v1781
    %1875 = vmatpush.msra.mxu0 %v1778
    %1876 = vmatpush.msra.mxu0 %v1775
    %1877 = vmatpush.msra.mxu0 %v1772
    %1878 = vmatpush.msra.mxu0 %v1769
    %1879 = vmatmul.f32.gmra.mxu0 %v1650
    %v1880 = vpop.f32.mrf.mxu0
    %v1881 = vadd.f32 %v1819, %v1880
    %1882 = vdwg.mxu0
    %v1883 = vld [vmem:[%s1545] sm:$0xff]
    %v1884 = vld [vmem:[%s1545 + $0x8] sm:$0xff]
    %v1885 = vld [vmem:[%s1545 + $0x10] sm:$0xff]
    %v1886 = vld [vmem:[%s1541 + $0x18] sm:$0xff]
    %v1887 = vld [vmem:[%s1541 + $0x20] sm:$0xff]
    %v1888 = vld [vmem:[%s1541 + $0x28] sm:$0xff]
    %v1889 = vadd.f32 %v1883, %v1725
    %v1890 = vxor.u32 %v1889, 2147483648
    %v1891 = vmul.f32 %v1890, 1.442695
    %v1892 = vpow.pop %v1891
    %v1893 = vadd.f32 %v1892, 1.0
    %v1894 = vrcp.pop %v1893
    %v1895 = vmul.f32 %v1893, %v1894
    %v1896 = vsub.f32 1.0, %v1895
    %v1897 = vmul.f32 %v1894, %v1896
    %v1898 = vadd.f32 %v1894, %v1897
    %vm1899 = vweird.f32 %v1893
    %vm1900 = vweird.f32 %v1894
    %vm1901 = vmor %vm1899, %vm1900
    %v1902 = vsel %vm1901, %v1894, %v1898
    %v1903 = vand.u32 2147483647, %v1893
    %vm1904 = vcmp.eq.f32.partialorder %v1903, 8.507059e+37
    %v1905 = vand.u32 %v1893, 2147483648
    %v1906 = vor.u32 1.1754944e-38, %v1905
    %v1907 = vsel %vm1904, %v1906, %v1902
    %v1908 = vmul.f32 1.0, %v1907
    %v1909 = vadd.f32 %v1884, %v1745
    %v1910 = vxor.u32 %v1909, 2147483648
    %v1911 = vmul.f32 %v1910, 1.442695
    %v1912 = vpow.pop %v1911
    %v1913 = vadd.f32 %v1912, 1.0
    %v1914 = vrcp.pop %v1913
    %v1915 = vmul.f32 %v1913, %v1914
    %v1916 = vsub.f32 1.0, %v1915
    %v1917 = vmul.f32 %v1914, %v1916
    %v1918 = vadd.f32 %v1914, %v1917
    %vm1919 = vweird.f32 %v1913
    %vm1920 = vweird.f32 %v1914
    %vm1921 = vmor %vm1919, %vm1920
    %v1922 = vsel %vm1921, %v1914, %v1918
    %v1923 = vand.u32 2147483647, %v1913
    %vm1924 = vcmp.eq.f32.partialorder %v1923, 8.507059e+37
    %v1925 = vand.u32 %v1913, 2147483648
    %v1926 = vor.u32 1.1754944e-38, %v1925
    %v1927 = vsel %vm1924, %v1926, %v1922
    %v1928 = vmul.f32 1.0, %v1927
    %v1929 = vmul.f32 %v1908, %v1765
    %v1930 = vadd.f32 %v1885, %v1929
    %v1931 = vtanh.pop %v1930
    %v1932 = vsub.f32 1.0, %v1928
    %v1933 = vmul.f32 %v1932, %v1931
    %v1934 = vmul.f32 %v1928, %v1649
    %v1935 = vadd.f32 %v1933, %v1934
    %v1936 = vadd.f32 %v1886, %v1841
    %v1937 = vxor.u32 %v1936, 2147483648
    %v1938 = vmul.f32 %v1937, 1.442695
    %v1939 = vpow.pop %v1938
    %v1940 = vadd.f32 %v1939, 1.0
    %v1941 = vrcp.pop %v1940
    %v1942 = vmul.f32 %v1940, %v1941
    %v1943 = vsub.f32 1.0, %v1942
    %v1944 = vmul.f32 %v1941, %v1943
    %v1945 = vadd.f32 %v1941, %v1944
    %vm1946 = vweird.f32 %v1940
    %vm1947 = vweird.f32 %v1941
    %vm1948 = vmor %vm1946, %vm1947
    %v1949 = vsel %vm1948, %v1941, %v1945
    %v1950 = vand.u32 2147483647, %v1940
    %vm1951 = vcmp.eq.f32.partialorder %v1950, 8.507059e+37
    %v1952 = vand.u32 %v1940, 2147483648
    %v1953 = vor.u32 1.1754944e-38, %v1952
    %v1954 = vsel %vm1951, %v1953, %v1949
    %v1955 = vmul.f32 1.0, %v1954
    %v1956 = vadd.f32 %v1887, %v1861
    %v1957 = vxor.u32 %v1956, 2147483648
    %v1958 = vmul.f32 %v1957, 1.442695
    %v1959 = vpow.pop %v1958
    %v1960 = vadd.f32 %v1959, 1.0
    %v1961 = vrcp.pop %v1960
    %v1962 = vmul.f32 %v1960, %v1961
    %v1963 = vsub.f32 1.0, %v1962
    %v1964 = vmul.f32 %v1961, %v1963
    %v1965 = vadd.f32 %v1961, %v1964
    %vm1966 = vweird.f32 %v1960
    %vm1967 = vweird.f32 %v1961
    %vm1968 = vmor %vm1966, %vm1967
    %v1969 = vsel %vm1968, %v1961, %v1965
    %v1970 = vand.u32 2147483647, %v1960
    %vm1971 = vcmp.eq.f32.partialorder %v1970, 8.507059e+37
    %v1972 = vand.u32 %v1960, 2147483648
    %v1973 = vor.u32 1.1754944e-38, %v1972
    %v1974 = vsel %vm1971, %v1973, %v1969
    %v1975 = vmul.f32 1.0, %v1974
    %v1976 = vmul.f32 %v1955, %v1881
    %v1977 = vadd.f32 %v1888, %v1976
    %v1978 = vtanh.pop %v1977
    %v1979 = vsub.f32 1.0, %v1975
    %v1980 = vmul.f32 %v1979, %v1978
    %v1981 = vmul.f32 %v1975, %v1650
    %v1982 = vadd.f32 %v1980, %v1981
    %1983 = vst [vmem:[#allocation2] sm:$0xff] %v1935
    %1984 = vst [vmem:[#allocation3] sm:$0xff] %v1982
    %1985 = vst [vmem:[%s1647] sm:$0xff] %v1935
    %1986 = vst [vmem:[%s1645 + $0x8] sm:$0xff] %v1982
    %v1987 = vld [vmem:[#allocation2] sm:$0xff]
    %v1988 = vld [vmem:[#allocation3] sm:$0xff]
    %v1989 = vld [vmem:[%s3] sm:$0xff]
    %v1990 = vld [vmem:[%s3 + $0x8] sm:$0xff]
    %v1991 = vld [vmem:[%s3 + $0x10] sm:$0xff]
    %v1992 = vld [vmem:[%s3 + $0x18] sm:$0xff]
    %v1993 = vld [vmem:[%s3 + $0x20] sm:$0xff]
    %v1994 = vld [vmem:[%s3 + $0x28] sm:$0xff]
    %v1995 = vld [vmem:[%s3 + $0x30] sm:$0xff]
    %v1996 = vld [vmem:[%s3 + $0x38] sm:$0xff]
    %v1997 = vld [vmem:[%s3 + $0x40] sm:$0xff]
    %v1998 = vld [vmem:[%s3 + $0x48] sm:$0xff]
    %v1999 = vld [vmem:[%s3 + $0x50] sm:$0xff]
    %v2000 = vld [vmem:[%s3 + $0x58] sm:$0xff]
    %v2001 = vld [vmem:[%s3 + $0x60] sm:$0xff]
    %v2002 = vld [vmem:[%s3 + $0x68] sm:$0xff]
    %v2003 = vld [vmem:[%s3 + $0x70] sm:$0xff]
    %v2004 = vld [vmem:[%s3 + $0x78] sm:$0xff]
    %v2005 = vld [vmem:[%s3 + $0x80] sm:$0xff]
    %v2006 = vld [vmem:[%s3 + $0x88] sm:$0xff]
    %v2007 = vld [vmem:[%s3 + $0x90] sm:$0xff]
    %v2008 = vld [vmem:[%s3 + $0x98] sm:$0xff]
    %v2009 = vld [vmem:[%s3 + $0xa0] sm:$0xff]
    %v2010 = vld [vmem:[%s3 + $0xa8] sm:$0xff]
    %v2011 = vld [vmem:[%s3 + $0xb0] sm:$0xff]
    %v2012 = vld [vmem:[%s3 + $0xb8] sm:$0xff]
    %v2013 = vld [vmem:[%s3 + $0xc0] sm:$0xff]
    %v2014 = vld [vmem:[%s3 + $0xc8] sm:$0xff]
    %v2015 = vld [vmem:[%s3 + $0xd0] sm:$0xff]
    %v2016 = vld [vmem:[%s3 + $0xd8] sm:$0xff]
    %v2017 = vld [vmem:[%s3 + $0xe0] sm:$0xff]
    %v2018 = vld [vmem:[%s3 + $0xe8] sm:$0xff]
    %v2019 = vld [vmem:[%s3 + $0xf0] sm:$0xff]
    %v2020 = vld [vmem:[%s3 + $0xf8] sm:$0xff]
    %v2021 = vld [vmem:[%s3 + $0x100] sm:$0xff]
    %v2022 = vld [vmem:[%s3 + $0x108] sm:$0xff]
    %v2023 = vld [vmem:[%s3 + $0x110] sm:$0xff]
    %v2024 = vld [vmem:[%s3 + $0x118] sm:$0xff]
    %v2025 = vld [vmem:[%s3 + $0x120] sm:$0xff]
    %v2026 = vld [vmem:[%s3 + $0x128] sm:$0xff]
    %v2027 = vld [vmem:[%s3 + $0x130] sm:$0xff]
    %v2028 = vld [vmem:[%s3 + $0x138] sm:$0xff]
    %v2029 = vld [vmem:[%s3 + $0x140] sm:$0xff]
    %v2030 = vld [vmem:[%s3 + $0x148] sm:$0xff]
    %v2031 = vld [vmem:[%s3 + $0x150] sm:$0xff]
    %v2032 = vld [vmem:[%s3 + $0x158] sm:$0xff]
    %v2033 = vld [vmem:[%s3 + $0x160] sm:$0xff]
    %v2034 = vld [vmem:[%s3 + $0x168] sm:$0xff]
    %v2035 = vld [vmem:[%s3 + $0x170] sm:$0xff]
    %v2036 = vld [vmem:[%s3 + $0x178] sm:$0xff]
    %v2037 = vld [vmem:[%s5] sm:$0x7]
    %v2039 = vperm.slane %v2037, 0
    %v2040 = vperm.slane %v2037, 1
    %v2041 = vperm.slane %v2037, 2
    %2045 = vmatpush.msra.mxu0 %v2034
    %2046 = vmatpush.msra.mxu0 %v2031
    %2047 = vmatpush.msra.mxu0 %v2028
    %2048 = vmatpush.msra.mxu0 %v2025
    %2049 = vmatpush.msra.mxu0 %v2022
    %2050 = vmatpush.msra.mxu0 %v2019
    %2051 = vmatpush.msra.mxu0 %v2016
    %2052 = vmatpush.msra.mxu0 %v2013
    %2053 = vmatpush.msra.mxu0 %v2010
    %2054 = vmatpush.msra.mxu0 %v2007
    %2055 = vmatpush.msra.mxu0 %v2004
    %2056 = vmatpush.msra.mxu0 %v2001
    %2057 = vmatpush.msra.mxu0 %v1998
    %2058 = vmatpush.msra.mxu0 %v1995
    %2059 = vmatpush.msra.mxu0 %v1992
    %2060 = vmatpush.msra.mxu0 %v1989
    %2061 = vmatmul.f32.gmra.mxu0 %v1987
    %v2062 = vpop.f32.mrf.mxu0
    %v2063 = vadd.f32 %v2039, %v2062
    %2064 = vdwg.mxu0
    %2065 = vmatpush.msra.mxu0 %v2035
    %2066 = vmatpush.msra.mxu0 %v2032
    %2067 = vmatpush.msra.mxu0 %v2029
    %2068 = vmatpush.msra.mxu0 %v2026
    %2069 = vmatpush.msra.mxu0 %v2023
    %2070 = vmatpush.msra.mxu0 %v2020
    %2071 = vmatpush.msra.mxu0 %v2017
    %2072 = vmatpush.msra.mxu0 %v2014
    %2073 = vmatpush.msra.mxu0 %v2011
    %2074 = vmatpush.msra.mxu0 %v2008
    %2075 = vmatpush.msra.mxu0 %v2005
    %2076 = vmatpush.msra.mxu0 %v2002
    %2077 = vmatpush.msra.mxu0 %v1999
    %2078 = vmatpush.msra.mxu0 %v1996
    %2079 = vmatpush.msra.mxu0 %v1993
    %2080 = vmatpush.msra.mxu0 %v1990
    %2081 = vmatmul.f32.gmra.mxu0 %v1987
    %v2082 = vpop.f32.mrf.mxu0
    %v2083 = vadd.f32 %v2040, %v2082
    %2084 = vdwg.mxu0
    %2085 = vmatpush.msra.mxu0 %v2036
    %2086 = vmatpush.msra.mxu0 %v2033
    %2087 = vmatpush.msra.mxu0 %v2030
    %2088 = vmatpush.msra.mxu0 %v2027
    %2089 = vmatpush.msra.mxu0 %v2024
    %2090 = vmatpush.msra.mxu0 %v2021
    %2091 = vmatpush.msra.mxu0 %v2018
    %2092 = vmatpush.msra.mxu0 %v2015
    %2093 = vmatpush.msra.mxu0 %v2012
    %2094 = vmatpush.msra.mxu0 %v2009
    %2095 = vmatpush.msra.mxu0 %v2006
    %2096 = vmatpush.msra.mxu0 %v2003
    %2097 = vmatpush.msra.mxu0 %v2000
    %2098 = vmatpush.msra.mxu0 %v1997
    %2099 = vmatpush.msra.mxu0 %v1994
    %2100 = vmatpush.msra.mxu0 %v1991
    %2101 = vmatmul.f32.gmra.mxu0 %v1987
    %v2102 = vpop.f32.mrf.mxu0
    %v2103 = vadd.f32 %v2041, %v2102
    %2104 = vdwg.mxu0
    %v2105 = vld [vmem:[#allocation9] sm:$0xff]
    %v2106 = vld [vmem:[#allocation9 + $0x8] sm:$0xff]
    %v2107 = vld [vmem:[#allocation9 + $0x10] sm:$0xff]
    %v2108 = vld [vmem:[#allocation9 + $0x18] sm:$0xff]
    %v2109 = vld [vmem:[#allocation9 + $0x20] sm:$0xff]
    %v2110 = vld [vmem:[#allocation9 + $0x28] sm:$0xff]
    %v2111 = vld [vmem:[#allocation9 + $0x30] sm:$0xff]
    %v2112 = vld [vmem:[#allocation9 + $0x38] sm:$0xff]
    %v2113 = vld [vmem:[#allocation9 + $0x40] sm:$0xff]
    %v2114 = vld [vmem:[#allocation9 + $0x48] sm:$0xff]
    %v2115 = vld [vmem:[#allocation9 + $0x50] sm:$0xff]
    %v2116 = vld [vmem:[#allocation9 + $0x58] sm:$0xff]
    %v2117 = vld [vmem:[#allocation9 + $0x60] sm:$0xff]
    %v2118 = vld [vmem:[#allocation9 + $0x68] sm:$0xff]
    %v2119 = vld [vmem:[#allocation9 + $0x70] sm:$0xff]
    %v2120 = vld [vmem:[#allocation9 + $0x78] sm:$0xff]
    %v2121 = vld [vmem:[#allocation9 + $0x80] sm:$0xff]
    %v2122 = vld [vmem:[#allocation9 + $0x88] sm:$0xff]
    %v2123 = vld [vmem:[#allocation9 + $0x90] sm:$0xff]
    %v2124 = vld [vmem:[#allocation9 + $0x98] sm:$0xff]
    %v2125 = vld [vmem:[#allocation9 + $0xa0] sm:$0xff]
    %v2126 = vld [vmem:[#allocation9 + $0xa8] sm:$0xff]
    %v2127 = vld [vmem:[#allocation9 + $0xb0] sm:$0xff]
    %v2128 = vld [vmem:[#allocation9 + $0xb8] sm:$0xff]
    %v2129 = vld [vmem:[#allocation9 + $0xc0] sm:$0xff]
    %v2130 = vld [vmem:[#allocation9 + $0xc8] sm:$0xff]
    %v2131 = vld [vmem:[#allocation9 + $0xd0] sm:$0xff]
    %v2132 = vld [vmem:[#allocation9 + $0xd8] sm:$0xff]
    %v2133 = vld [vmem:[#allocation9 + $0xe0] sm:$0xff]
    %v2134 = vld [vmem:[#allocation9 + $0xe8] sm:$0xff]
    %v2135 = vld [vmem:[#allocation9 + $0xf0] sm:$0xff]
    %v2136 = vld [vmem:[#allocation9 + $0xf8] sm:$0xff]
    %v2137 = vld [vmem:[#allocation9 + $0x100] sm:$0xff]
    %v2138 = vld [vmem:[#allocation9 + $0x108] sm:$0xff]
    %v2139 = vld [vmem:[#allocation9 + $0x110] sm:$0xff]
    %v2140 = vld [vmem:[#allocation9 + $0x118] sm:$0xff]
    %v2141 = vld [vmem:[#allocation9 + $0x120] sm:$0xff]
    %v2142 = vld [vmem:[#allocation9 + $0x128] sm:$0xff]
    %v2143 = vld [vmem:[#allocation9 + $0x130] sm:$0xff]
    %v2144 = vld [vmem:[#allocation9 + $0x138] sm:$0xff]
    %v2145 = vld [vmem:[#allocation9 + $0x140] sm:$0xff]
    %v2146 = vld [vmem:[#allocation9 + $0x148] sm:$0xff]
    %v2147 = vld [vmem:[#allocation9 + $0x150] sm:$0xff]
    %v2148 = vld [vmem:[#allocation9 + $0x158] sm:$0xff]
    %v2149 = vld [vmem:[#allocation9 + $0x160] sm:$0xff]
    %v2150 = vld [vmem:[#allocation9 + $0x168] sm:$0xff]
    %v2151 = vld [vmem:[#allocation9 + $0x170] sm:$0xff]
    %v2152 = vld [vmem:[#allocation9 + $0x178] sm:$0xff]
    %v2153 = vld [vmem:[%s6] sm:$0x7]
    %v2155 = vperm.slane %v2153, 0
    %v2156 = vperm.slane %v2153, 1
    %v2157 = vperm.slane %v2153, 2
    %2161 = vmatpush.msra.mxu0 %v2150
    %2162 = vmatpush.msra.mxu0 %v2147
    %2163 = vmatpush.msra.mxu0 %v2144
    %2164 = vmatpush.msra.mxu0 %v2141
    %2165 = vmatpush.msra.mxu0 %v2138
    %2166 = vmatpush.msra.mxu0 %v2135
    %2167 = vmatpush.msra.mxu0 %v2132
    %2168 = vmatpush.msra.mxu0 %v2129
    %2169 = vmatpush.msra.mxu0 %v2126
    %2170 = vmatpush.msra.mxu0 %v2123
    %2171 = vmatpush.msra.mxu0 %v2120
    %2172 = vmatpush.msra.mxu0 %v2117
    %2173 = vmatpush.msra.mxu0 %v2114
    %2174 = vmatpush.msra.mxu0 %v2111
    %2175 = vmatpush.msra.mxu0 %v2108
    %2176 = vmatpush.msra.mxu0 %v2105
    %2177 = vmatmul.f32.gmra.mxu0 %v1988
    %v2178 = vpop.f32.mrf.mxu0
    %v2179 = vadd.f32 %v2155, %v2178
    %2180 = vdwg.mxu0
    %2181 = vmatpush.msra.mxu0 %v2151
    %2182 = vmatpush.msra.mxu0 %v2148
    %2183 = vmatpush.msra.mxu0 %v2145
    %2184 = vmatpush.msra.mxu0 %v2142
    %2185 = vmatpush.msra.mxu0 %v2139
    %2186 = vmatpush.msra.mxu0 %v2136
    %2187 = vmatpush.msra.mxu0 %v2133
    %2188 = vmatpush.msra.mxu0 %v2130
    %2189 = vmatpush.msra.mxu0 %v2127
    %2190 = vmatpush.msra.mxu0 %v2124
    %2191 = vmatpush.msra.mxu0 %v2121
    %2192 = vmatpush.msra.mxu0 %v2118
    %2193 = vmatpush.msra.mxu0 %v2115
    %2194 = vmatpush.msra.mxu0 %v2112
    %2195 = vmatpush.msra.mxu0 %v2109
    %2196 = vmatpush.msra.mxu0 %v2106
    %2197 = vmatmul.f32.gmra.mxu0 %v1988
    %v2198 = vpop.f32.mrf.mxu0
    %v2199 = vadd.f32 %v2156, %v2198
    %2200 = vdwg.mxu0
    %2201 = vmatpush.msra.mxu0 %v2152
    %2202 = vmatpush.msra.mxu0 %v2149
    %2203 = vmatpush.msra.mxu0 %v2146
    %2204 = vmatpush.msra.mxu0 %v2143
    %2205 = vmatpush.msra.mxu0 %v2140
    %2206 = vmatpush.msra.mxu0 %v2137
    %2207 = vmatpush.msra.mxu0 %v2134
    %2208 = vmatpush.msra.mxu0 %v2131
    %2209 = vmatpush.msra.mxu0 %v2128
    %2210 = vmatpush.msra.mxu0 %v2125
    %2211 = vmatpush.msra.mxu0 %v2122
    %2212 = vmatpush.msra.mxu0 %v2119
    %2213 = vmatpush.msra.mxu0 %v2116
    %2214 = vmatpush.msra.mxu0 %v2113
    %2215 = vmatpush.msra.mxu0 %v2110
    %2216 = vmatpush.msra.mxu0 %v2107
    %2217 = vmatmul.f32.gmra.mxu0 %v1988
    %v2218 = vpop.f32.mrf.mxu0
    %v2219 = vadd.f32 %v2157, %v2218
    %2220 = vdwg.mxu0
    %v2221 = vld [vmem:[%s1204] sm:$0xff]
    %v2222 = vld [vmem:[%s1204 + $0x8] sm:$0xff]
    %v2223 = vld [vmem:[%s1204 + $0x10] sm:$0xff]
    %v2224 = vld [vmem:[#allocation4 + $0x18] sm:$0xff]
    %v2225 = vld [vmem:[#allocation4 + $0x20] sm:$0xff]
    %v2226 = vld [vmem:[#allocation4 + $0x28] sm:$0xff]
    %v2227 = vadd.f32 %v2221, %v2063
    %v2228 = vxor.u32 %v2227, 2147483648
    %v2229 = vmul.f32 %v2228, 1.442695
    %v2230 = vpow.pop %v2229
    %v2231 = vadd.f32 %v2230, 1.0
    %v2232 = vrcp.pop %v2231
    %v2233 = vmul.f32 %v2231, %v2232
    %v2234 = vsub.f32 1.0, %v2233
    %v2235 = vmul.f32 %v2232, %v2234
    %v2236 = vadd.f32 %v2232, %v2235
    %vm2237 = vweird.f32 %v2231
    %vm2238 = vweird.f32 %v2232
    %vm2239 = vmor %vm2237, %vm2238
    %v2240 = vsel %vm2239, %v2232, %v2236
    %v2241 = vand.u32 2147483647, %v2231
    %vm2242 = vcmp.eq.f32.partialorder %v2241, 8.507059e+37
    %v2243 = vand.u32 %v2231, 2147483648
    %v2244 = vor.u32 1.1754944e-38, %v2243
    %v2245 = vsel %vm2242, %v2244, %v2240
    %v2246 = vmul.f32 1.0, %v2245
    %v2247 = vadd.f32 %v2222, %v2083
    %v2248 = vxor.u32 %v2247, 2147483648
    %v2249 = vmul.f32 %v2248, 1.442695
    %v2250 = vpow.pop %v2249
    %v2251 = vadd.f32 %v2250, 1.0
    %v2252 = vrcp.pop %v2251
    %v2253 = vmul.f32 %v2251, %v2252
    %v2254 = vsub.f32 1.0, %v2253
    %v2255 = vmul.f32 %v2252, %v2254
    %v2256 = vadd.f32 %v2252, %v2255
    %vm2257 = vweird.f32 %v2251
    %vm2258 = vweird.f32 %v2252
    %vm2259 = vmor %vm2257, %vm2258
    %v2260 = vsel %vm2259, %v2252, %v2256
    %v2261 = vand.u32 2147483647, %v2251
    %vm2262 = vcmp.eq.f32.partialorder %v2261, 8.507059e+37
    %v2263 = vand.u32 %v2251, 2147483648
    %v2264 = vor.u32 1.1754944e-38, %v2263
    %v2265 = vsel %vm2262, %v2264, %v2260
    %v2266 = vmul.f32 1.0, %v2265
    %v2267 = vmul.f32 %v2246, %v2103
    %v2268 = vadd.f32 %v2223, %v2267
    %v2269 = vtanh.pop %v2268
    %v2270 = vsub.f32 1.0, %v2266
    %v2271 = vmul.f32 %v2270, %v2269
    %v2272 = vmul.f32 %v2266, %v1987
    %v2273 = vadd.f32 %v2271, %v2272
    %v2274 = vadd.f32 %v2224, %v2179
    %v2275 = vxor.u32 %v2274, 2147483648
    %v2276 = vmul.f32 %v2275, 1.442695
    %v2277 = vpow.pop %v2276
    %v2278 = vadd.f32 %v2277, 1.0
    %v2279 = vrcp.pop %v2278
    %v2280 = vmul.f32 %v2278, %v2279
    %v2281 = vsub.f32 1.0, %v2280
    %v2282 = vmul.f32 %v2279, %v2281
    %v2283 = vadd.f32 %v2279, %v2282
    %vm2284 = vweird.f32 %v2278
    %vm2285 = vweird.f32 %v2279
    %vm2286 = vmor %vm2284, %vm2285
    %v2287 = vsel %vm2286, %v2279, %v2283
    %v2288 = vand.u32 2147483647, %v2278
    %vm2289 = vcmp.eq.f32.partialorder %v2288, 8.507059e+37
    %v2290 = vand.u32 %v2278, 2147483648
    %v2291 = vor.u32 1.1754944e-38, %v2290
    %v2292 = vsel %vm2289, %v2291, %v2287
    %v2293 = vmul.f32 1.0, %v2292
    %v2294 = vadd.f32 %v2225, %v2199
    %v2295 = vxor.u32 %v2294, 2147483648
    %v2296 = vmul.f32 %v2295, 1.442695
    %v2297 = vpow.pop %v2296
    %v2298 = vadd.f32 %v2297, 1.0
    %v2299 = vrcp.pop %v2298
    %v2300 = vmul.f32 %v2298, %v2299
    %v2301 = vsub.f32 1.0, %v2300
    %v2302 = vmul.f32 %v2299, %v2301
    %v2303 = vadd.f32 %v2299, %v2302
    %vm2304 = vweird.f32 %v2298
    %vm2305 = vweird.f32 %v2299
    %vm2306 = vmor %vm2304, %vm2305
    %v2307 = vsel %vm2306, %v2299, %v2303
    %v2308 = vand.u32 2147483647, %v2298
    %vm2309 = vcmp.eq.f32.partialorder %v2308, 8.507059e+37
    %v2310 = vand.u32 %v2298, 2147483648
    %v2311 = vor.u32 1.1754944e-38, %v2310
    %v2312 = vsel %vm2309, %v2311, %v2307
    %v2313 = vmul.f32 1.0, %v2312
    %v2314 = vmul.f32 %v2293, %v2219
    %v2315 = vadd.f32 %v2226, %v2314
    %v2316 = vtanh.pop %v2315
    %v2317 = vsub.f32 1.0, %v2313
    %v2318 = vmul.f32 %v2317, %v2316
    %v2319 = vmul.f32 %v2313, %v1988
    %v2320 = vadd.f32 %v2318, %v2319
    %2321 = vst [vmem:[#allocation2] sm:$0xff] %v2273
    %2322 = vst [vmem:[#allocation3] sm:$0xff] %v2320
    %2323 = vst [vmem:[%s1305] sm:$0xff] %v2273
    %2324 = vst [vmem:[#allocation5 + $0x8] sm:$0xff] %v2320
    %v2325 = vld [vmem:[#allocation5] sm:$0xff]
    %v2326 = vld [vmem:[#allocation5 + $0x8] sm:$0xff]
    %v2327 = vld [vmem:[#allocation5 + $0x10] sm:$0xff]
    %v2328 = vld [vmem:[#allocation5 + $0x18] sm:$0xff]
    %v2329 = vld [vmem:[#allocation5 + $0x20] sm:$0xff]
    %v2330 = vld [vmem:[#allocation5 + $0x28] sm:$0xff]
    %v2331 = vld [vmem:[#allocation5 + $0x30] sm:$0xff]
    %v2332 = vld [vmem:[#allocation5 + $0x38] sm:$0xff]
    %v2333 = vld [vmem:[%s7] sm:$0xff]
    %v2334 = vld [vmem:[%s7 + $0x8] sm:$0xff]
    %v2335 = vld [vmem:[%s7 + $0x10] sm:$0xff]
    %v2336 = vld [vmem:[%s7 + $0x18] sm:$0xff]
    %v2337 = vld [vmem:[%s7 + $0x20] sm:$0xff]
    %v2338 = vld [vmem:[%s7 + $0x28] sm:$0xff]
    %v2339 = vld [vmem:[%s7 + $0x30] sm:$0xff]
    %v2340 = vld [vmem:[%s7 + $0x38] sm:$0xff]
    %v2341 = vld [vmem:[%s7 + $0x40] sm:$0xff]
    %v2342 = vld [vmem:[%s7 + $0x48] sm:$0xff]
    %v2343 = vld [vmem:[%s7 + $0x50] sm:$0xff]
    %v2344 = vld [vmem:[%s7 + $0x58] sm:$0xff]
    %v2345 = vld [vmem:[%s7 + $0x60] sm:$0xff]
    %v2346 = vld [vmem:[%s7 + $0x68] sm:$0xff]
    %v2347 = vld [vmem:[%s7 + $0x70] sm:$0xff]
    %v2348 = vld [vmem:[%s7 + $0x78] sm:$0xff]
    %v2349 = vld [vmem:[%s7 + $0x80] sm:$0xff]
    %v2350 = vld [vmem:[%s7 + $0x88] sm:$0xff]
    %v2351 = vld [vmem:[%s7 + $0x90] sm:$0xff]
    %v2352 = vld [vmem:[%s7 + $0x98] sm:$0xff]
    %v2353 = vld [vmem:[%s7 + $0xa0] sm:$0xff]
    %v2354 = vld [vmem:[%s7 + $0xa8] sm:$0xff]
    %v2355 = vld [vmem:[%s7 + $0xb0] sm:$0xff]
    %v2356 = vld [vmem:[%s7 + $0xb8] sm:$0xff]
    %v2357 = vld [vmem:[%s7 + $0xc0] sm:$0xff]
    %v2358 = vld [vmem:[%s7 + $0xc8] sm:$0xff]
    %v2359 = vld [vmem:[%s7 + $0xd0] sm:$0xff]
    %v2360 = vld [vmem:[%s7 + $0xd8] sm:$0xff]
    %v2361 = vld [vmem:[%s7 + $0xe0] sm:$0xff]
    %v2362 = vld [vmem:[%s7 + $0xe8] sm:$0xff]
    %v2363 = vld [vmem:[%s7 + $0xf0] sm:$0xff]
    %v2364 = vld [vmem:[%s7 + $0xf8] sm:$0xff]
    %v2365 = vld [vmem:[%s7 + $0x100] sm:$0xff]
    %v2366 = vld [vmem:[%s7 + $0x108] sm:$0xff]
    %v2367 = vld [vmem:[%s7 + $0x110] sm:$0xff]
    %v2368 = vld [vmem:[%s7 + $0x118] sm:$0xff]
    %v2369 = vld [vmem:[%s7 + $0x120] sm:$0xff]
    %v2370 = vld [vmem:[%s7 + $0x128] sm:$0xff]
    %v2371 = vld [vmem:[%s7 + $0x130] sm:$0xff]
    %v2372 = vld [vmem:[%s7 + $0x138] sm:$0xff]
    %v2373 = vld [vmem:[%s7 + $0x140] sm:$0xff]
    %v2374 = vld [vmem:[%s7 + $0x148] sm:$0xff]
    %v2375 = vld [vmem:[%s7 + $0x150] sm:$0xff]
    %v2376 = vld [vmem:[%s7 + $0x158] sm:$0xff]
    %v2377 = vld [vmem:[%s7 + $0x160] sm:$0xff]
    %v2378 = vld [vmem:[%s7 + $0x168] sm:$0xff]
    %v2379 = vld [vmem:[%s7 + $0x170] sm:$0xff]
    %v2380 = vld [vmem:[%s7 + $0x178] sm:$0xff]
    %v2381 = vld [vmem:[%s7 + $0x180] sm:$0xff]
    %v2382 = vld [vmem:[%s7 + $0x188] sm:$0xff]
    %v2383 = vld [vmem:[%s7 + $0x190] sm:$0xff]
    %v2384 = vld [vmem:[%s7 + $0x198] sm:$0xff]
    %v2385 = vld [vmem:[%s7 + $0x1a0] sm:$0xff]
    %v2386 = vld [vmem:[%s7 + $0x1a8] sm:$0xff]
    %v2387 = vld [vmem:[%s7 + $0x1b0] sm:$0xff]
    %v2388 = vld [vmem:[%s7 + $0x1b8] sm:$0xff]
    %v2389 = vld [vmem:[%s7 + $0x1c0] sm:$0xff]
    %v2390 = vld [vmem:[%s7 + $0x1c8] sm:$0xff]
    %v2391 = vld [vmem:[%s7 + $0x1d0] sm:$0xff]
    %v2392 = vld [vmem:[%s7 + $0x1d8] sm:$0xff]
    %v2393 = vld [vmem:[%s7 + $0x1e0] sm:$0xff]
    %v2394 = vld [vmem:[%s7 + $0x1e8] sm:$0xff]
    %v2395 = vld [vmem:[%s7 + $0x1f0] sm:$0xff]
    %v2396 = vld [vmem:[%s7 + $0x1f8] sm:$0xff]
    %2397 = vmatpush.msra.mxu0 %v2363
    %2398 = vmatpush.msra.mxu0 %v2361
    %2399 = vmatpush.msra.mxu0 %v2359
    %2400 = vmatpush.msra.mxu0 %v2357
    %2401 = vmatpush.msra.mxu0 %v2355
    %2402 = vmatpush.msra.mxu0 %v2353
    %2403 = vmatpush.msra.mxu0 %v2351
    %2404 = vmatpush.msra.mxu0 %v2349
    %2405 = vmatpush.msra.mxu0 %v2347
    %2406 = vmatpush.msra.mxu0 %v2345
    %2407 = vmatpush.msra.mxu0 %v2343
    %2408 = vmatpush.msra.mxu0 %v2341
    %2409 = vmatpush.msra.mxu0 %v2339
    %2410 = vmatpush.msra.mxu0 %v2337
    %2411 = vmatpush.msra.mxu0 %v2335
    %2412 = vmatpush.msra.mxu0 %v2333
    %2413 = vmatmul.f32.gmra.mxu0 %v2325
    %v2414 = vpop.f32.mrf.mxu0
    %v2415 = vadd.f32 0.0, %v2414
    %2416 = vmatmul.f32.gmra.mxu0 %v2327
    %v2417 = vpop.f32.mrf.mxu0
    %v2418 = vadd.f32 0.0, %v2417
    %2419 = vmatmul.f32.gmra.mxu0 %v2329
    %v2420 = vpop.f32.mrf.mxu0
    %v2421 = vadd.f32 0.0, %v2420
    %2422 = vmatmul.f32.gmra.mxu0 %v2331
    %v2423 = vpop.f32.mrf.mxu0
    %v2424 = vadd.f32 0.0, %v2423
    %2425 = vdwg.mxu0
    %2426 = vmatpush.msra.mxu0 %v2395
    %2427 = vmatpush.msra.mxu0 %v2393
    %2428 = vmatpush.msra.mxu0 %v2391
    %2429 = vmatpush.msra.mxu0 %v2389
    %2430 = vmatpush.msra.mxu0 %v2387
    %2431 = vmatpush.msra.mxu0 %v2385
    %2432 = vmatpush.msra.mxu0 %v2383
    %2433 = vmatpush.msra.mxu0 %v2381
    %2434 = vmatpush.msra.mxu0 %v2379
    %2435 = vmatpush.msra.mxu0 %v2377
    %2436 = vmatpush.msra.mxu0 %v2375
    %2437 = vmatpush.msra.mxu0 %v2373
    %2438 = vmatpush.msra.mxu0 %v2371
    %2439 = vmatpush.msra.mxu0 %v2369
    %2440 = vmatpush.msra.mxu0 %v2367
    %2441 = vmatpush.msra.mxu0 %v2365
    %2442 = vmatmul.f32.gmra.mxu0 %v2326
    %v2443 = vpop.f32.mrf.mxu0
    %v2444 = vadd.f32 %v2415, %v2443
    %2445 = vmatmul.f32.gmra.mxu0 %v2328
    %v2446 = vpop.f32.mrf.mxu0
    %v2447 = vadd.f32 %v2418, %v2446
    %2448 = vmatmul.f32.gmra.mxu0 %v2330
    %v2449 = vpop.f32.mrf.mxu0
    %v2450 = vadd.f32 %v2421, %v2449
    %2451 = vmatmul.f32.gmra.mxu0 %v2332
    %v2452 = vpop.f32.mrf.mxu0
    %v2453 = vadd.f32 %v2424, %v2452
    %2454 = vdwg.mxu0
    %2455 = vmatpush.msra.mxu0 %v2364
    %2456 = vmatpush.msra.mxu0 %v2362
    %2457 = vmatpush.msra.mxu0 %v2360
    %2458 = vmatpush.msra.mxu0 %v2358
    %2459 = vmatpush.msra.mxu0 %v2356
    %2460 = vmatpush.msra.mxu0 %v2354
    %2461 = vmatpush.msra.mxu0 %v2352
    %2462 = vmatpush.msra.mxu0 %v2350
    %2463 = vmatpush.msra.mxu0 %v2348
    %2464 = vmatpush.msra.mxu0 %v2346
    %2465 = vmatpush.msra.mxu0 %v2344
    %2466 = vmatpush.msra.mxu0 %v2342
    %2467 = vmatpush.msra.mxu0 %v2340
    %2468 = vmatpush.msra.mxu0 %v2338
    %2469 = vmatpush.msra.mxu0 %v2336
    %2470 = vmatpush.msra.mxu0 %v2334
    %2471 = vmatmul.f32.gmra.mxu0 %v2325
    %v2472 = vpop.f32.mrf.mxu0
    %v2473 = vadd.f32 0.0, %v2472
    %2474 = vmatmul.f32.gmra.mxu0 %v2327
    %v2475 = vpop.f32.mrf.mxu0
    %v2476 = vadd.f32 0.0, %v2475
    %2477 = vmatmul.f32.gmra.mxu0 %v2329
    %v2478 = vpop.f32.mrf.mxu0
    %v2479 = vadd.f32 0.0, %v2478
    %2480 = vmatmul.f32.gmra.mxu0 %v2331
    %v2481 = vpop.f32.mrf.mxu0
    %v2482 = vadd.f32 0.0, %v2481
    %2483 = vdwg.mxu0
    %2484 = vmatpush.msra.mxu0 %v2396
    %2485 = vmatpush.msra.mxu0 %v2394
    %2486 = vmatpush.msra.mxu0 %v2392
    %2487 = vmatpush.msra.mxu0 %v2390
    %2488 = vmatpush.msra.mxu0 %v2388
    %2489 = vmatpush.msra.mxu0 %v2386
    %2490 = vmatpush.msra.mxu0 %v2384
    %2491 = vmatpush.msra.mxu0 %v2382
    %2492 = vmatpush.msra.mxu0 %v2380
    %2493 = vmatpush.msra.mxu0 %v2378
    %2494 = vmatpush.msra.mxu0 %v2376
    %2495 = vmatpush.msra.mxu0 %v2374
    %2496 = vmatpush.msra.mxu0 %v2372
    %2497 = vmatpush.msra.mxu0 %v2370
    %2498 = vmatpush.msra.mxu0 %v2368
    %2499 = vmatpush.msra.mxu0 %v2366
    %2500 = vmatmul.f32.gmra.mxu0 %v2326
    %v2501 = vpop.f32.mrf.mxu0
    %v2502 = vadd.f32 %v2473, %v2501
    %2503 = vmatmul.f32.gmra.mxu0 %v2328
    %v2504 = vpop.f32.mrf.mxu0
    %v2505 = vadd.f32 %v2476, %v2504
    %2506 = vmatmul.f32.gmra.mxu0 %v2330
    %v2507 = vpop.f32.mrf.mxu0
    %v2508 = vadd.f32 %v2479, %v2507
    %2509 = vmatmul.f32.gmra.mxu0 %v2332
    %v2510 = vpop.f32.mrf.mxu0
    %v2511 = vadd.f32 %v2482, %v2510
    %2512 = vdwg.mxu0
    %v2517 = vrot.slane %v2502, 1
    %v2518 = vrot.slane %v2505, 1
    %v2519 = vrot.slane %v2508, 1
    %v2520 = vrot.slane %v2511, 1
    %v2525 = vadd.f32 %v2444, %v2517
    %v2526 = vadd.f32 %v2447, %v2518
    %v2527 = vadd.f32 %v2450, %v2519
    %v2528 = vadd.f32 %v2453, %v2520
    %v2529 = vld [vmem:[%s8] sm:$0x1]
    %v2531 = vperm.slane %v2529, 0
    %v2533 = vadd.f32 %v2525, %v2531
    %v2534 = vadd.f32 %v2526, %v2531
    %v2535 = vadd.f32 %v2527, %v2531
    %v2536 = vadd.f32 %v2528, %v2531
    %v2537 = vmax.f32 %v2533, 0.0
    %v2538 = vmax.f32 %v2534, 0.0
    %v2539 = vmax.f32 %v2535, 0.0
    %v2540 = vmax.f32 %v2536, 0.0
    %v2545 = vrot.slane %v2537, 1
    %v2546 = vrot.slane %v2537, 2
    %v2547 = vrot.slane %v2537, 3
    %v2548 = vrot.slane %v2537, 4
    %v2549 = vrot.slane %v2537, 5
    %v2550 = vrot.slane %v2537, 6
    %v2551 = vrot.slane %v2538, 1
    %v2552 = vrot.slane %v2538, 2
    %v2553 = vrot.slane %v2538, 3
    %v2554 = vrot.slane %v2538, 4
    %v2555 = vrot.slane %v2538, 5
    %v2556 = vrot.slane %v2538, 6
    %v2557 = vrot.slane %v2539, 1
    %v2558 = vrot.slane %v2539, 2
    %v2559 = vrot.slane %v2539, 3
    %v2560 = vrot.slane %v2539, 4
    %v2561 = vrot.slane %v2539, 5
    %v2562 = vrot.slane %v2539, 6
    %v2563 = vrot.slane %v2540, 1
    %v2564 = vrot.slane %v2540, 2
    %v2565 = vrot.slane %v2540, 3
    %v2566 = vrot.slane %v2540, 4
    %v2567 = vrot.slane %v2540, 5
    %v2568 = vrot.slane %v2540, 6
    %v2569 = vld [vmem:[%s9] sm:$0xff]
    %v2570 = vld [vmem:[%s9 + $0x8] sm:$0xff]
    %v2571 = vld [vmem:[%s9 + $0x10] sm:$0xff]
    %v2572 = vld [vmem:[%s9 + $0x18] sm:$0xff]
    %v2573 = vld [vmem:[%s9 + $0x20] sm:$0xff]
    %v2574 = vld [vmem:[%s9 + $0x28] sm:$0xff]
    %v2575 = vld [vmem:[%s9 + $0x30] sm:$0xff]
    %v2576 = vld [vmem:[%s9 + $0x38] sm:$0xff]
    %v2577 = vld [vmem:[%s9 + $0x40] sm:$0xff]
    %v2578 = vld [vmem:[%s9 + $0x48] sm:$0xff]
    %v2579 = vld [vmem:[%s9 + $0x50] sm:$0xff]
    %v2580 = vld [vmem:[%s9 + $0x58] sm:$0xff]
    %v2581 = vld [vmem:[%s9 + $0x60] sm:$0xff]
    %v2582 = vld [vmem:[%s9 + $0x68] sm:$0xff]
    %v2583 = vld [vmem:[%s9 + $0x70] sm:$0xff]
    %v2584 = vld [vmem:[%s9 + $0x78] sm:$0xff]
    %2585 = vst [vmem:[#allocation1] ss:$9 sm:$0xff] %v2537
    %s2586 = scalar_lea.vmem [#allocation1], 1
    %2587 = vst [vmem:[%s2586] ss:$9 sm:$0xff] %v2545
    %s2588 = scalar_lea.vmem [#allocation1], 2
    %2589 = vst [vmem:[%s2588] ss:$9 sm:$0xff] %v2546
    %s2590 = scalar_lea.vmem [#allocation1], 3
    %2591 = vst [vmem:[%s2590] ss:$9 sm:$0xff] %v2547
    %s2592 = scalar_lea.vmem [#allocation1], 4
    %2593 = vst [vmem:[%s2592] ss:$9 sm:$0xff] %v2548
    %s2594 = scalar_lea.vmem [#allocation1], 5
    %2595 = vst [vmem:[%s2594] ss:$9 sm:$0xff] %v2549
    %s2596 = scalar_lea.vmem [#allocation1], 6
    %2597 = vst [vmem:[%s2596] ss:$9 sm:$0xff] %v2550
    %s2598 = scalar_lea.vmem [#allocation1], 7
    %2599 = vst [vmem:[%s2598] ss:$9 sm:$0xff] %v2538
    %v2600 = vld [vmem:[#allocation1] sm:$0xff]
    %2601 = vst [vmem:[#allocation1] ss:$9 sm:$0xff] %v2551
    %2602 = vst [vmem:[%s2586] ss:$9 sm:$0xff] %v2552
    %2603 = vst [vmem:[%s2588] ss:$9 sm:$0xff] %v2553
    %2604 = vst [vmem:[%s2590] ss:$9 sm:$0xff] %v2554
    %2605 = vst [vmem:[%s2592] ss:$9 sm:$0xff] %v2555
    %2606 = vst [vmem:[%s2594] ss:$9 sm:$0xff] %v2556
    %2607 = vst [vmem:[%s2596] ss:$9 sm:$0xff] %v2539
    %2608 = vst [vmem:[%s2598] ss:$9 sm:$0xff] %v2557
    %v2609 = vld [vmem:[#allocation1] sm:$0xff]
    %2610 = vst [vmem:[#allocation1] ss:$9 sm:$0xff] %v2558
    %2611 = vst [vmem:[%s2586] ss:$9 sm:$0xff] %v2559
    %2612 = vst [vmem:[%s2588] ss:$9 sm:$0xff] %v2560
    %2613 = vst [vmem:[%s2590] ss:$9 sm:$0xff] %v2561
    %2614 = vst [vmem:[%s2592] ss:$9 sm:$0xff] %v2562
    %2615 = vst [vmem:[%s2594] ss:$9 sm:$0xff] %v2540
    %2616 = vst [vmem:[%s2596] ss:$9 sm:$0xff] %v2563
    %2617 = vst [vmem:[%s2598] ss:$9 sm:$0xff] %v2564
    %v2618 = vld [vmem:[#allocation1] sm:$0xff]
    %2619 = vst [vmem:[#allocation1] ss:$9 sm:$0xff] %v2565
    %2620 = vst [vmem:[%s2586] ss:$9 sm:$0xff] %v2566
    %2621 = vst [vmem:[%s2588] ss:$9 sm:$0xff] %v2567
    %2622 = vst [vmem:[%s2590] ss:$9 sm:$0xff] %v2568
    %v2623 = vld [vmem:[#allocation1] sm:$0xff]
    %2628 = vmatpush.msra.mxu0 %v2584
    %2629 = vmatpush.msra.mxu0 %v2583
    %2630 = vmatpush.msra.mxu0 %v2582
    %2631 = vmatpush.msra.mxu0 %v2581
    %2632 = vmatpush.msra.mxu0 %v2580
    %2633 = vmatpush.msra.mxu0 %v2579
    %2634 = vmatpush.msra.mxu0 %v2578
    %2635 = vmatpush.msra.mxu0 %v2577
    %2636 = vmatpush.msra.mxu0 %v2576
    %2637 = vmatpush.msra.mxu0 %v2575
    %2638 = vmatpush.msra.mxu0 %v2574
    %2639 = vmatpush.msra.mxu0 %v2573
    %2640 = vmatpush.msra.mxu0 %v2572
    %2641 = vmatpush.msra.mxu0 %v2571
    %2642 = vmatpush.msra.mxu0 %v2570
    %2643 = vmatpush.msra.mxu0 %v2569
    %2644 = vmatmul.f32.gmra.mxu0 %v2600
    %v2645 = vpop.f32.mrf.mxu0
    %v2646 = vadd.f32 0.0, %v2645
    %2647 = vmatmul.f32.gmra.mxu0 %v2609
    %v2648 = vpop.f32.mrf.mxu0
    %v2649 = vadd.f32 0.0, %v2648
    %2650 = vmatmul.f32.gmra.mxu0 %v2618
    %v2651 = vpop.f32.mrf.mxu0
    %v2652 = vadd.f32 0.0, %v2651
    %2653 = vmatmul.f32.gmra.mxu0 %v2623
    %v2654 = vpop.f32.mrf.mxu0
    %v2655 = vadd.f32 0.0, %v2654
    %2656 = vdwg.mxu0
    %v2661 = vrot.slane %v2646, 1
    %v2662 = vrot.slane %v2646, 2
    %v2663 = vrot.slane %v2646, 3
    %v2664 = vrot.slane %v2646, 4
    %v2665 = vrot.slane %v2646, 5
    %v2666 = vrot.slane %v2646, 6
    %v2667 = vrot.slane %v2646, 7
    %v2668 = vrot.slane %v2649, 1
    %v2669 = vrot.slane %v2649, 2
    %v2670 = vrot.slane %v2649, 3
    %v2671 = vrot.slane %v2649, 4
    %v2672 = vrot.slane %v2649, 5
    %v2673 = vrot.slane %v2649, 6
    %v2674 = vrot.slane %v2649, 7
    %v2675 = vrot.slane %v2652, 1
    %v2676 = vrot.slane %v2652, 2
    %v2677 = vrot.slane %v2652, 3
    %v2678 = vrot.slane %v2652, 4
    %v2679 = vrot.slane %v2652, 5
    %v2680 = vrot.slane %v2652, 6
    %v2681 = vrot.slane %v2652, 7
    %v2682 = vrot.slane %v2655, 1
    %v2683 = vrot.slane %v2655, 2
    %v2684 = vrot.slane %v2655, 3
    %2685 = vst [vmem:[#allocation1] ss:$9 sm:$0xff] %v2646
    %s2686 = scalar_lea.vmem [#allocation1], 1
    %2687 = vst [vmem:[%s2686] ss:$9 sm:$0xff] %v2661
    %s2688 = scalar_lea.vmem [#allocation1], 2
    %2689 = vst [vmem:[%s2688] ss:$9 sm:$0xff] %v2662
    %s2690 = scalar_lea.vmem [#allocation1], 3
    %2691 = vst [vmem:[%s2690] ss:$9 sm:$0xff] %v2663
    %s2692 = scalar_lea.vmem [#allocation1], 4
    %2693 = vst [vmem:[%s2692] ss:$9 sm:$0xff] %v2664
    %s2694 = scalar_lea.vmem [#allocation1], 5
    %2695 = vst [vmem:[%s2694] ss:$9 sm:$0xff] %v2665
    %s2696 = scalar_lea.vmem [#allocation1], 6
    %2697 = vst [vmem:[%s2696] ss:$9 sm:$0xff] %v2666
    %v2698 = vld [vmem:[#allocation1] sm:$0xff]
    %2700 = vmatpush.xpose.msra.mxu0 0.0
    %2701 = vmatpush.xpose.msra.mxu0 0.0
    %2702 = vmatpush.xpose.msra.mxu0 0.0
    %2703 = vmatpush.xpose.msra.mxu0 0.0
    %2704 = vmatpush.xpose.msra.mxu0 0.0
    %2705 = vmatpush.xpose.msra.mxu0 0.0
    %2706 = vmatpush.xpose.msra.mxu0 0.0
    %2707 = vmatpush.xpose.msra.mxu0 0.0
    %2708 = vmatpush.xpose.msra.mxu0 0.0
    %2709 = vmatpush.xpose.msra.mxu0 0.0
    %2710 = vmatpush.xpose.msra.mxu0 0.0
    %2711 = vmatpush.xpose.msra.mxu0 0.0
    %2712 = vmatpush.xpose.msra.mxu0 0.0
    %2713 = vmatpush.xpose.msra.mxu0 0.0
    %2714 = vmatpush.xpose.msra.mxu0 0.0
    %2715 = vmatpush.xpose.msra.mxu0 %v2537
    %2716 = vmatmul.f32.gmra.mxu0 %v2698
    %v2717 = vpop.f32.mrf.mxu0
    %v2718 = vadd.f32 0.0, %v2717
    %2719 = vdwg.mxu0
    %2720 = vst [vmem:[#allocation1] ss:$9 sm:$0xff] %v2667
    %s2721 = scalar_lea.vmem [#allocation1], 1
    %2722 = vst [vmem:[%s2721] ss:$9 sm:$0xff] %v2649
    %s2723 = scalar_lea.vmem [#allocation1], 2
    %2724 = vst [vmem:[%s2723] ss:$9 sm:$0xff] %v2668
    %s2725 = scalar_lea.vmem [#allocation1], 3
    %2726 = vst [vmem:[%s2725] ss:$9 sm:$0xff] %v2669
    %s2727 = scalar_lea.vmem [#allocation1], 4
    %2728 = vst [vmem:[%s2727] ss:$9 sm:$0xff] %v2670
    %s2729 = scalar_lea.vmem [#allocation1], 5
    %2730 = vst [vmem:[%s2729] ss:$9 sm:$0xff] %v2671
    %s2731 = scalar_lea.vmem [#allocation1], 6
    %2732 = vst [vmem:[%s2731] ss:$9 sm:$0xff] %v2672
    %v2733 = vld [vmem:[#allocation1] sm:$0xff]
    %2735 = vmatpush.xpose.msra.mxu0 0.0
    %2736 = vmatpush.xpose.msra.mxu0 0.0
    %2737 = vmatpush.xpose.msra.mxu0 0.0
    %2738 = vmatpush.xpose.msra.mxu0 0.0
    %2739 = vmatpush.xpose.msra.mxu0 0.0
    %2740 = vmatpush.xpose.msra.mxu0 0.0
    %2741 = vmatpush.xpose.msra.mxu0 0.0
    %2742 = vmatpush.xpose.msra.mxu0 0.0
    %2743 = vmatpush.xpose.msra.mxu0 0.0
    %2744 = vmatpush.xpose.msra.mxu0 0.0
    %2745 = vmatpush.xpose.msra.mxu0 0.0
    %2746 = vmatpush.xpose.msra.mxu0 0.0
    %2747 = vmatpush.xpose.msra.mxu0 0.0
    %2748 = vmatpush.xpose.msra.mxu0 0.0
    %2749 = vmatpush.xpose.msra.mxu0 0.0
    %2750 = vmatpush.xpose.msra.mxu0 %v2538
    %2751 = vmatmul.f32.gmra.mxu0 %v2733
    %v2752 = vpop.f32.mrf.mxu0
    %v2753 = vadd.f32 0.0, %v2752
    %2754 = vdwg.mxu0
    %2755 = vst [vmem:[#allocation1] ss:$9 sm:$0xff] %v2673
    %s2756 = scalar_lea.vmem [#allocation1], 1
    %2757 = vst [vmem:[%s2756] ss:$9 sm:$0xff] %v2674
    %s2758 = scalar_lea.vmem [#allocation1], 2
    %2759 = vst [vmem:[%s2758] ss:$9 sm:$0xff] %v2652
    %s2760 = scalar_lea.vmem [#allocation1], 3
    %2761 = vst [vmem:[%s2760] ss:$9 sm:$0xff] %v2675
    %s2762 = scalar_lea.vmem [#allocation1], 4
    %2763 = vst [vmem:[%s2762] ss:$9 sm:$0xff] %v2676
    %s2764 = scalar_lea.vmem [#allocation1], 5
    %2765 = vst [vmem:[%s2764] ss:$9 sm:$0xff] %v2677
    %s2766 = scalar_lea.vmem [#allocation1], 6
    %2767 = vst [vmem:[%s2766] ss:$9 sm:$0xff] %v2678
    %v2768 = vld [vmem:[#allocation1] sm:$0xff]
    %2770 = vmatpush.xpose.msra.mxu0 0.0
    %2771 = vmatpush.xpose.msra.mxu0 0.0
    %2772 = vmatpush.xpose.msra.mxu0 0.0
    %2773 = vmatpush.xpose.msra.mxu0 0.0
    %2774 = vmatpush.xpose.msra.mxu0 0.0
    %2775 = vmatpush.xpose.msra.mxu0 0.0
    %2776 = vmatpush.xpose.msra.mxu0 0.0
    %2777 = vmatpush.xpose.msra.mxu0 0.0
    %2778 = vmatpush.xpose.msra.mxu0 0.0
    %2779 = vmatpush.xpose.msra.mxu0 0.0
    %2780 = vmatpush.xpose.msra.mxu0 0.0
    %2781 = vmatpush.xpose.msra.mxu0 0.0
    %2782 = vmatpush.xpose.msra.mxu0 0.0
    %2783 = vmatpush.xpose.msra.mxu0 0.0
    %2784 = vmatpush.xpose.msra.mxu0 0.0
    %2785 = vmatpush.xpose.msra.mxu0 %v2539
    %2786 = vmatmul.f32.gmra.mxu0 %v2768
    %v2787 = vpop.f32.mrf.mxu0
    %v2788 = vadd.f32 0.0, %v2787
    %2789 = vdwg.mxu0
    %2790 = vst [vmem:[#allocation1] ss:$9 sm:$0xff] %v2679
    %s2791 = scalar_lea.vmem [#allocation1], 1
    %2792 = vst [vmem:[%s2791] ss:$9 sm:$0xff] %v2680
    %s2793 = scalar_lea.vmem [#allocation1], 2
    %2794 = vst [vmem:[%s2793] ss:$9 sm:$0xff] %v2681
    %s2795 = scalar_lea.vmem [#allocation1], 3
    %2796 = vst [vmem:[%s2795] ss:$9 sm:$0xff] %v2655
    %s2797 = scalar_lea.vmem [#allocation1], 4
    %2798 = vst [vmem:[%s2797] ss:$9 sm:$0xff] %v2682
    %s2799 = scalar_lea.vmem [#allocation1], 5
    %2800 = vst [vmem:[%s2799] ss:$9 sm:$0xff] %v2683
    %s2801 = scalar_lea.vmem [#allocation1], 6
    %2802 = vst [vmem:[%s2801] ss:$9 sm:$0xff] %v2684
    %v2803 = vld [vmem:[#allocation1] sm:$0xff]
    %2805 = vmatpush.xpose.msra.mxu0 0.0
    %2806 = vmatpush.xpose.msra.mxu0 0.0
    %2807 = vmatpush.xpose.msra.mxu0 0.0
    %2808 = vmatpush.xpose.msra.mxu0 0.0
    %2809 = vmatpush.xpose.msra.mxu0 0.0
    %2810 = vmatpush.xpose.msra.mxu0 0.0
    %2811 = vmatpush.xpose.msra.mxu0 0.0
    %2812 = vmatpush.xpose.msra.mxu0 0.0
    %2813 = vmatpush.xpose.msra.mxu0 0.0
    %2814 = vmatpush.xpose.msra.mxu0 0.0
    %2815 = vmatpush.xpose.msra.mxu0 0.0
    %2816 = vmatpush.xpose.msra.mxu0 0.0
    %2817 = vmatpush.xpose.msra.mxu0 0.0
    %2818 = vmatpush.xpose.msra.mxu0 0.0
    %2819 = vmatpush.xpose.msra.mxu0 0.0
    %2820 = vmatpush.xpose.msra.mxu0 %v2540
    %2821 = vmatmul.f32.gmra.mxu0 %v2803
    %v2822 = vpop.f32.mrf.mxu0
    %v2823 = vadd.f32 0.0, %v2822
    %2824 = vdwg.mxu0
    %vm2825 = vcmask 55296
    %v2826 = vsel %vm2825, %v2718, -inf
    %v2827 = vrot.slane %v2826, 4
    %v2828 = vmax.f32 %v2826, %v2827
    %v2829 = vrot.slane %v2828, 2
    %v2830 = vmax.f32 %v2828, %v2829
    %v2831 = vrot.slane %v2830, 1
    %v2832 = vmax.f32 %v2830, %v2831
    %v2833 = vsel %vm2825, %v2753, -inf
    %v2834 = vrot.slane %v2833, 4
    %v2835 = vmax.f32 %v2833, %v2834
    %v2836 = vrot.slane %v2835, 2
    %v2837 = vmax.f32 %v2835, %v2836
    %v2838 = vrot.slane %v2837, 1
    %v2839 = vmax.f32 %v2837, %v2838
    %v2840 = vsel %vm2825, %v2788, -inf
    %v2841 = vrot.slane %v2840, 4
    %v2842 = vmax.f32 %v2840, %v2841
    %v2843 = vrot.slane %v2842, 2
    %v2844 = vmax.f32 %v2842, %v2843
    %v2845 = vrot.slane %v2844, 1
    %v2846 = vmax.f32 %v2844, %v2845
    %v2847 = vsel %vm2825, %v2823, -inf
    %v2848 = vrot.slane %v2847, 4
    %v2849 = vmax.f32 %v2847, %v2848
    %v2850 = vrot.slane %v2849, 2
    %v2851 = vmax.f32 %v2849, %v2850
    %v2852 = vrot.slane %v2851, 1
    %v2853 = vmax.f32 %v2851, %v2852
    %v2854 = vsub.f32 %v2718, %v2832
    %v2855 = vsub.f32 %v2753, %v2839
    %v2856 = vsub.f32 %v2788, %v2846
    %v2857 = vsub.f32 %v2823, %v2853
    %v2858 = vmul.f32 %v2854, 1.442695
    %v2859 = vpow.pop %v2858
    %v2860 = vmul.f32 %v2855, 1.442695
    %v2861 = vpow.pop %v2860
    %v2862 = vmul.f32 %v2856, 1.442695
    %v2863 = vpow.pop %v2862
    %v2864 = vmul.f32 %v2857, 1.442695
    %v2865 = vpow.pop %v2864
    %v2866 = vsel %vm2825, %v2859, 0.0
    %v2867 = vrot.slane %v2866, 4
    %v2868 = vadd.f32 %v2866, %v2867
    %v2869 = vrot.slane %v2868, 2
    %v2870 = vadd.f32 %v2868, %v2869
    %v2871 = vrot.slane %v2870, 1
    %v2872 = vadd.f32 %v2870, %v2871
    %v2873 = vsel %vm2825, %v2861, 0.0
    %v2874 = vrot.slane %v2873, 4
    %v2875 = vadd.f32 %v2873, %v2874
    %v2876 = vrot.slane %v2875, 2
    %v2877 = vadd.f32 %v2875, %v2876
    %v2878 = vrot.slane %v2877, 1
    %v2879 = vadd.f32 %v2877, %v2878
    %v2880 = vsel %vm2825, %v2863, 0.0
    %v2881 = vrot.slane %v2880, 4
    %v2882 = vadd.f32 %v2880, %v2881
    %v2883 = vrot.slane %v2882, 2
    %v2884 = vadd.f32 %v2882, %v2883
    %v2885 = vrot.slane %v2884, 1
    %v2886 = vadd.f32 %v2884, %v2885
    %v2887 = vsel %vm2825, %v2865, 0.0
    %v2888 = vrot.slane %v2887, 4
    %v2889 = vadd.f32 %v2887, %v2888
    %v2890 = vrot.slane %v2889, 2
    %v2891 = vadd.f32 %v2889, %v2890
    %v2892 = vrot.slane %v2891, 1
    %v2893 = vadd.f32 %v2891, %v2892
    %v2894 = vrcp.pop %v2872
    %v2895 = vmul.f32 %v2872, %v2894
    %v2896 = vsub.f32 1.0, %v2895
    %v2897 = vmul.f32 %v2894, %v2896
    %v2898 = vadd.f32 %v2894, %v2897
    %vm2899 = vweird.f32 %v2872
    %vm2900 = vweird.f32 %v2894
    %vm2901 = vmor %vm2899, %vm2900
    %v2902 = vsel %vm2901, %v2894, %v2898
    %v2903 = vand.u32 2147483647, %v2872
    %vm2904 = vcmp.eq.f32.partialorder %v2903, 8.507059e+37
    %v2905 = vand.u32 %v2872, 2147483648
    %v2906 = vor.u32 1.1754944e-38, %v2905
    %v2907 = vsel %vm2904, %v2906, %v2902
    %v2908 = vmul.f32 %v2859, %v2907
    %v2909 = vrcp.pop %v2879
    %v2910 = vmul.f32 %v2879, %v2909
    %v2911 = vsub.f32 1.0, %v2910
    %v2912 = vmul.f32 %v2909, %v2911
    %v2913 = vadd.f32 %v2909, %v2912
    %vm2914 = vweird.f32 %v2879
    %vm2915 = vweird.f32 %v2909
    %vm2916 = vmor %vm2914, %vm2915
    %v2917 = vsel %vm2916, %v2909, %v2913
    %v2918 = vand.u32 2147483647, %v2879
    %vm2919 = vcmp.eq.f32.partialorder %v2918, 8.507059e+37
    %v2920 = vand.u32 %v2879, 2147483648
    %v2921 = vor.u32 1.1754944e-38, %v2920
    %v2922 = vsel %vm2919, %v2921, %v2917
    %v2923 = vmul.f32 %v2861, %v2922
    %v2924 = vrcp.pop %v2886
    %v2925 = vmul.f32 %v2886, %v2924
    %v2926 = vsub.f32 1.0, %v2925
    %v2927 = vmul.f32 %v2924, %v2926
    %v2928 = vadd.f32 %v2924, %v2927
    %vm2929 = vweird.f32 %v2886
    %vm2930 = vweird.f32 %v2924
    %vm2931 = vmor %vm2929, %vm2930
    %v2932 = vsel %vm2931, %v2924, %v2928
    %v2933 = vand.u32 2147483647, %v2886
    %vm2934 = vcmp.eq.f32.partialorder %v2933, 8.507059e+37
    %v2935 = vand.u32 %v2886, 2147483648
    %v2936 = vor.u32 1.1754944e-38, %v2935
    %v2937 = vsel %vm2934, %v2936, %v2932
    %v2938 = vmul.f32 %v2863, %v2937
    %v2939 = vrcp.pop %v2893
    %v2940 = vmul.f32 %v2893, %v2939
    %v2941 = vsub.f32 1.0, %v2940
    %v2942 = vmul.f32 %v2939, %v2941
    %v2943 = vadd.f32 %v2939, %v2942
    %vm2944 = vweird.f32 %v2893
    %vm2945 = vweird.f32 %v2939
    %vm2946 = vmor %vm2944, %vm2945
    %v2947 = vsel %vm2946, %v2939, %v2943
    %v2948 = vand.u32 2147483647, %v2893
    %vm2949 = vcmp.eq.f32.partialorder %v2948, 8.507059e+37
    %v2950 = vand.u32 %v2893, 2147483648
    %v2951 = vor.u32 1.1754944e-38, %v2950
    %v2952 = vsel %vm2949, %v2951, %v2947
    %v2953 = vmul.f32 %v2865, %v2952
    %vm2954 = vcmask 56320
    %v2956 = vsel %vm2954, %v2908, 0
    %vm2958 = vcmask 1046528
    %v2959 = vsel %vm2958, %v2537, 0
    %2961 = vmatpush.msra.mxu0 0.0
    %2962 = vmatpush.msra.mxu0 0.0
    %2963 = vmatpush.msra.mxu0 0.0
    %2964 = vmatpush.msra.mxu0 0.0
    %2965 = vmatpush.msra.mxu0 0.0
    %2966 = vmatpush.msra.mxu0 0.0
    %2967 = vmatpush.msra.mxu0 0.0
    %2968 = vmatpush.msra.mxu0 0.0
    %2969 = vmatpush.msra.mxu0 0.0
    %2970 = vmatpush.msra.mxu0 0.0
    %2971 = vmatpush.msra.mxu0 0.0
    %2972 = vmatpush.msra.mxu0 0.0
    %2973 = vmatpush.msra.mxu0 0.0
    %2974 = vmatpush.msra.mxu0 0.0
    %2975 = vmatpush.msra.mxu0 0.0
    %2976 = vmatpush.msra.mxu0 %v2959
    %2977 = vmatmul.f32.gmra.mxu0 %v2956
    %v2978 = vpop.f32.mrf.mxu0
    %v2979 = vadd.f32 0.0, %v2978
    %2980 = vdwg.mxu0
    %v2982 = vsel %vm2954, %v2923, 0
    %v2984 = vsel %vm2958, %v2538, 0
    %2986 = vmatpush.msra.mxu0 0.0
    %2987 = vmatpush.msra.mxu0 0.0
    %2988 = vmatpush.msra.mxu0 0.0
    %2989 = vmatpush.msra.mxu0 0.0
    %2990 = vmatpush.msra.mxu0 0.0
    %2991 = vmatpush.msra.mxu0 0.0
    %2992 = vmatpush.msra.mxu0 0.0
    %2993 = vmatpush.msra.mxu0 0.0
    %2994 = vmatpush.msra.mxu0 0.0
    %2995 = vmatpush.msra.mxu0 0.0
    %2996 = vmatpush.msra.mxu0 0.0
    %2997 = vmatpush.msra.mxu0 0.0
    %2998 = vmatpush.msra.mxu0 0.0
    %2999 = vmatpush.msra.mxu0 0.0
    %3000 = vmatpush.msra.mxu0 0.0
    %3001 = vmatpush.msra.mxu0 %v2984
    %3002 = vmatmul.f32.gmra.mxu0 %v2982
    %v3003 = vpop.f32.mrf.mxu0
    %v3004 = vadd.f32 0.0, %v3003
    %3005 = vdwg.mxu0
    %v3007 = vsel %vm2954, %v2938, 0
    %v3009 = vsel %vm2958, %v2539, 0
    %3011 = vmatpush.msra.mxu0 0.0
    %3012 = vmatpush.msra.mxu0 0.0
    %3013 = vmatpush.msra.mxu0 0.0
    %3014 = vmatpush.msra.mxu0 0.0
    %3015 = vmatpush.msra.mxu0 0.0
    %3016 = vmatpush.msra.mxu0 0.0
    %3017 = vmatpush.msra.mxu0 0.0
    %3018 = vmatpush.msra.mxu0 0.0
    %3019 = vmatpush.msra.mxu0 0.0
    %3020 = vmatpush.msra.mxu0 0.0
    %3021 = vmatpush.msra.mxu0 0.0
    %3022 = vmatpush.msra.mxu0 0.0
    %3023 = vmatpush.msra.mxu0 0.0
    %3024 = vmatpush.msra.mxu0 0.0
    %3025 = vmatpush.msra.mxu0 0.0
    %3026 = vmatpush.msra.mxu0 %v3009
    %3027 = vmatmul.f32.gmra.mxu0 %v3007
    %v3028 = vpop.f32.mrf.mxu0
    %v3029 = vadd.f32 0.0, %v3028
    %3030 = vdwg.mxu0
    %v3032 = vsel %vm2954, %v2953, 0
    %v3034 = vsel %vm2958, %v2540, 0
    %3036 = vmatpush.msra.mxu0 0.0
    %3037 = vmatpush.msra.mxu0 0.0
    %3038 = vmatpush.msra.mxu0 0.0
    %3039 = vmatpush.msra.mxu0 0.0
    %3040 = vmatpush.msra.mxu0 0.0
    %3041 = vmatpush.msra.mxu0 0.0
    %3042 = vmatpush.msra.mxu0 0.0
    %3043 = vmatpush.msra.mxu0 0.0
    %3044 = vmatpush.msra.mxu0 0.0
    %3045 = vmatpush.msra.mxu0 0.0
    %3046 = vmatpush.msra.mxu0 0.0
    %3047 = vmatpush.msra.mxu0 0.0
    %3048 = vmatpush.msra.mxu0 0.0
    %3049 = vmatpush.msra.mxu0 0.0
    %3050 = vmatpush.msra.mxu0 0.0
    %3051 = vmatpush.msra.mxu0 %v3034
    %3052 = vmatmul.f32.gmra.mxu0 %v3032
    %v3053 = vpop.f32.mrf.mxu0
    %v3054 = vadd.f32 0.0, %v3053
    %3055 = vdwg.mxu0
    %v3060 = vrot.slane %v2979, 1
    %v3061 = vrot.slane %v2979, 2
    %v3062 = vrot.slane %v2979, 3
    %v3063 = vrot.slane %v2979, 4
    %v3064 = vrot.slane %v2979, 5
    %v3065 = vrot.slane %v2979, 6
    %v3066 = vrot.slane %v3004, 1
    %v3067 = vrot.slane %v3004, 2
    %v3068 = vrot.slane %v3004, 3
    %v3069 = vrot.slane %v3004, 4
    %v3070 = vrot.slane %v3004, 5
    %v3071 = vrot.slane %v3004, 6
    %v3072 = vrot.slane %v3029, 1
    %v3073 = vrot.slane %v3029, 2
    %v3074 = vrot.slane %v3029, 3
    %v3075 = vrot.slane %v3029, 4
    %v3076 = vrot.slane %v3029, 5
    %v3077 = vrot.slane %v3029, 6
    %v3078 = vrot.slane %v3054, 1
    %v3079 = vrot.slane %v3054, 2
    %v3080 = vrot.slane %v3054, 3
    %v3081 = vrot.slane %v3054, 4
    %v3082 = vrot.slane %v3054, 5
    %v3083 = vrot.slane %v3054, 6
    %v3084 = vmul.f32 %v2537, %v2979
    %v3085 = vmul.f32 %v2538, %v3004
    %v3086 = vmul.f32 %v2539, %v3029
    %v3087 = vmul.f32 %v2540, %v3054
    %v3092 = vrot.slane %v3084, 1
    %v3093 = vrot.slane %v3084, 2
    %v3094 = vrot.slane %v3084, 3
    %v3095 = vrot.slane %v3084, 4
    %v3096 = vrot.slane %v3084, 5
    %v3097 = vrot.slane %v3084, 6
    %v3098 = vrot.slane %v3085, 1
    %v3099 = vrot.slane %v3085, 2
    %v3100 = vrot.slane %v3085, 3
    %v3101 = vrot.slane %v3085, 4
    %v3102 = vrot.slane %v3085, 5
    %v3103 = vrot.slane %v3085, 6
    %v3104 = vrot.slane %v3086, 1
    %v3105 = vrot.slane %v3086, 2
    %v3106 = vrot.slane %v3086, 3
    %v3107 = vrot.slane %v3086, 4
    %v3108 = vrot.slane %v3086, 5
    %v3109 = vrot.slane %v3086, 6
    %v3110 = vrot.slane %v3087, 1
    %v3111 = vrot.slane %v3087, 2
    %v3112 = vrot.slane %v3087, 3
    %v3113 = vrot.slane %v3087, 4
    %v3114 = vrot.slane %v3087, 5
    %v3115 = vrot.slane %v3087, 6
    %v3116 = vld [vmem:[#allocation11] sm:$0xff]
    %v3117 = vld [vmem:[#allocation11 + $0x8] sm:$0xff]
    %v3118 = vld [vmem:[#allocation11 + $0x10] sm:$0xff]
    %v3119 = vld [vmem:[#allocation11 + $0x18] sm:$0xff]
    %v3120 = vld [vmem:[#allocation11 + $0x20] sm:$0xff]
    %v3121 = vld [vmem:[#allocation11 + $0x28] sm:$0xff]
    %v3122 = vld [vmem:[#allocation11 + $0x30] sm:$0xff]
    %v3123 = vld [vmem:[#allocation11 + $0x38] sm:$0xff]
    %v3124 = vld [vmem:[#allocation11 + $0x40] sm:$0xff]
    %v3125 = vld [vmem:[#allocation11 + $0x48] sm:$0xff]
    %v3126 = vld [vmem:[#allocation11 + $0x50] sm:$0xff]
    %v3127 = vld [vmem:[#allocation11 + $0x58] sm:$0xff]
    %v3128 = vld [vmem:[#allocation11 + $0x60] sm:$0xff]
    %v3129 = vld [vmem:[#allocation11 + $0x68] sm:$0xff]
    %v3130 = vld [vmem:[#allocation11 + $0x70] sm:$0xff]
    %v3131 = vld [vmem:[#allocation11 + $0x78] sm:$0xff]
    %v3132 = vld [vmem:[#allocation12] sm:$0xff]
    %v3133 = vld [vmem:[#allocation12 + $0x8] sm:$0xff]
    %v3134 = vld [vmem:[#allocation12 + $0x10] sm:$0xff]
    %v3135 = vld [vmem:[#allocation12 + $0x18] sm:$0xff]
    %v3136 = vld [vmem:[#allocation12 + $0x20] sm:$0xff]
    %v3137 = vld [vmem:[#allocation12 + $0x28] sm:$0xff]
    %v3138 = vld [vmem:[#allocation12 + $0x30] sm:$0xff]
    %v3139 = vld [vmem:[#allocation12 + $0x38] sm:$0xff]
    %v3140 = vld [vmem:[#allocation12 + $0x40] sm:$0xff]
    %v3141 = vld [vmem:[#allocation12 + $0x48] sm:$0xff]
    %v3142 = vld [vmem:[#allocation12 + $0x50] sm:$0xff]
    %v3143 = vld [vmem:[#allocation12 + $0x58] sm:$0xff]
    %v3144 = vld [vmem:[#allocation12 + $0x60] sm:$0xff]
    %v3145 = vld [vmem:[#allocation12 + $0x68] sm:$0xff]
    %v3146 = vld [vmem:[#allocation12 + $0x70] sm:$0xff]
    %v3147 = vld [vmem:[#allocation12 + $0x78] sm:$0xff]
    %3148 = vst [vmem:[#allocation1] ss:$9 sm:$0xff] %v2979
    %s3149 = scalar_lea.vmem [#allocation1], 1
    %3150 = vst [vmem:[%s3149] ss:$9 sm:$0xff] %v3060
    %s3151 = scalar_lea.vmem [#allocation1], 2
    %3152 = vst [vmem:[%s3151] ss:$9 sm:$0xff] %v3061
    %s3153 = scalar_lea.vmem [#allocation1], 3
    %3154 = vst [vmem:[%s3153] ss:$9 sm:$0xff] %v3062
    %s3155 = scalar_lea.vmem [#allocation1], 4
    %3156 = vst [vmem:[%s3155] ss:$9 sm:$0xff] %v3063
    %s3157 = scalar_lea.vmem [#allocation1], 5
    %3158 = vst [vmem:[%s3157] ss:$9 sm:$0xff] %v3064
    %s3159 = scalar_lea.vmem [#allocation1], 6
    %3160 = vst [vmem:[%s3159] ss:$9 sm:$0xff] %v3065
    %s3161 = scalar_lea.vmem [#allocation1], 7
    %3162 = vst [vmem:[%s3161] ss:$9 sm:$0xff] %v3004
    %v3163 = vld [vmem:[#allocation1] sm:$0xff]
    %3164 = vst [vmem:[#allocation1] ss:$9 sm:$0xff] %v3066
    %3165 = vst [vmem:[%s3149] ss:$9 sm:$0xff] %v3067
    %3166 = vst [vmem:[%s3151] ss:$9 sm:$0xff] %v3068
    %3167 = vst [vmem:[%s3153] ss:$9 sm:$0xff] %v3069
    %3168 = vst [vmem:[%s3155] ss:$9 sm:$0xff] %v3070
    %3169 = vst [vmem:[%s3157] ss:$9 sm:$0xff] %v3071
    %3170 = vst [vmem:[%s3159] ss:$9 sm:$0xff] %v3029
    %3171 = vst [vmem:[%s3161] ss:$9 sm:$0xff] %v3072
    %v3172 = vld [vmem:[#allocation1] sm:$0xff]
    %3173 = vst [vmem:[#allocation1] ss:$9 sm:$0xff] %v3073
    %3174 = vst [vmem:[%s3149] ss:$9 sm:$0xff] %v3074
    %3175 = vst [vmem:[%s3151] ss:$9 sm:$0xff] %v3075
    %3176 = vst [vmem:[%s3153] ss:$9 sm:$0xff] %v3076
    %3177 = vst [vmem:[%s3155] ss:$9 sm:$0xff] %v3077
    %3178 = vst [vmem:[%s3157] ss:$9 sm:$0xff] %v3054
    %3179 = vst [vmem:[%s3159] ss:$9 sm:$0xff] %v3078
    %3180 = vst [vmem:[%s3161] ss:$9 sm:$0xff] %v3079
    %v3181 = vld [vmem:[#allocation1] sm:$0xff]
    %3182 = vst [vmem:[#allocation1] ss:$9 sm:$0xff] %v3080
    %3183 = vst [vmem:[%s3149] ss:$9 sm:$0xff] %v3081
    %3184 = vst [vmem:[%s3151] ss:$9 sm:$0xff] %v3082
    %3185 = vst [vmem:[%s3153] ss:$9 sm:$0xff] %v3083
    %v3186 = vld [vmem:[#allocation1] sm:$0xff]
    %3191 = vmatpush.msra.mxu0 %v3147
    %3192 = vmatpush.msra.mxu0 %v3146
    %3193 = vmatpush.msra.mxu0 %v3145
    %3194 = vmatpush.msra.mxu0 %v3144
    %3195 = vmatpush.msra.mxu0 %v3143
    %3196 = vmatpush.msra.mxu0 %v3142
    %3197 = vmatpush.msra.mxu0 %v3141
    %3198 = vmatpush.msra.mxu0 %v3140
    %3199 = vmatpush.msra.mxu0 %v3139
    %3200 = vmatpush.msra.mxu0 %v3138
    %3201 = vmatpush.msra.mxu0 %v3137
    %3202 = vmatpush.msra.mxu0 %v3136
    %3203 = vmatpush.msra.mxu0 %v3135
    %3204 = vmatpush.msra.mxu0 %v3134
    %3205 = vmatpush.msra.mxu0 %v3133
    %3206 = vmatpush.msra.mxu0 %v3132
    %3207 = vmatmul.f32.gmra.mxu0 %v3163
    %v3208 = vpop.f32.mrf.mxu0
    %v3209 = vadd.f32 0.0, %v3208
    %3210 = vmatmul.f32.gmra.mxu0 %v3172
    %v3211 = vpop.f32.mrf.mxu0
    %v3212 = vadd.f32 0.0, %v3211
    %3213 = vmatmul.f32.gmra.mxu0 %v3181
    %v3214 = vpop.f32.mrf.mxu0
    %v3215 = vadd.f32 0.0, %v3214
    %3216 = vmatmul.f32.gmra.mxu0 %v3186
    %v3217 = vpop.f32.mrf.mxu0
    %v3218 = vadd.f32 0.0, %v3217
    %3219 = vdwg.mxu0
    %3220 = vst [vmem:[#allocation1] ss:$9 sm:$0xff] %v2537
    %s3221 = scalar_lea.vmem [#allocation1], 1
    %3222 = vst [vmem:[%s3221] ss:$9 sm:$0xff] %v2545
    %s3223 = scalar_lea.vmem [#allocation1], 2
    %3224 = vst [vmem:[%s3223] ss:$9 sm:$0xff] %v2546
    %s3225 = scalar_lea.vmem [#allocation1], 3
    %3226 = vst [vmem:[%s3225] ss:$9 sm:$0xff] %v2547
    %s3227 = scalar_lea.vmem [#allocation1], 4
    %3228 = vst [vmem:[%s3227] ss:$9 sm:$0xff] %v2548
    %s3229 = scalar_lea.vmem [#allocation1], 5
    %3230 = vst [vmem:[%s3229] ss:$9 sm:$0xff] %v2549
    %s3231 = scalar_lea.vmem [#allocation1], 6
    %3232 = vst [vmem:[%s3231] ss:$9 sm:$0xff] %v2550
    %s3233 = scalar_lea.vmem [#allocation1], 7
    %3234 = vst [vmem:[%s3233] ss:$9 sm:$0xff] %v2538
    %v3235 = vld [vmem:[#allocation1] sm:$0xff]
    %3236 = vst [vmem:[#allocation1] ss:$9 sm:$0xff] %v2551
    %3237 = vst [vmem:[%s3221] ss:$9 sm:$0xff] %v2552
    %3238 = vst [vmem:[%s3223] ss:$9 sm:$0xff] %v2553
    %3239 = vst [vmem:[%s3225] ss:$9 sm:$0xff] %v2554
    %3240 = vst [vmem:[%s3227] ss:$9 sm:$0xff] %v2555
    %3241 = vst [vmem:[%s3229] ss:$9 sm:$0xff] %v2556
    %3242 = vst [vmem:[%s3231] ss:$9 sm:$0xff] %v2539
    %3243 = vst [vmem:[%s3233] ss:$9 sm:$0xff] %v2557
    %v3244 = vld [vmem:[#allocation1] sm:$0xff]
    %3245 = vst [vmem:[#allocation1] ss:$9 sm:$0xff] %v2558
    %3246 = vst [vmem:[%s3221] ss:$9 sm:$0xff] %v2559
    %3247 = vst [vmem:[%s3223] ss:$9 sm:$0xff] %v2560
    %3248 = vst [vmem:[%s3225] ss:$9 sm:$0xff] %v2561
    %3249 = vst [vmem:[%s3227] ss:$9 sm:$0xff] %v2562
    %3250 = vst [vmem:[%s3229] ss:$9 sm:$0xff] %v2540
    %3251 = vst [vmem:[%s3231] ss:$9 sm:$0xff] %v2563
    %3252 = vst [vmem:[%s3233] ss:$9 sm:$0xff] %v2564
    %v3253 = vld [vmem:[#allocation1] sm:$0xff]
    %3254 = vst [vmem:[#allocation1] ss:$9 sm:$0xff] %v2565
    %3255 = vst [vmem:[%s3221] ss:$9 sm:$0xff] %v2566
    %3256 = vst [vmem:[%s3223] ss:$9 sm:$0xff] %v2567
    %3257 = vst [vmem:[%s3225] ss:$9 sm:$0xff] %v2568
    %v3258 = vld [vmem:[#allocation1] sm:$0xff]
    %3263 = vmatpush.msra.mxu0 %v3131
    %3264 = vmatpush.msra.mxu0 %v3130
    %3265 = vmatpush.msra.mxu0 %v3129
    %3266 = vmatpush.msra.mxu0 %v3128
    %3267 = vmatpush.msra.mxu0 %v3127
    %3268 = vmatpush.msra.mxu0 %v3126
    %3269 = vmatpush.msra.mxu0 %v3125
    %3270 = vmatpush.msra.mxu0 %v3124
    %3271 = vmatpush.msra.mxu0 %v3123
    %3272 = vmatpush.msra.mxu0 %v3122
    %3273 = vmatpush.msra.mxu0 %v3121
    %3274 = vmatpush.msra.mxu0 %v3120
    %3275 = vmatpush.msra.mxu0 %v3119
    %3276 = vmatpush.msra.mxu0 %v3118
    %3277 = vmatpush.msra.mxu0 %v3117
    %3278 = vmatpush.msra.mxu0 %v3116
    %3279 = vmatmul.f32.gmra.mxu0 %v3235
    %v3280 = vpop.f32.mrf.mxu0
    %v3281 = vadd.f32 %v3209, %v3280
    %3282 = vmatmul.f32.gmra.mxu0 %v3244
    %v3283 = vpop.f32.mrf.mxu0
    %v3284 = vadd.f32 %v3212, %v3283
    %3285 = vmatmul.f32.gmra.mxu0 %v3253
    %v3286 = vpop.f32.mrf.mxu0
    %v3287 = vadd.f32 %v3215, %v3286
    %3288 = vmatmul.f32.gmra.mxu0 %v3258
    %v3289 = vpop.f32.mrf.mxu0
    %v3290 = vadd.f32 %v3218, %v3289
    %3291 = vdwg.mxu0
    %v3292 = vld [vmem:[#allocation14] sm:$0xff]
    %v3293 = vld [vmem:[#allocation14 + $0x8] sm:$0xff]
    %v3294 = vld [vmem:[#allocation14 + $0x10] sm:$0xff]
    %v3295 = vld [vmem:[#allocation14 + $0x18] sm:$0xff]
    %v3296 = vld [vmem:[#allocation14 + $0x20] sm:$0xff]
    %v3297 = vld [vmem:[#allocation14 + $0x28] sm:$0xff]
    %v3298 = vld [vmem:[#allocation14 + $0x30] sm:$0xff]
    %v3299 = vld [vmem:[#allocation14 + $0x38] sm:$0xff]
    %v3300 = vld [vmem:[#allocation14 + $0x40] sm:$0xff]
    %v3301 = vld [vmem:[#allocation14 + $0x48] sm:$0xff]
    %v3302 = vld [vmem:[#allocation14 + $0x50] sm:$0xff]
    %v3303 = vld [vmem:[#allocation14 + $0x58] sm:$0xff]
    %v3304 = vld [vmem:[#allocation14 + $0x60] sm:$0xff]
    %v3305 = vld [vmem:[#allocation14 + $0x68] sm:$0xff]
    %v3306 = vld [vmem:[#allocation14 + $0x70] sm:$0xff]
    %v3307 = vld [vmem:[#allocation14 + $0x78] sm:$0xff]
    %3308 = vst [vmem:[#allocation1] ss:$9 sm:$0xff] %v3084
    %s3309 = scalar_lea.vmem [#allocation1], 1
    %3310 = vst [vmem:[%s3309] ss:$9 sm:$0xff] %v3092
    %s3311 = scalar_lea.vmem [#allocation1], 2
    %3312 = vst [vmem:[%s3311] ss:$9 sm:$0xff] %v3093
    %s3313 = scalar_lea.vmem [#allocation1], 3
    %3314 = vst [vmem:[%s3313] ss:$9 sm:$0xff] %v3094
    %s3315 = scalar_lea.vmem [#allocation1], 4
    %3316 = vst [vmem:[%s3315] ss:$9 sm:$0xff] %v3095
    %s3317 = scalar_lea.vmem [#allocation1], 5
    %3318 = vst [vmem:[%s3317] ss:$9 sm:$0xff] %v3096
    %s3319 = scalar_lea.vmem [#allocation1], 6
    %3320 = vst [vmem:[%s3319] ss:$9 sm:$0xff] %v3097
    %s3321 = scalar_lea.vmem [#allocation1], 7
    %3322 = vst [vmem:[%s3321] ss:$9 sm:$0xff] %v3085
    %v3323 = vld [vmem:[#allocation1] sm:$0xff]
    %3324 = vst [vmem:[#allocation1] ss:$9 sm:$0xff] %v3098
    %3325 = vst [vmem:[%s3309] ss:$9 sm:$0xff] %v3099
    %3326 = vst [vmem:[%s3311] ss:$9 sm:$0xff] %v3100
    %3327 = vst [vmem:[%s3313] ss:$9 sm:$0xff] %v3101
    %3328 = vst [vmem:[%s3315] ss:$9 sm:$0xff] %v3102
    %3329 = vst [vmem:[%s3317] ss:$9 sm:$0xff] %v3103
    %3330 = vst [vmem:[%s3319] ss:$9 sm:$0xff] %v3086
    %3331 = vst [vmem:[%s3321] ss:$9 sm:$0xff] %v3104
    %v3332 = vld [vmem:[#allocation1] sm:$0xff]
    %3333 = vst [vmem:[#allocation1] ss:$9 sm:$0xff] %v3105
    %3334 = vst [vmem:[%s3309] ss:$9 sm:$0xff] %v3106
    %3335 = vst [vmem:[%s3311] ss:$9 sm:$0xff] %v3107
    %3336 = vst [vmem:[%s3313] ss:$9 sm:$0xff] %v3108
    %3337 = vst [vmem:[%s3315] ss:$9 sm:$0xff] %v3109
    %3338 = vst [vmem:[%s3317] ss:$9 sm:$0xff] %v3087
    %3339 = vst [vmem:[%s3319] ss:$9 sm:$0xff] %v3110
    %3340 = vst [vmem:[%s3321] ss:$9 sm:$0xff] %v3111
    %v3341 = vld [vmem:[#allocation1] sm:$0xff]
    %3342 = vst [vmem:[#allocation1] ss:$9 sm:$0xff] %v3112
    %3343 = vst [vmem:[%s3309] ss:$9 sm:$0xff] %v3113
    %3344 = vst [vmem:[%s3311] ss:$9 sm:$0xff] %v3114
    %3345 = vst [vmem:[%s3313] ss:$9 sm:$0xff] %v3115
    %v3346 = vld [vmem:[#allocation1] sm:$0xff]
    %3351 = vmatpush.msra.mxu0 %v3307
    %3352 = vmatpush.msra.mxu0 %v3306
    %3353 = vmatpush.msra.mxu0 %v3305
    %3354 = vmatpush.msra.mxu0 %v3304
    %3355 = vmatpush.msra.mxu0 %v3303
    %3356 = vmatpush.msra.mxu0 %v3302
    %3357 = vmatpush.msra.mxu0 %v3301
    %3358 = vmatpush.msra.mxu0 %v3300
    %3359 = vmatpush.msra.mxu0 %v3299
    %3360 = vmatpush.msra.mxu0 %v3298
    %3361 = vmatpush.msra.mxu0 %v3297
    %3362 = vmatpush.msra.mxu0 %v3296
    %3363 = vmatpush.msra.mxu0 %v3295
    %3364 = vmatpush.msra.mxu0 %v3294
    %3365 = vmatpush.msra.mxu0 %v3293
    %3366 = vmatpush.msra.mxu0 %v3292
    %3367 = vmatmul.f32.gmra.mxu0 %v3323
    %v3368 = vpop.f32.mrf.mxu0
    %v3369 = vadd.f32 0.0, %v3368
    %3370 = vmatmul.f32.gmra.mxu0 %v3332
    %v3371 = vpop.f32.mrf.mxu0
    %v3372 = vadd.f32 0.0, %v3371
    %3373 = vmatmul.f32.gmra.mxu0 %v3341
    %v3374 = vpop.f32.mrf.mxu0
    %v3375 = vadd.f32 0.0, %v3374
    %3376 = vmatmul.f32.gmra.mxu0 %v3346
    %v3377 = vpop.f32.mrf.mxu0
    %v3378 = vadd.f32 0.0, %v3377
    %3379 = vdwg.mxu0
    %v3380 = vadd.f32 %v3281, %v3369
    %v3381 = vadd.f32 %v3284, %v3372
    %v3382 = vadd.f32 %v3287, %v3375
    %v3383 = vadd.f32 %v3290, %v3378
    %v3384 = vld [vmem:[%s13] sm:$0x1]
    %v3386 = vperm.slane %v3384, 0
    %v3388 = vadd.f32 %v3380, %v3386
    %v3389 = vadd.f32 %v3381, %v3386
    %v3390 = vadd.f32 %v3382, %v3386
    %v3391 = vadd.f32 %v3383, %v3386
    %v3392 = vmax.f32 %v3388, 0.0
    %v3393 = vmax.f32 %v3389, 0.0
    %v3394 = vmax.f32 %v3390, 0.0
    %v3395 = vmax.f32 %v3391, 0.0
    %v3400 = vrot.slane %v3392, 1
    %v3401 = vrot.slane %v3392, 2
    %v3402 = vrot.slane %v3392, 3
    %v3403 = vrot.slane %v3392, 4
    %v3404 = vrot.slane %v3392, 5
    %v3405 = vrot.slane %v3392, 6
    %v3406 = vrot.slane %v3392, 7
    %v3407 = vrot.slane %v3393, 1
    %v3408 = vrot.slane %v3393, 2
    %v3409 = vrot.slane %v3393, 3
    %v3410 = vrot.slane %v3393, 4
    %v3411 = vrot.slane %v3393, 5
    %v3412 = vrot.slane %v3393, 6
    %v3413 = vrot.slane %v3393, 7
    %v3414 = vrot.slane %v3394, 1
    %v3415 = vrot.slane %v3394, 2
    %v3416 = vrot.slane %v3394, 3
    %v3417 = vrot.slane %v3394, 4
    %v3418 = vrot.slane %v3394, 5
    %v3419 = vrot.slane %v3394, 6
    %v3420 = vrot.slane %v3394, 7
    %v3421 = vrot.slane %v3395, 1
    %v3422 = vrot.slane %v3395, 2
    %v3423 = vrot.slane %v3395, 3
    %3424 = vst [vmem:[#allocation1] ss:$9 sm:$0xff] %v3392
    %s3425 = scalar_lea.vmem [#allocation1], 1
    %3426 = vst [vmem:[%s3425] ss:$9 sm:$0xff] %v3400
    %s3427 = scalar_lea.vmem [#allocation1], 2
    %3428 = vst [vmem:[%s3427] ss:$9 sm:$0xff] %v3401
    %s3429 = scalar_lea.vmem [#allocation1], 3
    %3430 = vst [vmem:[%s3429] ss:$9 sm:$0xff] %v3402
    %s3431 = scalar_lea.vmem [#allocation1], 4
    %3432 = vst [vmem:[%s3431] ss:$9 sm:$0xff] %v3403
    %s3433 = scalar_lea.vmem [#allocation1], 5
    %3434 = vst [vmem:[%s3433] ss:$9 sm:$0xff] %v3404
    %s3435 = scalar_lea.vmem [#allocation1], 6
    %3436 = vst [vmem:[%s3435] ss:$9 sm:$0xff] %v3405
    %v3437 = vld [vmem:[#allocation1] sm:$0xff]
    %3438 = vst [vmem:[#allocation1] ss:$9 sm:$0xff] %v3406
    %3439 = vst [vmem:[%s3425] ss:$9 sm:$0xff] %v3393
    %3440 = vst [vmem:[%s3427] ss:$9 sm:$0xff] %v3407
    %3441 = vst [vmem:[%s3429] ss:$9 sm:$0xff] %v3408
    %3442 = vst [vmem:[%s3431] ss:$9 sm:$0xff] %v3409
    %3443 = vst [vmem:[%s3433] ss:$9 sm:$0xff] %v3410
    %3444 = vst [vmem:[%s3435] ss:$9 sm:$0xff] %v3411
    %v3445 = vld [vmem:[#allocation1] sm:$0xff]
    %3446 = vst [vmem:[#allocation1] ss:$9 sm:$0xff] %v3412
    %3447 = vst [vmem:[%s3425] ss:$9 sm:$0xff] %v3413
    %3448 = vst [vmem:[%s3427] ss:$9 sm:$0xff] %v3394
    %3449 = vst [vmem:[%s3429] ss:$9 sm:$0xff] %v3414
    %3450 = vst [vmem:[%s3431] ss:$9 sm:$0xff] %v3415
    %3451 = vst [vmem:[%s3433] ss:$9 sm:$0xff] %v3416
    %3452 = vst [vmem:[%s3435] ss:$9 sm:$0xff] %v3417
    %v3453 = vld [vmem:[#allocation1] sm:$0xff]
    %3454 = vst [vmem:[#allocation1] ss:$9 sm:$0xff] %v3418
    %3455 = vst [vmem:[%s3425] ss:$9 sm:$0xff] %v3419
    %3456 = vst [vmem:[%s3427] ss:$9 sm:$0xff] %v3420
    %3457 = vst [vmem:[%s3429] ss:$9 sm:$0xff] %v3395
    %3458 = vst [vmem:[%s3431] ss:$9 sm:$0xff] %v3421
    %3459 = vst [vmem:[%s3433] ss:$9 sm:$0xff] %v3422
    %3460 = vst [vmem:[%s3435] ss:$9 sm:$0xff] %v3423
    %v3461 = vld [vmem:[#allocation1] sm:$0xff]
    %v3466 = vsel %vm2958, %v3437, -inf
    %v3467 = vrot.slane %v3466, 4
    %v3468 = vmax.f32 %v3466, %v3467
    %v3469 = vrot.slane %v3468, 2
    %v3470 = vmax.f32 %v3468, %v3469
    %v3471 = vrot.slane %v3470, 1
    %v3472 = vmax.f32 %v3470, %v3471
    %v3473 = vsel %vm2958, %v3445, -inf
    %v3474 = vrot.slane %v3473, 4
    %v3475 = vmax.f32 %v3473, %v3474
    %v3476 = vrot.slane %v3475, 2
    %v3477 = vmax.f32 %v3475, %v3476
    %v3478 = vrot.slane %v3477, 1
    %v3479 = vmax.f32 %v3477, %v3478
    %v3480 = vsel %vm2958, %v3453, -inf
    %v3481 = vrot.slane %v3480, 4
    %v3482 = vmax.f32 %v3480, %v3481
    %v3483 = vrot.slane %v3482, 2
    %v3484 = vmax.f32 %v3482, %v3483
    %v3485 = vrot.slane %v3484, 1
    %v3486 = vmax.f32 %v3484, %v3485
    %v3487 = vsel %vm2958, %v3461, -inf
    %v3488 = vrot.slane %v3487, 4
    %v3489 = vmax.f32 %v3487, %v3488
    %v3490 = vrot.slane %v3489, 2
    %v3491 = vmax.f32 %v3489, %v3490
    %v3492 = vrot.slane %v3491, 1
    %v3493 = vmax.f32 %v3491, %v3492
    %v3494 = vld [vmem:[%s14] sm:$0x1]
    %v3496 = vperm.slane %v3494, 0
    %v3498 = vmul.f32 %v3472, %v3496
    %v3499 = vmul.f32 %v3479, %v3496
    %v3500 = vmul.f32 %v3486, %v3496
    %v3501 = vmul.f32 %v3493, %v3496
    %v3506 = vrot.slane %v3499, 7
    %vm3507 = vcmask 1041409
    %v3508 = vsel %vm3507, %v3506, %v3498
    %v3509 = vrot.slane %v3500, 6
    %vm3510 = vcmask 1042434
    %v3511 = vsel %vm3510, %v3509, %v3508
    %v3512 = vrot.slane %v3501, 5
    %vm3513 = vcmask 1043459
    %v3514 = vsel %vm3513, %v3512, %v3511
    %v3516 = vsel %vm400, %v3514, 0.0
    %3517 = vadd.xlane.f32.xlu0 %v3516
    %v3518 = vpop.xlane.xlu0 %3517
    %v3519 = vld [vmem:[#allocation6] sm:$0x1]
    %v3521 = vperm.slane %v3519, 0
    %v3523 = vadd.f32 %v3518, %v3521
    %vm3524 = vcmask 3072
    %3525 = vst.msk [vmem:[%s16] sm:$0xf] %vm3524, %v3523
    // Predicated region
    $region86: #{gru_cnn_att_forward.1} parent=1 // pred_check
      _
    $region87: #{gru_cnn_att_forward.1} parent=1 // pred_check_branch
      %3527 = sbr.rel (0) target = $region89
    $region88: #{gru_cnn_att_forward.1} parent=1 // pred_region
      _
    $region89: #{gru_cnn_att_forward.1} parent=1 // pred_fallthru
      _
    // Predicated region
    $region90: #{gru_cnn_att_forward.1} parent=1 // pred_check
      _
    $region91: #{gru_cnn_att_forward.1} parent=1 // pred_check_branch
      %3529 = sbr.rel (0) target = $region93
    $region92: #{gru_cnn_att_forward.1} parent=1 // pred_region
      _
    $region93: #{gru_cnn_att_forward.1} parent=1 // pred_fallthru
      _
    %3530 = vsyncpa [#allocation8], 1
    %3531 = vsyncpa [#allocation10], 1
    %3532 = vsyncpa [#allocation13], 1

</llo_original>
